<compile_context>
chip_gen: v6e
topology: v6e:2x2x1
jax: 0.10.0
libtpu: 0.0.40
codegen_flags: <defaults>
</compile_context>

<pallas_src>
import math

import jax
import jax.numpy as jnp
from jax.experimental import pallas as pl
from jax.experimental.pallas import tpu as pltpu


# ----------------------------------------------------------------------------
# Pallas kernels
# ----------------------------------------------------------------------------
def _conv3x3_body(x_ref, w_ref, add_ref, o_ref, col_ref):
    # x_ref:   (1, H+2, W+2, Cin) bf16 -- whole padded image, resident across rows
    # w_ref:   (9*Cin, Cout)      bf16 -- (kh, kw, cin) flattened into K
    # add_ref: (1, th, W, Cout)   bf16 -- optional fused epilogue add
    # o_ref:   (1, th, W, Cout)   bf16
    # col_ref: (th*W, 9*Cin)      bf16 VMEM scratch -- in-kernel im2col slab
    _, th, W, Cout = o_ref.shape
    Cin = x_ref.shape[3]
    r = pl.program_id(1)
    row0 = pl.multiple_of(r * th, th)

    # Build the im2col slab once, then do a single big-K MXU GEMM.
    # The kw windows are sliced in f32 (proven relayout path), cast back to bf16
    # at the scratch store.
    # TODO(synk): replace the unaligned kw sublane slice with a pltpu.roll-based
    #             shift (XLU) once packed-sublane rotates are exercised here.
    for kh in range(3):
        rows = x_ref[0, pl.ds(row0 + kh, th), :, :].astype(jnp.float32)  # (th,W+2,Cin)
        for kw in range(3):
            idx = kh * 3 + kw
            col_ref[:, idx * Cin:(idx + 1) * Cin] = (
                rows[:, kw:kw + W, :].reshape(th * W, Cin).astype(jnp.bfloat16))

    acc = jnp.dot(col_ref[...], w_ref[...],
                  preferred_element_type=jnp.float32)        # (th*W, Cout) f32
    out = acc.reshape(1, th, W, Cout)
    if add_ref is not None:
        out = out + add_ref[...].astype(jnp.float32)         # fused branch sum
    # TODO(synk): emit a lane-dense (1, th, W*Cout) store once the minor-dim
    #             reshape is exercised on all target chips (biggest vst lever
    #             when Cout < 128).
    o_ref[...] = out.astype(o_ref.dtype)


def _conv3x3_kernel(x_ref, w_ref, o_ref, col_ref):
    _conv3x3_body(x_ref, w_ref, None, o_ref, col_ref)


def _conv3x3_add_kernel(x_ref, w_ref, add_ref, o_ref, col_ref):
    _conv3x3_body(x_ref, w_ref, add_ref, o_ref, col_ref)


def _bn_prelu_kernel(y_ref, scale_ref, shift_ref, slope_ref, o_ref):
    # y: (tm, W*C) bf16; scale/shift/slope: (1, W*C) f32 (per-channel, tiled over W)
    z = y_ref[...].astype(jnp.float32) * scale_ref[...] + shift_ref[...]
    o_ref[...] = jnp.where(z >= 0, z, slope_ref[...] * z)


# ----------------------------------------------------------------------------
# Tiling helpers
# ----------------------------------------------------------------------------
def _pick_row_tile(H, W, Cin, target_rows=2048, scratch_bytes=6 << 20):
    """Largest divisor of H with th*W near target_rows and a bounded im2col slab."""
    cap_rows = max(1, target_rows // max(W, 1))
    cap_scratch = max(1, scratch_bytes // (2 * 9 * max(Cin, 1) * max(W, 1)))
    cap = min(cap_rows, cap_scratch, H)
    best = 1
    for t in range(1, H + 1):
        if H % t == 0 and t <= cap:
            best = t
    return best


def _pick_m_tile(M, L, max_bytes=2 << 20):
    """Row tile for the BN pass: never exceeds the byte cap (no full-slab fallback)."""
    cap = max(8, max_bytes // (4 * max(L, 1)))
    if M <= cap:
        return M                                # full extent, still within the cap
    for t in range(min(M, cap), 0, -1):
        if M % t == 0 and t % 8 == 0:
            return t
    for t in range(min(M, cap), 0, -1):         # rare fallback: any divisor <= cap
        if M % t == 0:
            return t
    return 1


# ----------------------------------------------------------------------------
# Pallas wrappers
# ----------------------------------------------------------------------------
def conv3x3_pallas(x_nhwc, w_hwio, add=None):
    """3x3 'same' conv (stride 1, pad 1, cross-correlation) as one big-K Pallas GEMM."""
    N, H, W, Cin = x_nhwc.shape
    Cout = w_hwio.shape[-1]
    assert W % 8 == 0, "width must be a multiple of 8 for the in-kernel reshape"

    # bf16 staging of the padded image: halves DMA and the resident VMEM block.
    xp = jnp.pad(x_nhwc.astype(jnp.bfloat16), ((0, 0), (1, 1), (1, 1), (0, 0)))
    wk = w_hwio.astype(jnp.bfloat16).reshape(9 * Cin, Cout)   # (kh,kw,cin) -> K
    th = _pick_row_tile(H, W, Cin)
    grid = (N, H // th)

    # TODO(synk): for very large images on v7x (64 MiB VMEM), switch the x block to
    #             a row-tiled block with a 2-row halo via pl.ANY + make_async_copy.
    in_specs = [
        pl.BlockSpec((1, H + 2, W + 2, Cin), lambda n, r: (n, 0, 0, 0)),
        pl.BlockSpec((9 * Cin, Cout), lambda n, r: (0, 0)),
    ]
    args = [xp, wk]
    kernel = _conv3x3_kernel
    add_bytes = 0
    if add is not None:
        in_specs.append(pl.BlockSpec((1, th, W, Cout), lambda n, r: (n, r, 0, 0)))
        args.append(add.astype(jnp.bfloat16))
        kernel = _conv3x3_add_kernel
        add_bytes = N * H * W * Cout * 2

    flops = 2 * N * H * W * 9 * Cin * Cout
    bytes_accessed = (int(xp.size) * 2 + int(wk.size) * 2
                      + N * H * W * Cout * 2 + add_bytes)

    return pl.pallas_call(
        kernel,
        out_shape=jax.ShapeDtypeStruct((N, H, W, Cout), jnp.bfloat16),
        grid=grid,
        in_specs=in_specs,
        out_specs=pl.BlockSpec((1, th, W, Cout), lambda n, r: (n, r, 0, 0)),
        scratch_shapes=[pltpu.VMEM((th * W, 9 * Cin), jnp.bfloat16)],
        compiler_params=pltpu.CompilerParams(
            # batch axis parallel (megacore shards over n, not over the row axis
            # whose x block is shared), row axis arbitrary.
            dimension_semantics=("parallel", "arbitrary"),
            vmem_limit_bytes=64 * 1024 * 1024),
        cost_estimate=pl.CostEstimate(
            flops=flops, transcendentals=0, bytes_accessed=bytes_accessed),
    )(*args)


def bn_prelu_pallas(s_nhwc, gamma, beta, slope, eps=1e-5):
    """BatchNorm2d (training statistics) + PReLU; tiled lane-dense normalize in Pallas."""
    N, H, W, C = s_nhwc.shape
    cnt = float(N * H * W)

    # Single-pass batch statistics (E[x], E[x^2]) over the bf16 slab (one HBM read).
    # TODO(synk): fuse the per-channel sum / sum-of-squares into the conv epilogue
    #             to drop this read entirely.
    sf = s_nhwc.astype(jnp.float32)
    ssum = jnp.sum(sf, axis=(0, 1, 2))
    ssq = jnp.sum(sf * sf, axis=(0, 1, 2))
    mean = ssum / cnt
    var = jnp.maximum(ssq / cnt - mean * mean, 0.0)
    scale = gamma.astype(jnp.float32) * jax.lax.rsqrt(var + eps)
    shift = beta.astype(jnp.float32) - mean * scale

    M, L = N * H, W * C                      # lane-dense layout for the VPU pass
    y2 = s_nhwc.reshape(M, L)                # free reshape on HBM (row-major)
    scale_l = jnp.tile(scale, W).reshape(1, L)
    shift_l = jnp.tile(shift, W).reshape(1, L)
    slope_l = jnp.tile(slope.astype(jnp.float32), W).reshape(1, L)

    tm = _pick_m_tile(M, L)
    out2 = pl.pallas_call(
        _bn_prelu_kernel,
        out_shape=jax.ShapeDtypeStruct((M, L), jnp.float32),
        grid=(M // tm,),
        in_specs=[
            pl.BlockSpec((tm, L), lambda i: (i, 0)),
            pl.BlockSpec((1, L), lambda i: (0, 0)),
            pl.BlockSpec((1, L), lambda i: (0, 0)),
            pl.BlockSpec((1, L), lambda i: (0, 0)),
        ],
        out_specs=pl.BlockSpec((tm, L), lambda i: (i, 0)),
        compiler_params=pltpu.CompilerParams(dimension_semantics=("parallel",)),
    )(y2, scale_l, shift_l, slope_l)
    return out2.reshape(N, H, W, C)


# ----------------------------------------------------------------------------
# Glue (plain JAX): max-pool, gather-free bilinear x2 upsample (PyTorch semantics)
# ----------------------------------------------------------------------------
def maxpool2(x_nhwc):
    N, H, W, C = x_nhwc.shape
    return jnp.max(x_nhwc.reshape(N, H // 2, 2, W // 2, 2, C), axis=(2, 4))


def _up2_axis(x, axis):
    """x2 bilinear upsample along `axis` (align_corners=False): fixed 0.25/0.75 mix."""
    n = x.shape[axis]
    sl = lambda a, b: jax.lax.slice_in_dim(x, a, b, axis=axis)
    prev = jnp.concatenate([sl(0, 1), sl(0, n - 1)], axis=axis)   # x[k-1], clamped
    nxt = jnp.concatenate([sl(1, n), sl(n - 1, n)], axis=axis)    # x[k+1], clamped
    even = 0.25 * prev + 0.75 * x
    odd = 0.75 * x + 0.25 * nxt
    y = jnp.stack([even, odd], axis=axis + 1)                     # interleave
    new_shape = x.shape[:axis] + (2 * n,) + x.shape[axis + 1:]
    return y.reshape(new_shape)


def bilinear_up2(x_nhwc):
    """F.interpolate(scale_factor=2, mode='bilinear', align_corners=False), gather-free."""
    return _up2_axis(_up2_axis(x_nhwc, 1), 2)


# ----------------------------------------------------------------------------
# Octconv forward (alpha_in = alpha_out = (0.5, 0.5), stride=1, bias=False)
# ----------------------------------------------------------------------------
def octconv_forward(x_high_nchw, x_low_nchw, params):
    w = params["weight"]                       # (Co, Ci, 3, 3), OIHW
    Co, Ci = w.shape[0], w.shape[1]
    Co2, Ci2 = Co // 2, Ci // 2

    xh = jnp.transpose(x_high_nchw, (0, 2, 3, 1)).astype(jnp.float32)   # NHWC
    xl = jnp.transpose(x_low_nchw, (0, 2, 3, 1)).astype(jnp.float32)    # NHWC
    w_hwio = jnp.transpose(w, (2, 3, 1, 0))    # (3, 3, Ci, Co)

    # ---- Fused low-resolution GEMM -----------------------------------------
    # Inputs concatenated along Cin: [x_low, maxpool(x_high)]
    # Outputs concatenated along Cout: [s1 = y11 + y01, y10_pre]
    # TODO(synk): split y10_pre into its own GEMM (or restructure) when the conv
    #             becomes MXU-bound: ~25% of this GEMM multiplies zero weights.
    xpool = maxpool2(xh)
    xcat = jnp.concatenate([xl, xpool], axis=-1)                        # (N,Hl,Wl,Ci)
    w_low = jnp.concatenate([
        jnp.concatenate([w_hwio[:, :, Ci2:, Co2:],        # x_low  -> y11
                         w_hwio[:, :, :Ci2, Co2:]],       # xpool  -> y01
                        axis=2),
        jnp.concatenate([w_hwio[:, :, Ci2:, :Co2],        # x_low  -> y10_pre
                         jnp.zeros_like(w_hwio[:, :, :Ci2, :Co2])],
                        axis=2),
    ], axis=3)                                                          # (3,3,Ci,2*Co2)

    ylow = conv3x3_pallas(xcat, w_low)          # (N, Hl, Wl, 2*Co2) bf16
    s1 = ylow[..., :Co2]                        # branch-1 pre-BN sum (y11 + y01)
    y10 = bilinear_up2(ylow[..., Co2:].astype(jnp.float32)).astype(jnp.bfloat16)

    # ---- High-resolution conv with fused branch sum ------------------------
    s0 = conv3x3_pallas(xh, w_hwio[:, :, :Ci2, :Co2], add=y10)  # y00 + y10 (bf16)

    # ---- BatchNorm(train) + PReLU per output branch ------------------------
    out0 = bn_prelu_pallas(s0, params["gamma0"], params["beta0"], params["prelu0"])
    out1 = bn_prelu_pallas(s1, params["gamma1"], params["beta1"], params["prelu1"])

    return (jnp.transpose(out0, (0, 3, 1, 2)),
            jnp.transpose(out1, (0, 3, 1, 2)))  # back to NCHW


# ----------------------------------------------------------------------------
# Pure-JAX reference (correctness sanity check; f32 end to end, gather upsample)
# ----------------------------------------------------------------------------
def _ref_conv(x_nhwc, w_oihw):
    return jax.lax.conv_general_dilated(
        x_nhwc, jnp.transpose(w_oihw, (2, 3, 1, 0)),
        window_strides=(1, 1), padding=((1, 1), (1, 1)),
        dimension_numbers=("NHWC", "HWIO", "NHWC"))


def _ref_bilinear_up2(x_nhwc):
    """Gather-based reference for align_corners=False x2 bilinear upsampling."""
    def idx(size):
        dst = jnp.arange(2 * size, dtype=jnp.float32)
        src = jnp.maximum(dst * 0.5 - 0.25, 0.0)
        i0 = jnp.floor(src).astype(jnp.int32)
        i1 = jnp.minimum(i0 + 1, size - 1)
        lam = src - i0.astype(jnp.float32)
        return i0, i1, lam

    _, h, w, _ = x_nhwc.shape
    i0, i1, lh = idx(h)
    x = (x_nhwc[:, i0] * (1.0 - lh)[None, :, None, None]
         + x_nhwc[:, i1] * lh[None, :, None, None])
    j0, j1, lw = idx(w)
    x = (x[:, :, j0] * (1.0 - lw)[None, None, :, None]
         + x[:, :, j1] * lw[None, None, :, None])
    return x


def _ref_bn_prelu(ya, yb, gamma, beta, slope):
    y = ya + yb
    mean = y.mean(axis=(0, 1, 2), keepdims=True)
    var = ((y - mean) ** 2).mean(axis=(0, 1, 2), keepdims=True)
    z = (y - mean) / jnp.sqrt(var + 1e-5) * gamma.reshape(1, 1, 1, -1) \
        + beta.reshape(1, 1, 1, -1)
    return jnp.where(z >= 0, z, slope.reshape(1, 1, 1, -1) * z)


def _ref_forward(x_high_nchw, x_low_nchw, params):
    w = params["weight"]
    Co, Ci = w.shape[0], w.shape[1]
    Co2, Ci2 = Co // 2, Ci // 2
    xh = jnp.transpose(x_high_nchw, (0, 2, 3, 1)).astype(jnp.float32)
    xl = jnp.transpose(x_low_nchw, (0, 2, 3, 1)).astype(jnp.float32)
    y00 = _ref_conv(xh, w[:Co2, :Ci2])
    y01 = _ref_conv(maxpool2(xh), w[Co2:, :Ci2])
    y10 = _ref_bilinear_up2(_ref_conv(xl, w[:Co2, Ci2:]))
    y11 = _ref_conv(xl, w[Co2:, Ci2:])
    out0 = _ref_bn_prelu(y00, y10, params["gamma0"], params["beta0"], params["prelu0"])
    out1 = _ref_bn_prelu(y01, y11, params["gamma1"], params["beta1"], params["prelu1"])
    return (jnp.transpose(out0, (0, 3, 1, 2)), jnp.transpose(out1, (0, 3, 1, 2)))


# ----------------------------------------------------------------------------
if __name__ == "__main__":
    key = jax.random.PRNGKey(0)
    k_w, k_h, k_l = jax.random.split(key, 3)

    in_channels, out_channels = 8, 8
    N, H, W = 2, 16, 16
    Co2 = out_channels // 2

    # kaiming_uniform_(a=sqrt(5)) on (Cout, Cin, 3, 3) -> U(-1/sqrt(fan_in), +)
    fan_in = in_channels * 3 * 3
    bound = 1.0 / math.sqrt(fan_in)
    weight = jax.random.uniform(k_w, (out_channels, in_channels, 3, 3),
                                jnp.float32, -bound, bound)

    params = {
        "weight": weight,
        "gamma0": jnp.ones((Co2,), jnp.float32),
        "beta0": jnp.zeros((Co2,), jnp.float32),
        "prelu0": jnp.full((Co2,), 0.25, jnp.float32),
        "gamma1": jnp.ones((Co2,), jnp.float32),
        "beta1": jnp.zeros((Co2,), jnp.float32),
        "prelu1": jnp.full((Co2,), 0.25, jnp.float32),
    }

    # xset = [high-frequency (full res), low-frequency (half res)], NCHW
    x_high = jax.random.normal(k_h, (N, in_channels // 2, H, W), jnp.float32)
    x_low = jax.random.normal(k_l, (N, in_channels // 2, H // 2, W // 2), jnp.float32)

    fwd = jax.jit(octconv_forward)
    out_high, out_low = fwd(x_high, x_low, params)
    jax.block_until_ready((out_high, out_low))

    ref_high, ref_low = _ref_forward(x_high, x_low, params)
    assert out_high.shape == (N, Co2, H, W) and out_low.shape == (N, Co2, H // 2, W // 2)
    # bf16 MXU operands + bf16-staged intermediates -> looser tolerance than pure f32.
    assert bool(jnp.allclose(out_high, ref_high, rtol=5e-2, atol=5e-2)), (
        "high-branch mismatch, max err %e" % float(jnp.max(jnp.abs(out_high - ref_high))))
    assert bool(jnp.allclose(out_low, ref_low, rtol=5e-2, atol=5e-2)), (
        "low-branch mismatch, max err %e" % float(jnp.max(jnp.abs(out_low - ref_low))))

    print("KERNEL_OK")
</pallas_src>

<mosaic_0001>
module attributes {stable_mosaic.version = 11 : i64} {
  func.func @_conv3x3_kernel(%arg0: i32, %arg1: i32, %arg2: memref<1x10x10x8xbf16, #tpu.memory_space<vmem>>, %arg3: memref<72x8xbf16, #tpu.memory_space<vmem>>, %arg4: memref<1x8x8x8xbf16, #tpu.memory_space<vmem>>, %arg5: memref<64x72xbf16, #tpu.memory_space<vmem>>) attributes {dimension_semantics = [#tpu.dimension_semantics<parallel>, #tpu.dimension_semantics<arbitrary>], iteration_bounds = array<i64: 2, 1>, scalar_prefetch = 0 : i64, scratch_operands = 1 : i64, tpu.core_type = #tpu.core_type<tc>, window_params = [{transform_indices = @transform_0, window_bounds = array<i64: 1, 10, 10, 8>}, {pipeline_mode = #tpu.pipeline_mode<synchronous>, transform_indices = @transform_1, window_bounds = array<i64: 72, 8>}, {transform_indices = @transform_2, window_bounds = array<i64: 1, 8, 8, 8>}]} {
    %c8_i32 = arith.constant 8 : i32
    %0 = arith.muli %arg1, %c8_i32 : i32
    %1 = tpu.assume_multiple %0, 8 : i32
    %c0_i32 = arith.constant 0 : i32
    %2 = arith.addi %1, %c0_i32 : i32
    %c0 = arith.constant 0 : index
    %3 = arith.index_cast %2 : i32 to index
    %c0_0 = arith.constant 0 : index
    %c0_1 = arith.constant 0 : index
    %4 = vector.load %arg2[%c0, %3, %c0_0, %c0_1] : memref<1x10x10x8xbf16, #tpu.memory_space<vmem>>, vector<1x8x10x8xbf16>
    %5 = vector.shape_cast %4 : vector<1x8x10x8xbf16> to vector<8x10x8xbf16>
    %6 = arith.extf %5 : vector<8x10x8xbf16> to vector<8x10x8xf32>
    %7 = vector.extract_strided_slice %6 {offsets = [0, 0, 0], sizes = [8, 8, 8], strides = [1, 1, 1]} : vector<8x10x8xf32> to vector<8x8x8xf32>
    %8 = vector.shape_cast %7 : vector<8x8x8xf32> to vector<64x8xf32>
    %9 = arith.truncf %8 : vector<64x8xf32> to vector<64x8xbf16>
    %c0_2 = arith.constant 0 : index
    %c0_3 = arith.constant 0 : index
    %10 = vector.load %arg5[%c0_2, %c0_3] : memref<64x72xbf16, #tpu.memory_space<vmem>>, vector<64x8xbf16>
    tpu.vector_store %arg5[%c0_2, %c0_3], %9 {strides = array<i32>} : memref<64x72xbf16, #tpu.memory_space<vmem>>, vector<64x8xbf16>,
    %11 = vector.extract_strided_slice %6 {offsets = [0, 1, 0], sizes = [8, 8, 8], strides = [1, 1, 1]} : vector<8x10x8xf32> to vector<8x8x8xf32>
    %12 = vector.shape_cast %11 : vector<8x8x8xf32> to vector<64x8xf32>
    %13 = arith.truncf %12 : vector<64x8xf32> to vector<64x8xbf16>
    %c0_4 = arith.constant 0 : index
    %c8 = arith.constant 8 : index
    %14 = vector.load %arg5[%c0_4, %c8] : memref<64x72xbf16, #tpu.memory_space<vmem>>, vector<64x8xbf16>
    tpu.vector_store %arg5[%c0_4, %c8], %13 {strides = array<i32>} : memref<64x72xbf16, #tpu.memory_space<vmem>>, vector<64x8xbf16>,
    %15 = vector.extract_strided_slice %6 {offsets = [0, 2, 0], sizes = [8, 8, 8], strides = [1, 1, 1]} : vector<8x10x8xf32> to vector<8x8x8xf32>
    %16 = vector.shape_cast %15 : vector<8x8x8xf32> to vector<64x8xf32>
    %17 = arith.truncf %16 : vector<64x8xf32> to vector<64x8xbf16>
    %c0_5 = arith.constant 0 : index
    %c16 = arith.constant 16 : index
    %18 = vector.load %arg5[%c0_5, %c16] : memref<64x72xbf16, #tpu.memory_space<vmem>>, vector<64x8xbf16>
    tpu.vector_store %arg5[%c0_5, %c16], %17 {strides = array<i32>} : memref<64x72xbf16, #tpu.memory_space<vmem>>, vector<64x8xbf16>,
    %c1_i32 = arith.constant 1 : i32
    %19 = arith.addi %1, %c1_i32 : i32
    %c0_6 = arith.constant 0 : index
    %20 = arith.index_cast %19 : i32 to index
    %c0_7 = arith.constant 0 : index
    %c0_8 = arith.constant 0 : index
    %21 = vector.load %arg2[%c0_6, %20, %c0_7, %c0_8] : memref<1x10x10x8xbf16, #tpu.memory_space<vmem>>, vector<1x8x10x8xbf16>
    %22 = vector.shape_cast %21 : vector<1x8x10x8xbf16> to vector<8x10x8xbf16>
    %23 = arith.extf %22 : vector<8x10x8xbf16> to vector<8x10x8xf32>
    %24 = vector.extract_strided_slice %23 {offsets = [0, 0, 0], sizes = [8, 8, 8], strides = [1, 1, 1]} : vector<8x10x8xf32> to vector<8x8x8xf32>
    %25 = vector.shape_cast %24 : vector<8x8x8xf32> to vector<64x8xf32>
    %26 = arith.truncf %25 : vector<64x8xf32> to vector<64x8xbf16>
    %c0_9 = arith.constant 0 : index
    %c24 = arith.constant 24 : index
    %27 = vector.load %arg5[%c0_9, %c24] : memref<64x72xbf16, #tpu.memory_space<vmem>>, vector<64x8xbf16>
    tpu.vector_store %arg5[%c0_9, %c24], %26 {strides = array<i32>} : memref<64x72xbf16, #tpu.memory_space<vmem>>, vector<64x8xbf16>,
    %28 = vector.extract_strided_slice %23 {offsets = [0, 1, 0], sizes = [8, 8, 8], strides = [1, 1, 1]} : vector<8x10x8xf32> to vector<8x8x8xf32>
    %29 = vector.shape_cast %28 : vector<8x8x8xf32> to vector<64x8xf32>
    %30 = arith.truncf %29 : vector<64x8xf32> to vector<64x8xbf16>
    %c0_10 = arith.constant 0 : index
    %c32 = arith.constant 32 : index
    %31 = vector.load %arg5[%c0_10, %c32] : memref<64x72xbf16, #tpu.memory_space<vmem>>, vector<64x8xbf16>
    tpu.vector_store %arg5[%c0_10, %c32], %30 {strides = array<i32>} : memref<64x72xbf16, #tpu.memory_space<vmem>>, vector<64x8xbf16>,
    %32 = vector.extract_strided_slice %23 {offsets = [0, 2, 0], sizes = [8, 8, 8], strides = [1, 1, 1]} : vector<8x10x8xf32> to vector<8x8x8xf32>
    %33 = vector.shape_cast %32 : vector<8x8x8xf32> to vector<64x8xf32>
    %34 = arith.truncf %33 : vector<64x8xf32> to vector<64x8xbf16>
    %c0_11 = arith.constant 0 : index
    %c40 = arith.constant 40 : index
    %35 = vector.load %arg5[%c0_11, %c40] : memref<64x72xbf16, #tpu.memory_space<vmem>>, vector<64x8xbf16>
    tpu.vector_store %arg5[%c0_11, %c40], %34 {strides = array<i32>} : memref<64x72xbf16, #tpu.memory_space<vmem>>, vector<64x8xbf16>,
    %c2_i32 = arith.constant 2 : i32
    %36 = arith.addi %1, %c2_i32 : i32
    %c0_12 = arith.constant 0 : index
    %37 = arith.index_cast %36 : i32 to index
    %c0_13 = arith.constant 0 : index
    %c0_14 = arith.constant 0 : index
    %38 = vector.load %arg2[%c0_12, %37, %c0_13, %c0_14] : memref<1x10x10x8xbf16, #tpu.memory_space<vmem>>, vector<1x8x10x8xbf16>
    %39 = vector.shape_cast %38 : vector<1x8x10x8xbf16> to vector<8x10x8xbf16>
    %40 = arith.extf %39 : vector<8x10x8xbf16> to vector<8x10x8xf32>
    %41 = vector.extract_strided_slice %40 {offsets = [0, 0, 0], sizes = [8, 8, 8], strides = [1, 1, 1]} : vector<8x10x8xf32> to vector<8x8x8xf32>
    %42 = vector.shape_cast %41 : vector<8x8x8xf32> to vector<64x8xf32>
    %43 = arith.truncf %42 : vector<64x8xf32> to vector<64x8xbf16>
    %c0_15 = arith.constant 0 : index
    %c48 = arith.constant 48 : index
    %44 = vector.load %arg5[%c0_15, %c48] : memref<64x72xbf16, #tpu.memory_space<vmem>>, vector<64x8xbf16>
    tpu.vector_store %arg5[%c0_15, %c48], %43 {strides = array<i32>} : memref<64x72xbf16, #tpu.memory_space<vmem>>, vector<64x8xbf16>,
    %45 = vector.extract_strided_slice %40 {offsets = [0, 1, 0], sizes = [8, 8, 8], strides = [1, 1, 1]} : vector<8x10x8xf32> to vector<8x8x8xf32>
    %46 = vector.shape_cast %45 : vector<8x8x8xf32> to vector<64x8xf32>
    %47 = arith.truncf %46 : vector<64x8xf32> to vector<64x8xbf16>
    %c0_16 = arith.constant 0 : index
    %c56 = arith.constant 56 : index
    %48 = vector.load %arg5[%c0_16, %c56] : memref<64x72xbf16, #tpu.memory_space<vmem>>, vector<64x8xbf16>
    tpu.vector_store %arg5[%c0_16, %c56], %47 {strides = array<i32>} : memref<64x72xbf16, #tpu.memory_space<vmem>>, vector<64x8xbf16>,
    %49 = vector.extract_strided_slice %40 {offsets = [0, 2, 0], sizes = [8, 8, 8], strides = [1, 1, 1]} : vector<8x10x8xf32> to vector<8x8x8xf32>
    %50 = vector.shape_cast %49 : vector<8x8x8xf32> to vector<64x8xf32>
    %51 = arith.truncf %50 : vector<64x8xf32> to vector<64x8xbf16>
    %c0_17 = arith.constant 0 : index
    %c64 = arith.constant 64 : index
    %52 = vector.load %arg5[%c0_17, %c64] : memref<64x72xbf16, #tpu.memory_space<vmem>>, vector<64x8xbf16>
    tpu.vector_store %arg5[%c0_17, %c64], %51 {strides = array<i32>} : memref<64x72xbf16, #tpu.memory_space<vmem>>, vector<64x8xbf16>,
    %c0_18 = arith.constant 0 : index
    %c0_19 = arith.constant 0 : index
    %53 = vector.load %arg5[%c0_18, %c0_19] : memref<64x72xbf16, #tpu.memory_space<vmem>>, vector<64x72xbf16>
    %c0_20 = arith.constant 0 : index
    %c0_21 = arith.constant 0 : index
    %54 = vector.load %arg3[%c0_20, %c0_21] : memref<72x8xbf16, #tpu.memory_space<vmem>>, vector<72x8xbf16>
    %cst = arith.constant dense<0.000000e+00> : vector<64x8xf32>
    %55 = tpu.matmul %53, %54, %cst {dimension_numbers = #tpu.dot_dimension_numbers<[1], [0], [0], [1], [0, 0, 1, 1], [], []>} : vector<64x72xbf16>, vector<72x8xbf16>, vector<64x8xf32> -> vector<64x8xf32>
    %56 = vector.shape_cast %55 : vector<64x8xf32> to vector<1x8x8x8xf32>
    %57 = arith.truncf %56 : vector<1x8x8x8xf32> to vector<1x8x8x8xbf16>
    %c0_22 = arith.constant 0 : index
    %c0_23 = arith.constant 0 : index
    %c0_24 = arith.constant 0 : index
    %c0_25 = arith.constant 0 : index
    %58 = vector.load %arg4[%c0_22, %c0_23, %c0_24, %c0_25] : memref<1x8x8x8xbf16, #tpu.memory_space<vmem>>, vector<1x8x8x8xbf16>
    tpu.vector_store %arg4[%c0_22, %c0_23, %c0_24, %c0_25], %57 {strides = array<i32>} : memref<1x8x8x8xbf16, #tpu.memory_space<vmem>>, vector<1x8x8x8xbf16>,
    return
  }
  func.func @transform_0(%arg0: i32, %arg1: i32) -> (i32, i32, i32, i32) {
    %c0_i32 = arith.constant 0 : i32
    %c0_i32_0 = arith.constant 0 : i32
    %c0_i32_1 = arith.constant 0 : i32
    %c0_i32_2 = arith.constant 0 : i32
    return %arg0, %c0_i32, %c0_i32_0, %c0_i32_1 : i32, i32, i32, i32
  }
  func.func @transform_1(%arg0: i32, %arg1: i32) -> (i32, i32) {
    %c0_i32 = arith.constant 0 : i32
    %c0_i32_0 = arith.constant 0 : i32
    %c0_i32_1 = arith.constant 0 : i32
    return %c0_i32, %c0_i32_0 : i32, i32
  }
  func.func @transform_2(%arg0: i32, %arg1: i32) -> (i32, i32, i32, i32) {
    %c0_i32 = arith.constant 0 : i32
    %c0_i32_0 = arith.constant 0 : i32
    %c0_i32_1 = arith.constant 0 : i32
    return %arg0, %arg1, %c0_i32, %c0_i32_0 : i32, i32, i32, i32
  }
}

module attributes {stable_mosaic.version = 11 : i64} {
  func.func @_bn_prelu_kernel(%arg0: i32, %arg1: memref<16x32xbf16, #tpu.memory_space<vmem>>, %arg2: memref<1x32xf32, #tpu.memory_space<vmem>>, %arg3: memref<1x32xf32, #tpu.memory_space<vmem>>, %arg4: memref<1x32xf32, #tpu.memory_space<vmem>>, %arg5: memref<16x32xf32, #tpu.memory_space<vmem>>) attributes {dimension_semantics = [#tpu.dimension_semantics<parallel>], iteration_bounds = array<i64: 1>, scalar_prefetch = 0 : i64, scratch_operands = 0 : i64, tpu.core_type = #tpu.core_type<tc>, window_params = [{transform_indices = @transform_0, window_bounds = array<i64: 16, 32>}, {pipeline_mode = #tpu.pipeline_mode<synchronous>, transform_indices = @transform_1, window_bounds = array<i64: 1, 32>}, {pipeline_mode = #tpu.pipeline_mode<synchronous>, transform_indices = @transform_2, window_bounds = array<i64: 1, 32>}, {pipeline_mode = #tpu.pipeline_mode<synchronous>, transform_indices = @transform_3, window_bounds = array<i64: 1, 32>}, {transform_indices = @transform_4, window_bounds = array<i64: 16, 32>}]} {
    %c0 = arith.constant 0 : index
    %c0_0 = arith.constant 0 : index
    %0 = vector.load %arg1[%c0, %c0_0] : memref<16x32xbf16, #tpu.memory_space<vmem>>, vector<16x32xbf16>
    %1 = arith.extf %0 : vector<16x32xbf16> to vector<16x32xf32>
    %c0_1 = arith.constant 0 : index
    %c0_2 = arith.constant 0 : index
    %2 = vector.load %arg2[%c0_1, %c0_2] : memref<1x32xf32, #tpu.memory_space<vmem>>, vector<1x32xf32>
    %3 = vector.broadcast %2 : vector<1x32xf32> to vector<16x32xf32>
    %4 = arith.mulf %1, %3 : vector<16x32xf32>
    %c0_3 = arith.constant 0 : index
    %c0_4 = arith.constant 0 : index
    %5 = vector.load %arg3[%c0_3, %c0_4] : memref<1x32xf32, #tpu.memory_space<vmem>>, vector<1x32xf32>
    %6 = vector.broadcast %5 : vector<1x32xf32> to vector<16x32xf32>
    %7 = arith.addf %4, %6 : vector<16x32xf32>
    %cst = arith.constant 0.000000e+00 : f32
    %8 = vector.broadcast %cst : f32 to vector<16x32xf32>
    %9 = arith.cmpf oge, %7, %8 : vector<16x32xf32>
    %c0_5 = arith.constant 0 : index
    %c0_6 = arith.constant 0 : index
    %10 = vector.load %arg4[%c0_5, %c0_6] : memref<1x32xf32, #tpu.memory_space<vmem>>, vector<1x32xf32>
    %11 = vector.broadcast %10 : vector<1x32xf32> to vector<16x32xf32>
    %12 = arith.mulf %11, %7 : vector<16x32xf32>
    %13 = arith.select %9, %7, %12 : vector<16x32xi1>, vector<16x32xf32>
    %c0_7 = arith.constant 0 : index
    %c0_8 = arith.constant 0 : index
    %14 = vector.load %arg5[%c0_7, %c0_8] : memref<16x32xf32, #tpu.memory_space<vmem>>, vector<16x32xf32>
    tpu.vector_store %arg5[%c0_7, %c0_8], %13 {strides = array<i32>} : memref<16x32xf32, #tpu.memory_space<vmem>>, vector<16x32xf32>,
    return
  }
  func.func @transform_0(%arg0: i32) -> (i32, i32) {
    %c0_i32 = arith.constant 0 : i32
    %c0_i32_0 = arith.constant 0 : i32
    return %arg0, %c0_i32 : i32, i32
  }
  func.func @transform_1(%arg0: i32) -> (i32, i32) {
    %c0_i32 = arith.constant 0 : i32
    %c0_i32_0 = arith.constant 0 : i32
    %c0_i32_1 = arith.constant 0 : i32
    return %c0_i32, %c0_i32_0 : i32, i32
  }
  func.func @transform_2(%arg0: i32) -> (i32, i32) {
    %c0_i32 = arith.constant 0 : i32
    %c0_i32_0 = arith.constant 0 : i32
    %c0_i32_1 = arith.constant 0 : i32
    return %c0_i32, %c0_i32_0 : i32, i32
  }
  func.func @transform_3(%arg0: i32) -> (i32, i32) {
    %c0_i32 = arith.constant 0 : i32
    %c0_i32_0 = arith.constant 0 : i32
    %c0_i32_1 = arith.constant 0 : i32
    return %c0_i32, %c0_i32_0 : i32, i32
  }
  func.func @transform_4(%arg0: i32) -> (i32, i32) {
    %c0_i32 = arith.constant 0 : i32
    %c0_i32_0 = arith.constant 0 : i32
    return %arg0, %c0_i32 : i32, i32
  }
}

module attributes {stable_mosaic.version = 11 : i64} {
  func.func @_conv3x3_add_kernel(%arg0: i32, %arg1: i32, %arg2: memref<1x18x18x4xbf16, #tpu.memory_space<vmem>>, %arg3: memref<36x4xbf16, #tpu.memory_space<vmem>>, %arg4: memref<1x16x16x4xbf16, #tpu.memory_space<vmem>>, %arg5: memref<1x16x16x4xbf16, #tpu.memory_space<vmem>>, %arg6: memref<256x36xbf16, #tpu.memory_space<vmem>>) attributes {dimension_semantics = [#tpu.dimension_semantics<parallel>, #tpu.dimension_semantics<arbitrary>], iteration_bounds = array<i64: 2, 1>, scalar_prefetch = 0 : i64, scratch_operands = 1 : i64, tpu.core_type = #tpu.core_type<tc>, window_params = [{transform_indices = @transform_0, window_bounds = array<i64: 1, 18, 18, 4>}, {pipeline_mode = #tpu.pipeline_mode<synchronous>, transform_indices = @transform_1, window_bounds = array<i64: 36, 4>}, {transform_indices = @transform_2, window_bounds = array<i64: 1, 16, 16, 4>}, {transform_indices = @transform_3, window_bounds = array<i64: 1, 16, 16, 4>}]} {
    %c16_i32 = arith.constant 16 : i32
    %0 = arith.muli %arg1, %c16_i32 : i32
    %1 = tpu.assume_multiple %0, 16 : i32
    %c0_i32 = arith.constant 0 : i32
    %2 = arith.addi %1, %c0_i32 : i32
    %c0 = arith.constant 0 : index
    %3 = arith.index_cast %2 : i32 to index
    %c0_0 = arith.constant 0 : index
    %c0_1 = arith.constant 0 : index
    %4 = vector.load %arg2[%c0, %3, %c0_0, %c0_1] : memref<1x18x18x4xbf16, #tpu.memory_space<vmem>>, vector<1x16x18x4xbf16>
    %5 = vector.shape_cast %4 : vector<1x16x18x4xbf16> to vector<16x18x4xbf16>
    %6 = arith.extf %5 : vector<16x18x4xbf16> to vector<16x18x4xf32>
    %7 = vector.extract_strided_slice %6 {offsets = [0, 0, 0], sizes = [16, 16, 4], strides = [1, 1, 1]} : vector<16x18x4xf32> to vector<16x16x4xf32>
    %8 = vector.shape_cast %7 : vector<16x16x4xf32> to vector<256x4xf32>
    %9 = arith.truncf %8 : vector<256x4xf32> to vector<256x4xbf16>
    %c0_2 = arith.constant 0 : index
    %c0_3 = arith.constant 0 : index
    %10 = vector.load %arg6[%c0_2, %c0_3] : memref<256x36xbf16, #tpu.memory_space<vmem>>, vector<256x4xbf16>
    tpu.vector_store %arg6[%c0_2, %c0_3], %9 {strides = array<i32>} : memref<256x36xbf16, #tpu.memory_space<vmem>>, vector<256x4xbf16>,
    %11 = vector.extract_strided_slice %6 {offsets = [0, 1, 0], sizes = [16, 16, 4], strides = [1, 1, 1]} : vector<16x18x4xf32> to vector<16x16x4xf32>
    %12 = vector.shape_cast %11 : vector<16x16x4xf32> to vector<256x4xf32>
    %13 = arith.truncf %12 : vector<256x4xf32> to vector<256x4xbf16>
    %c0_4 = arith.constant 0 : index
    %c4 = arith.constant 4 : index
    %14 = vector.load %arg6[%c0_4, %c4] : memref<256x36xbf16, #tpu.memory_space<vmem>>, vector<256x4xbf16>
    tpu.vector_store %arg6[%c0_4, %c4], %13 {strides = array<i32>} : memref<256x36xbf16, #tpu.memory_space<vmem>>, vector<256x4xbf16>,
    %15 = vector.extract_strided_slice %6 {offsets = [0, 2, 0], sizes = [16, 16, 4], strides = [1, 1, 1]} : vector<16x18x4xf32> to vector<16x16x4xf32>
    %16 = vector.shape_cast %15 : vector<16x16x4xf32> to vector<256x4xf32>
    %17 = arith.truncf %16 : vector<256x4xf32> to vector<256x4xbf16>
    %c0_5 = arith.constant 0 : index
    %c8 = arith.constant 8 : index
    %18 = vector.load %arg6[%c0_5, %c8] : memref<256x36xbf16, #tpu.memory_space<vmem>>, vector<256x4xbf16>
    tpu.vector_store %arg6[%c0_5, %c8], %17 {strides = array<i32>} : memref<256x36xbf16, #tpu.memory_space<vmem>>, vector<256x4xbf16>,
    %c1_i32 = arith.constant 1 : i32
    %19 = arith.addi %1, %c1_i32 : i32
    %c0_6 = arith.constant 0 : index
    %20 = arith.index_cast %19 : i32 to index
    %c0_7 = arith.constant 0 : index
    %c0_8 = arith.constant 0 : index
    %21 = vector.load %arg2[%c0_6, %20, %c0_7, %c0_8] : memref<1x18x18x4xbf16, #tpu.memory_space<vmem>>, vector<1x16x18x4xbf16>
    %22 = vector.shape_cast %21 : vector<1x16x18x4xbf16> to vector<16x18x4xbf16>
    %23 = arith.extf %22 : vector<16x18x4xbf16> to vector<16x18x4xf32>
    %24 = vector.extract_strided_slice %23 {offsets = [0, 0, 0], sizes = [16, 16, 4], strides = [1, 1, 1]} : vector<16x18x4xf32> to vector<16x16x4xf32>
    %25 = vector.shape_cast %24 : vector<16x16x4xf32> to vector<256x4xf32>
    %26 = arith.truncf %25 : vector<256x4xf32> to vector<256x4xbf16>
    %c0_9 = arith.constant 0 : index
    %c12 = arith.constant 12 : index
    %27 = vector.load %arg6[%c0_9, %c12] : memref<256x36xbf16, #tpu.memory_space<vmem>>, vector<256x4xbf16>
    tpu.vector_store %arg6[%c0_9, %c12], %26 {strides = array<i32>} : memref<256x36xbf16, #tpu.memory_space<vmem>>, vector<256x4xbf16>,
    %28 = vector.extract_strided_slice %23 {offsets = [0, 1, 0], sizes = [16, 16, 4], strides = [1, 1, 1]} : vector<16x18x4xf32> to vector<16x16x4xf32>
    %29 = vector.shape_cast %28 : vector<16x16x4xf32> to vector<256x4xf32>
    %30 = arith.truncf %29 : vector<256x4xf32> to vector<256x4xbf16>
    %c0_10 = arith.constant 0 : index
    %c16 = arith.constant 16 : index
    %31 = vector.load %arg6[%c0_10, %c16] : memref<256x36xbf16, #tpu.memory_space<vmem>>, vector<256x4xbf16>
    tpu.vector_store %arg6[%c0_10, %c16], %30 {strides = array<i32>} : memref<256x36xbf16, #tpu.memory_space<vmem>>, vector<256x4xbf16>,
    %32 = vector.extract_strided_slice %23 {offsets = [0, 2, 0], sizes = [16, 16, 4], strides = [1, 1, 1]} : vector<16x18x4xf32> to vector<16x16x4xf32>
    %33 = vector.shape_cast %32 : vector<16x16x4xf32> to vector<256x4xf32>
    %34 = arith.truncf %33 : vector<256x4xf32> to vector<256x4xbf16>
    %c0_11 = arith.constant 0 : index
    %c20 = arith.constant 20 : index
    %35 = vector.load %arg6[%c0_11, %c20] : memref<256x36xbf16, #tpu.memory_space<vmem>>, vector<256x4xbf16>
    tpu.vector_store %arg6[%c0_11, %c20], %34 {strides = array<i32>} : memref<256x36xbf16, #tpu.memory_space<vmem>>, vector<256x4xbf16>,
    %c2_i32 = arith.constant 2 : i32
    %36 = arith.addi %1, %c2_i32 : i32
    %c0_12 = arith.constant 0 : index
    %37 = arith.index_cast %36 : i32 to index
    %c0_13 = arith.constant 0 : index
    %c0_14 = arith.constant 0 : index
    %38 = vector.load %arg2[%c0_12, %37, %c0_13, %c0_14] : memref<1x18x18x4xbf16, #tpu.memory_space<vmem>>, vector<1x16x18x4xbf16>
    %39 = vector.shape_cast %38 : vector<1x16x18x4xbf16> to vector<16x18x4xbf16>
    %40 = arith.extf %39 : vector<16x18x4xbf16> to vector<16x18x4xf32>
    %41 = vector.extract_strided_slice %40 {offsets = [0, 0, 0], sizes = [16, 16, 4], strides = [1, 1, 1]} : vector<16x18x4xf32> to vector<16x16x4xf32>
    %42 = vector.shape_cast %41 : vector<16x16x4xf32> to vector<256x4xf32>
    %43 = arith.truncf %42 : vector<256x4xf32> to vector<256x4xbf16>
    %c0_15 = arith.constant 0 : index
    %c24 = arith.constant 24 : index
    %44 = vector.load %arg6[%c0_15, %c24] : memref<256x36xbf16, #tpu.memory_space<vmem>>, vector<256x4xbf16>
    tpu.vector_store %arg6[%c0_15, %c24], %43 {strides = array<i32>} : memref<256x36xbf16, #tpu.memory_space<vmem>>, vector<256x4xbf16>,
    %45 = vector.extract_strided_slice %40 {offsets = [0, 1, 0], sizes = [16, 16, 4], strides = [1, 1, 1]} : vector<16x18x4xf32> to vector<16x16x4xf32>
    %46 = vector.shape_cast %45 : vector<16x16x4xf32> to vector<256x4xf32>
    %47 = arith.truncf %46 : vector<256x4xf32> to vector<256x4xbf16>
    %c0_16 = arith.constant 0 : index
    %c28 = arith.constant 28 : index
    %48 = vector.load %arg6[%c0_16, %c28] : memref<256x36xbf16, #tpu.memory_space<vmem>>, vector<256x4xbf16>
    tpu.vector_store %arg6[%c0_16, %c28], %47 {strides = array<i32>} : memref<256x36xbf16, #tpu.memory_space<vmem>>, vector<256x4xbf16>,
    %49 = vector.extract_strided_slice %40 {offsets = [0, 2, 0], sizes = [16, 16, 4], strides = [1, 1, 1]} : vector<16x18x4xf32> to vector<16x16x4xf32>
    %50 = vector.shape_cast %49 : vector<16x16x4xf32> to vector<256x4xf32>
    %51 = arith.truncf %50 : vector<256x4xf32> to vector<256x4xbf16>
    %c0_17 = arith.constant 0 : index
    %c32 = arith.constant 32 : index
    %52 = vector.load %arg6[%c0_17, %c32] : memref<256x36xbf16, #tpu.memory_space<vmem>>, vector<256x4xbf16>
    tpu.vector_store %arg6[%c0_17, %c32], %51 {strides = array<i32>} : memref<256x36xbf16, #tpu.memory_space<vmem>>, vector<256x4xbf16>,
    %c0_18 = arith.constant 0 : index
    %c0_19 = arith.constant 0 : index
    %53 = vector.load %arg6[%c0_18, %c0_19] : memref<256x36xbf16, #tpu.memory_space<vmem>>, vector<256x36xbf16>
    %c0_20 = arith.constant 0 : index
    %c0_21 = arith.constant 0 : index
    %54 = vector.load %arg3[%c0_20, %c0_21] : memref<36x4xbf16, #tpu.memory_space<vmem>>, vector<36x4xbf16>
    %cst = arith.constant dense<0.000000e+00> : vector<256x4xf32>
    %55 = tpu.matmul %53, %54, %cst {dimension_numbers = #tpu.dot_dimension_numbers<[1], [0], [0], [1], [0, 0, 1, 1], [], []>} : vector<256x36xbf16>, vector<36x4xbf16>, vector<256x4xf32> -> vector<256x4xf32>
    %56 = vector.shape_cast %55 : vector<256x4xf32> to vector<1x16x16x4xf32>
    %c0_22 = arith.constant 0 : index
    %c0_23 = arith.constant 0 : index
    %c0_24 = arith.constant 0 : index
    %c0_25 = arith.constant 0 : index
    %57 = vector.load %arg4[%c0_22, %c0_23, %c0_24, %c0_25] : memref<1x16x16x4xbf16, #tpu.memory_space<vmem>>, vector<1x16x16x4xbf16>
    %58 = arith.extf %57 : vector<1x16x16x4xbf16> to vector<1x16x16x4xf32>
    %59 = arith.addf %56, %58 : vector<1x16x16x4xf32>
    %60 = arith.truncf %59 : vector<1x16x16x4xf32> to vector<1x16x16x4xbf16>
    %c0_26 = arith.constant 0 : index
    %c0_27 = arith.constant 0 : index
    %c0_28 = arith.constant 0 : index
    %c0_29 = arith.constant 0 : index
    %61 = vector.load %arg5[%c0_26, %c0_27, %c0_28, %c0_29] : memref<1x16x16x4xbf16, #tpu.memory_space<vmem>>, vector<1x16x16x4xbf16>
    tpu.vector_store %arg5[%c0_26, %c0_27, %c0_28, %c0_29], %60 {strides = array<i32>} : memref<1x16x16x4xbf16, #tpu.memory_space<vmem>>, vector<1x16x16x4xbf16>,
    return
  }
  func.func @transform_0(%arg0: i32, %arg1: i32) -> (i32, i32, i32, i32) {
    %c0_i32 = arith.constant 0 : i32
    %c0_i32_0 = arith.constant 0 : i32
    %c0_i32_1 = arith.constant 0 : i32
    %c0_i32_2 = arith.constant 0 : i32
    return %arg0, %c0_i32, %c0_i32_0, %c0_i32_1 : i32, i32, i32, i32
  }
  func.func @transform_1(%arg0: i32, %arg1: i32) -> (i32, i32) {
    %c0_i32 = arith.constant 0 : i32
    %c0_i32_0 = arith.constant 0 : i32
    %c0_i32_1 = arith.constant 0 : i32
    return %c0_i32, %c0_i32_0 : i32, i32
  }
  func.func @transform_2(%arg0: i32, %arg1: i32) -> (i32, i32, i32, i32) {
    %c0_i32 = arith.constant 0 : i32
    %c0_i32_0 = arith.constant 0 : i32
    %c0_i32_1 = arith.constant 0 : i32
    return %arg0, %arg1, %c0_i32, %c0_i32_0 : i32, i32, i32, i32
  }
  func.func @transform_3(%arg0: i32, %arg1: i32) -> (i32, i32, i32, i32) {
    %c0_i32 = arith.constant 0 : i32
    %c0_i32_0 = arith.constant 0 : i32
    %c0_i32_1 = arith.constant 0 : i32
    return %arg0, %arg1, %c0_i32, %c0_i32_0 : i32, i32, i32, i32
  }
}

module attributes {stable_mosaic.version = 11 : i64} {
  func.func @_bn_prelu_kernel(%arg0: i32, %arg1: memref<32x64xbf16, #tpu.memory_space<vmem>>, %arg2: memref<1x64xf32, #tpu.memory_space<vmem>>, %arg3: memref<1x64xf32, #tpu.memory_space<vmem>>, %arg4: memref<1x64xf32, #tpu.memory_space<vmem>>, %arg5: memref<32x64xf32, #tpu.memory_space<vmem>>) attributes {dimension_semantics = [#tpu.dimension_semantics<parallel>], iteration_bounds = array<i64: 1>, scalar_prefetch = 0 : i64, scratch_operands = 0 : i64, tpu.core_type = #tpu.core_type<tc>, window_params = [{transform_indices = @transform_0, window_bounds = array<i64: 32, 64>}, {pipeline_mode = #tpu.pipeline_mode<synchronous>, transform_indices = @transform_1, window_bounds = array<i64: 1, 64>}, {pipeline_mode = #tpu.pipeline_mode<synchronous>, transform_indices = @transform_2, window_bounds = array<i64: 1, 64>}, {pipeline_mode = #tpu.pipeline_mode<synchronous>, transform_indices = @transform_3, window_bounds = array<i64: 1, 64>}, {transform_indices = @transform_4, window_bounds = array<i64: 32, 64>}]} {
    %c0 = arith.constant 0 : index
    %c0_0 = arith.constant 0 : index
    %0 = vector.load %arg1[%c0, %c0_0] : memref<32x64xbf16, #tpu.memory_space<vmem>>, vector<32x64xbf16>
    %1 = arith.extf %0 : vector<32x64xbf16> to vector<32x64xf32>
    %c0_1 = arith.constant 0 : index
    %c0_2 = arith.constant 0 : index
    %2 = vector.load %arg2[%c0_1, %c0_2] : memref<1x64xf32, #tpu.memory_space<vmem>>, vector<1x64xf32>
    %3 = vector.broadcast %2 : vector<1x64xf32> to vector<32x64xf32>
    %4 = arith.mulf %1, %3 : vector<32x64xf32>
    %c0_3 = arith.constant 0 : index
    %c0_4 = arith.constant 0 : index
    %5 = vector.load %arg3[%c0_3, %c0_4] : memref<1x64xf32, #tpu.memory_space<vmem>>, vector<1x64xf32>
    %6 = vector.broadcast %5 : vector<1x64xf32> to vector<32x64xf32>
    %7 = arith.addf %4, %6 : vector<32x64xf32>
    %cst = arith.constant 0.000000e+00 : f32
    %8 = vector.broadcast %cst : f32 to vector<32x64xf32>
    %9 = arith.cmpf oge, %7, %8 : vector<32x64xf32>
    %c0_5 = arith.constant 0 : index
    %c0_6 = arith.constant 0 : index
    %10 = vector.load %arg4[%c0_5, %c0_6] : memref<1x64xf32, #tpu.memory_space<vmem>>, vector<1x64xf32>
    %11 = vector.broadcast %10 : vector<1x64xf32> to vector<32x64xf32>
    %12 = arith.mulf %11, %7 : vector<32x64xf32>
    %13 = arith.select %9, %7, %12 : vector<32x64xi1>, vector<32x64xf32>
    %c0_7 = arith.constant 0 : index
    %c0_8 = arith.constant 0 : index
    %14 = vector.load %arg5[%c0_7, %c0_8] : memref<32x64xf32, #tpu.memory_space<vmem>>, vector<32x64xf32>
    tpu.vector_store %arg5[%c0_7, %c0_8], %13 {strides = array<i32>} : memref<32x64xf32, #tpu.memory_space<vmem>>, vector<32x64xf32>,
    return
  }
  func.func @transform_0(%arg0: i32) -> (i32, i32) {
    %c0_i32 = arith.constant 0 : i32
    %c0_i32_0 = arith.constant 0 : i32
    return %arg0, %c0_i32 : i32, i32
  }
  func.func @transform_1(%arg0: i32) -> (i32, i32) {
    %c0_i32 = arith.constant 0 : i32
    %c0_i32_0 = arith.constant 0 : i32
    %c0_i32_1 = arith.constant 0 : i32
    return %c0_i32, %c0_i32_0 : i32, i32
  }
  func.func @transform_2(%arg0: i32) -> (i32, i32) {
    %c0_i32 = arith.constant 0 : i32
    %c0_i32_0 = arith.constant 0 : i32
    %c0_i32_1 = arith.constant 0 : i32
    return %c0_i32, %c0_i32_0 : i32, i32
  }
  func.func @transform_3(%arg0: i32) -> (i32, i32) {
    %c0_i32 = arith.constant 0 : i32
    %c0_i32_0 = arith.constant 0 : i32
    %c0_i32_1 = arith.constant 0 : i32
    return %c0_i32, %c0_i32_0 : i32, i32
  }
  func.func @transform_4(%arg0: i32) -> (i32, i32) {
    %c0_i32 = arith.constant 0 : i32
    %c0_i32_0 = arith.constant 0 : i32
    return %arg0, %c0_i32 : i32, i32
  }
}

</mosaic_0001>

<llo_original>
// kernel: tile.48
$region0: #{tile.48}
  #allocation0 [shape = 's32[1]{0}', space=sflag, size = 0x4, scoped, tag = 'scoped memory for tile.48']
  %s0 = inlined_call_operand.vmem [shape: f32[4], index: 0, kind: input, shape index: {}]
  %s1 = inlined_call_operand.vmem [shape: f32[8,4], index: 1, kind: output, shape index: {}]
  // Predicated region
  $region2: #{tile.48} parent=0 // pred_check
    _
  $region3: #{tile.48} parent=0 // pred_check_branch
    %3 = sbr.rel (0) target = $region5
  $region4: #{tile.48} parent=0 // pred_region
    _
  $region5: #{tile.48} parent=0 // pred_fallthru
    _
  %v4 = vld [vmem:[%s0] ss:$0 sm:$0xff]
  %5 = vst [vmem:[%s1] sm:$0xff] %v4

// kernel: tile.49
$region0: #{tile.49}
  %s0 = inlined_call_operand.vmem [shape: f32[8,4], index: 0, kind: input, shape index: {}]
  %s1 = inlined_call_operand.vmem [shape: f32[1,32], index: 1, kind: output, shape index: {}]
  $region1: #{tile.49} parent=0
    #allocation0 [shape = 'u8[4096]{0}', space=vmem, size = 0x1000, scoped, tag = 'scoped mem for output reshape']
    %v2 = vld [vmem:[%s0] sm:$0x1]
    %vm3 = vcmask 31744
    %4 = vst.msk [vmem:[#allocation0] sm:$0x1] %vm3, %v2
    %s5 = scalar_lea.vmem %s0, 7
    %v6 = vld [vmem:[%s5] sm:$0x1]
    %7 = vrot.lane.b32.xlu0 %v6, 28
    %v8 = vpop.permute.xlu0 %7
    %vm9 = vcmask 261344
    %10 = vst.msk [vmem:[#allocation0] sm:$0x1] %vm9, %v8
    %s11 = scalar_lea.vmem %s0, 6
    %v12 = vld [vmem:[%s11] sm:$0x1]
    %13 = vrot.lane.b32.xlu0 %v12, 24
    %v14 = vpop.permute.xlu0 %13
    %vm15 = vcmask 228544
    %16 = vst.msk [vmem:[#allocation0] sm:$0x1] %vm15, %v14
    %s17 = scalar_lea.vmem %s0, 5
    %v18 = vld [vmem:[%s17] sm:$0x1]
    %19 = vrot.lane.b32.xlu0 %v18, 20
    %v20 = vpop.permute.xlu0 %19
    %vm21 = vcmask 195744
    %22 = vst.msk [vmem:[#allocation0] sm:$0x1] %vm21, %v20
    %s23 = scalar_lea.vmem %s0, 4
    %v24 = vld [vmem:[%s23] sm:$0x1]
    %25 = vrot.lane.b32.xlu0 %v24, 16
    %v26 = vpop.permute.xlu0 %25
    %vm27 = vcmask 162944
    %28 = vst.msk [vmem:[#allocation0] sm:$0x1] %vm27, %v26
    %s29 = scalar_lea.vmem %s0, 3
    %v30 = vld [vmem:[%s29] sm:$0x1]
    %31 = vrot.lane.b32.xlu0 %v30, 12
    %v32 = vpop.permute.xlu0 %31
    %vm33 = vcmask 130144
    %34 = vst.msk [vmem:[#allocation0] sm:$0x1] %vm33, %v32
    %s35 = scalar_lea.vmem %s0, 2
    %v36 = vld [vmem:[%s35] sm:$0x1]
    %37 = vrot.lane.b32.xlu0 %v36, 8
    %v38 = vpop.permute.xlu0 %37
    %vm39 = vcmask 97344
    %40 = vst.msk [vmem:[#allocation0] sm:$0x1] %vm39, %v38
    %s41 = scalar_lea.vmem %s0, 1
    %v42 = vld [vmem:[%s41] sm:$0x1]
    %43 = vrot.lane.b32.xlu0 %v42, 4
    %v44 = vpop.permute.xlu0 %43
    %vm45 = vcmask 64544
    %46 = vst.msk [vmem:[#allocation0] sm:$0x1] %vm45, %v44
    %s48 = sshll.u32 1, 1
    %s49 = ssub.s32 %s48, 1
    %v51 = vld [vmem:[#allocation0] sm:%s49]
    %s52 = sshll.u32 1, 1
    %s53 = ssub.s32 %s52, 1
    %54 = vst [vmem:[%s1] sm:%s53] %v51

// kernel: octconv_forward.7
$region0: #{octconv_forward.7}
  #allocation0 [shape = 'u32[]', space=smem, size = 0x4, offset = 0x4, fixed_abs, tag = 'smem constant byte address 0x4 - core index']
  #allocation1 [shape = 'u32[144,128]{1,0:T(1,128)}', space=vmem, size = 0x12000, scoped, tag = 'internal scratch']
  %s0 = inlined_call_operand.vmem [shape: bf16[16,32], index: 0, kind: input, shape index: {}]
  %s1 = inlined_call_operand.vmem [shape: f32[1,32], index: 1, kind: input, shape index: {}]
  %s2 = inlined_call_operand.vmem [shape: f32[1,32], index: 2, kind: input, shape index: {}]
  %s3 = inlined_call_operand.vmem [shape: f32[1,32], index: 3, kind: input, shape index: {}]
  %s4 = inlined_call_operand.vmem [shape: f32[16,32], index: 4, kind: output, shape index: {}]
  %s5 = sld [smem:[#allocation0]]
  $region26: #{octconv_forward.7} parent=0
    _
  %s7 = ssub.s32 1, %s5
  %s8 = scalar_select 0, %s7, %s5
  // Predicated region
  $region2: #{octconv_forward.7} parent=0 // pred_check
    _
  $region3: #{octconv_forward.7} parent=0 // pred_check_branch
    %10 = sbr.rel (0) target = $region5
  $region4: #{octconv_forward.7} parent=0 // pred_region
    _
  $region5: #{octconv_forward.7} parent=0 // pred_fallthru
    _
  // Predicated region
  $region6: #{octconv_forward.7} parent=0 // pred_check
    _
  $region7: #{octconv_forward.7} parent=0 // pred_check_branch
    %12 = sbr.rel (0) target = $region9
  $region8: #{octconv_forward.7} parent=0 // pred_region
    _
  $region9: #{octconv_forward.7} parent=0 // pred_fallthru
    _
  // Predicated region
  $region10: #{octconv_forward.7} parent=0 // pred_check
    _
  $region11: #{octconv_forward.7} parent=0 // pred_check_branch
    %14 = sbr.rel (0) target = $region13
  $region12: #{octconv_forward.7} parent=0 // pred_region
    _
  $region13: #{octconv_forward.7} parent=0 // pred_fallthru
    _
  // Predicated region
  $region14: #{octconv_forward.7} parent=0 // pred_check
    _
  $region15: #{octconv_forward.7} parent=0 // pred_check_branch
    %16 = sbr.rel (0) target = $region17
  $region16: #{octconv_forward.7} parent=0 // pred_region
    _
  $region17: #{octconv_forward.7} parent=0 // pred_fallthru
    _
  %v17 = vld [vmem:[%s0] sm:$0xf]
  %v18 = vld [vmem:[%s0 + $0x4] sm:$0xf]
  %v19 = vunpack.c.l.bf16 %v17
  %v20 = vunpack.c.l.bf16 %v18
  %v21 = vld [vmem:[%s1] sm:$0x1]
  %v23 = vlaneseq
  %v24 = vshrl.u32 %v23, 7
  %v25 = vsub.s32 0, %v24
  %v26 = vrot.slane %v21, %v25
  %v28 = vmul.f32 %v19, %v26
  %v29 = vmul.f32 %v20, %v26
  %v30 = vld [vmem:[%s2] sm:$0x1]
  %v32 = vlaneseq
  %v33 = vshrl.u32 %v32, 7
  %v34 = vsub.s32 0, %v33
  %v35 = vrot.slane %v30, %v34
  %v37 = vadd.f32 %v28, %v35
  %v38 = vadd.f32 %v29, %v35
  %vm39 = vcmp.ge.f32.partialorder %v37, 0.0
  %vm40 = vcmp.ge.f32.partialorder %v38, 0.0
  %v41 = vld [vmem:[%s3] sm:$0x1]
  %v43 = vlaneseq
  %v44 = vshrl.u32 %v43, 7
  %v45 = vsub.s32 0, %v44
  %v46 = vrot.slane %v41, %v45
  %v48 = vmul.f32 %v46, %v37
  %v49 = vmul.f32 %v46, %v38
  %v50 = vsel %vm39, %v37, %v48
  %v51 = vsel %vm40, %v38, %v49
  %vm52 = vcmask 261120
  %53 = vst.msk [vmem:[%s4] sm:$0xff] %vm52, %v50
  %54 = vst.msk [vmem:[%s4 + $0x8] sm:$0xff] %vm52, %v51
  // Predicated region
  $region18: #{octconv_forward.7} parent=0 // pred_check
    _
  $region19: #{octconv_forward.7} parent=0 // pred_check_branch
    %56 = sbr.rel (0) target = $region21
  $region20: #{octconv_forward.7} parent=0 // pred_region
    _
  $region21: #{octconv_forward.7} parent=0 // pred_fallthru
    _
  // Predicated region
  $region22: #{octconv_forward.7} parent=0 // pred_check
    _
  $region23: #{octconv_forward.7} parent=0 // pred_check_branch
    %58 = sbr.rel (0) target = $region25
  $region24: #{octconv_forward.7} parent=0 // pred_region
    _
  $region25: #{octconv_forward.7} parent=0 // pred_fallthru
    _

// kernel: octconv_forward.4
$region0: #{octconv_forward.4}
  #allocation0 [shape = 'u32[]', space=smem, size = 0x4, offset = 0x4, fixed_abs, tag = 'smem constant byte address 0x4 - core index']
  #allocation1 [shape = 'u32[144,128]{1,0:T(1,128)}', space=vmem, size = 0x12000, scoped, tag = 'internal scratch']
  #allocation2 [shape = 'bf16[64,72]{1,0:T(8,128)(2,1)}', space=vmem, size = 0x4000, scoped, tag = 'scratch operand']
  %s0 = inlined_call_operand.vmem [shape: bf16[2,10,10,8], index: 0, kind: input, shape index: {}]
  %s1 = inlined_call_operand.vmem [shape: bf16[72,8], index: 1, kind: input, shape index: {}]
  %s2 = inlined_call_operand.vmem [shape: bf16[2,8,8,8], index: 2, kind: output, shape index: {}]
  %s3 = sld [smem:[#allocation0]]
  $region41: #{octconv_forward.4} parent=0
    _
  %s5 = ssub.s32 1, %s3
  %s6 = scalar_select 0, %s5, %s3
  loop: start=0, step=1, limit=4
  $region2: #{octconv_forward.4} parent=0 // loop_pre_header
    _
  $region3: #{octconv_forward.4} parent=0 // loop_header
    %s8 = sphi 0, %s12
    %p9 = scmp.ge.s32.totalorder %s8, 4
    %s15 = sphi 0, %s27
    %s16 = sphi 0, %s23
    %s17 = sphi 0, %s15
    %s18 = sphi 0, %s16
    %s19 = sphi 0, %s17
    %s20 = sphi 0, %s18
    %s30 = sphi 0, %s32
    %s33 = sphi 0, %s30
    %s34 = sphi 0, %s33
    %s50 = sphi 0, %s34
    %s54 = sphi 0, %s54
    %s56 = sphi 0, %s54
    %s57 = sphi 0, %s56
    %s71 = sphi 0, %s57
    %s79 = sphi 0, %s81
    %s82 = sphi 0, %s79
    %s83 = sphi 0, %s82
    %s99 = sphi 0, %s83
  $region4: #{octconv_forward.4} parent=0 // loop_header_branch
    %11 = sbr.rel (%p9) target = $region8
  $region5: #{octconv_forward.4} parent=0 // loop_body
    %s13 = ssub.s32 %s8, 1
    %s14 = ssub.s32 %s8, 2
    %s21 = sadd.s32 1, %s16
    %p22 = scmp.ge.s32.totalorder %s21, 1
    %s23 = scalar_select %p22, 0, %s21
    %s24 = sadd.s32 1, %s15
    %s25 = scalar_select %p22, %s24, %s15
    %p26 = scmp.ge.s32.totalorder %s25, 2
    %s27 = scalar_select %p26, 0, %s25
    %s28 = ssub.s32 %s15, %s27
    %p29 = scmp.eq.s32.totalorder %s28, 0
    %s31 = sadd.s32 %s30, 1
    %s32 = scalar_select %p29, %s30, %s31
    %p35 = pneg %p29
    %p36 = scmp.eq.s32.totalorder %s8, 1
    %p37 = por %p35, %p36
    %p38 = scmp.ne.s32.totalorder %s30, %s33
    %p39 = scmp.eq.s32.totalorder %s8, 0
    %p40 = por %p38, %p39
    %p41 = scmp.ne.s32.totalorder %s30, %s33
    %p42 = scmp.eq.s32.totalorder %s13, 1
    %p43 = por %p41, %p42
    %p44 = scmp.ne.s32.totalorder %s33, %s34
    %p45 = scmp.eq.s32.totalorder %s13, 0
    %p46 = por %p44, %p45
    %p47 = scmp.ne.s32.totalorder %s33, %s34
    %p48 = scmp.eq.s32.totalorder %s14, 1
    %p49 = por %p47, %p48
    %p51 = scmp.ne.s32.totalorder %s34, %s50
    %p52 = scmp.eq.s32.totalorder %s14, 0
    %p53 = por %p51, %p52
    %s55 = sadd.s32 %s54, 1
    %p58 = scmp.eq.s32.totalorder %s8, 1
    %p59 = scmp.ne.s32.totalorder %s54, %s56
    %p60 = scmp.eq.s32.totalorder %s8, 0
    %p61 = por %p59, %p60
    %p62 = scmp.ne.s32.totalorder %s54, %s56
    %p63 = scmp.eq.s32.totalorder %s13, 1
    %p64 = por %p62, %p63
    %p65 = scmp.ne.s32.totalorder %s56, %s57
    %p66 = scmp.eq.s32.totalorder %s13, 0
    %p67 = por %p65, %p66
    %p68 = scmp.ne.s32.totalorder %s56, %s57
    %p69 = scmp.eq.s32.totalorder %s14, 1
    %p70 = por %p68, %p69
    %p72 = scmp.ne.s32.totalorder %s57, %s71
    %p73 = scmp.eq.s32.totalorder %s14, 0
    %p74 = por %p72, %p73
    %s75 = ssub.s32 %s15, %s27
    %s76 = ssub.s32 %s16, %s23
    %s77 = sor.u32 %s75, %s76
    %p78 = scmp.eq.s32.totalorder %s77, 0
    %s80 = sadd.s32 %s79, 1
    %s81 = scalar_select %p78, %s79, %s80
    %p84 = pneg %p78
    %p85 = scmp.eq.s32.totalorder %s8, 1
    %p86 = por %p84, %p85
    %p87 = scmp.ne.s32.totalorder %s79, %s82
    %p88 = scmp.eq.s32.totalorder %s8, 0
    %p89 = por %p87, %p88
    %p90 = scmp.ne.s32.totalorder %s79, %s82
    %p91 = scmp.eq.s32.totalorder %s13, 1
    %p92 = por %p90, %p91
    %p93 = scmp.ne.s32.totalorder %s82, %s83
    %p94 = scmp.eq.s32.totalorder %s13, 0
    %p95 = por %p93, %p94
    %p96 = scmp.ne.s32.totalorder %s82, %s83
    %p97 = scmp.eq.s32.totalorder %s14, 1
    %p98 = por %p96, %p97
    %p100 = scmp.ne.s32.totalorder %s83, %s99
    %p101 = scmp.eq.s32.totalorder %s14, 0
    %p102 = por %p100, %p101
    %p103 = scmp.le.s32.totalorder 1, %s8
    %p104 = scmp.lt.s32.totalorder %s8, 3
    %p105 = pnand %p103, %p104
    %p106 = pneg %p105
    // Predicated region
    $region9: #{octconv_forward.4} parent=5 // pred_check
      _
    $region10: #{octconv_forward.4} parent=5 // pred_check_branch
      %108 = sbr.rel (%p105) target = $region12
    $region11: #{octconv_forward.4} parent=5 // pred_region
      %s109 = ssub.s32 %s8, 1
      // Predicated region
      $region13: #{octconv_forward.4} parent=11 // pred_check
        %p110 = pneg %p67
      $region14: #{octconv_forward.4} parent=11 // pred_check_branch
        %112 = sbr.rel (%p110) target = $region16
      $region15: #{octconv_forward.4} parent=11 // pred_region
        _
      $region16: #{octconv_forward.4} parent=11 // pred_fallthru
        _
    $region12: #{octconv_forward.4} parent=5 // pred_fallthru
      _
    %p113 = scmp.lt.s32.totalorder %s8, 2
    // Predicated region
    $region17: #{octconv_forward.4} parent=5 // pred_check
      %p114 = pneg %p113
    $region18: #{octconv_forward.4} parent=5 // pred_check_branch
      %116 = sbr.rel (%p114) target = $region20
    $region19: #{octconv_forward.4} parent=5 // pred_region
      // Predicated region
      $region21: #{octconv_forward.4} parent=19 // pred_check
        %p117 = pneg %p40
      $region22: #{octconv_forward.4} parent=19 // pred_check_branch
        %119 = sbr.rel (%p117) target = $region24
      $region23: #{octconv_forward.4} parent=19 // pred_region
        %p120 = scmp.lt.s32.totalorder %s15, 1
        %s121 = scalar_select %p120, %s15, 1
        %s122 = smul.addr %s121, 20
        %s123 = smul.addr %s122, 4
        %s124 = scalar_lea.vmem %s0, %s123
      $region24: #{octconv_forward.4} parent=19 // pred_fallthru
        _
    $region20: #{octconv_forward.4} parent=5 // pred_fallthru
      _
    %p125 = scmp.le.s32.totalorder 1, %s8
    %p126 = scmp.lt.s32.totalorder %s8, 3
    %p127 = pnand %p125, %p126
    %p128 = pneg %p127
    // Predicated region
    $region25: #{octconv_forward.4} parent=5 // pred_check
      _
    $region26: #{octconv_forward.4} parent=5 // pred_check_branch
      %130 = sbr.rel (%p127) target = $region28
    $region27: #{octconv_forward.4} parent=5 // pred_region
      %s131 = ssub.s32 %s8, 1
      %p132 = scmp.lt.s32.totalorder %s17, 1
      %s133 = scalar_select %p132, %s17, 1
      %s134 = smul.addr %s133, 20
      %s135 = smul.addr %s134, 4
      %s136 = scalar_lea.vmem %s0, %s135
      %p137 = pneg %p46
      %p138 = pneg %p43
      %p139 = pneg %p67
      %p140 = pneg %p64
      %p141 = pneg %p95
      %p142 = pneg %p92
      %s143 = smul.u32 8, %s18
      %p144 = scmp.lt.s32.totalorder %s17, 1
      %s145 = scalar_select %p144, %s17, 1
      %p146 = scmp.lt.s32.totalorder %s143, 7
      %s147 = scalar_select %p146, %s143, 7
      %s148 = smul.addr %s145, 8
      %s149 = sadd.s32 %s147, %s148
      %s150 = smul.addr %s149, 4
      %s151 = scalar_lea.vmem %s2, %s150
      %p152 = scmp.lt.s32.totalorder %s17, 1
      %s153 = scalar_select %p152, %s17, 1
      %s154 = smul.addr %s153, 20
      %s155 = smul.addr %s154, 4
      %s156 = scalar_lea.vmem %s0, %s155
      %s157 = smul.u32 8, %s18
      %p158 = scmp.lt.s32.totalorder %s17, 1
      %s159 = scalar_select %p158, %s17, 1
      %p160 = scmp.lt.s32.totalorder %s157, 7
      %s161 = scalar_select %p160, %s157, 7
      %s162 = smul.addr %s159, 8
      %s163 = sadd.s32 %s161, %s162
      %s164 = smul.addr %s163, 4
      %s165 = scalar_lea.vmem %s2, %s164
      %s166 = smul.u32 8, %s18
      %s168 = smul.u32 %s18, 8
      %s169 = smul.u32 %s168, 2
      %s170 = smul.addr %s169, 4
      %s171 = scalar_lea.vmem %s156, %s170
      %v172 = vld [vmem:[%s171] sm:$0xf]
      %v173 = vld [vmem:[%s171 + $0x4] sm:$0x1]
      %v174 = vld [vmem:[%s171 + $0x8] sm:$0xf]
      %v175 = vld [vmem:[%s171 + $0xc] sm:$0x1]
      %v176 = vld [vmem:[%s171 + $0x10] sm:$0xf]
      %v177 = vld [vmem:[%s171 + $0x14] sm:$0x1]
      %v178 = vld [vmem:[%s171 + $0x18] sm:$0xf]
      %v179 = vld [vmem:[%s171 + $0x1c] sm:$0x1]
      %v180 = vld [vmem:[%s171 + $0x20] sm:$0xf]
      %v181 = vld [vmem:[%s171 + $0x24] sm:$0x1]
      %v182 = vld [vmem:[%s171 + $0x28] sm:$0xf]
      %v183 = vld [vmem:[%s171 + $0x2c] sm:$0x1]
      %v184 = vld [vmem:[%s171 + $0x30] sm:$0xf]
      %v185 = vld [vmem:[%s171 + $0x34] sm:$0x1]
      %v186 = vld [vmem:[%s171 + $0x38] sm:$0xf]
      %v187 = vld [vmem:[%s171 + $0x3c] sm:$0x1]
      %v188 = vunpack.c.l.bf16 %v172
      %v189 = vunpack.c.l.bf16 %v173
      %v190 = vunpack.c.l.bf16 %v174
      %v191 = vunpack.c.l.bf16 %v175
      %v192 = vunpack.c.l.bf16 %v176
      %v193 = vunpack.c.l.bf16 %v177
      %v194 = vunpack.c.l.bf16 %v178
      %v195 = vunpack.c.l.bf16 %v179
      %v196 = vunpack.c.l.bf16 %v180
      %v197 = vunpack.c.l.bf16 %v181
      %v198 = vunpack.c.l.bf16 %v182
      %v199 = vunpack.c.l.bf16 %v183
      %v200 = vunpack.c.l.bf16 %v184
      %v201 = vunpack.c.l.bf16 %v185
      %v202 = vunpack.c.l.bf16 %v186
      %v203 = vunpack.c.l.bf16 %v187
      %v204 = vpack.c.bf16 %v190, %v188
      %v205 = vpack.c.bf16 %v194, %v192
      %v206 = vpack.c.bf16 %v198, %v196
      %v207 = vpack.c.bf16 %v202, %v200
      %v212 = vunpack.c.l.b16 %v204
      %v213 = vunpack.c.h.b16 %v204
      %v214 = vunpack.c.l.b16 %v205
      %v215 = vunpack.c.h.b16 %v205
      %v216 = vunpack.c.l.b16 %v206
      %v217 = vunpack.c.h.b16 %v206
      %v218 = vunpack.c.l.b16 %v207
      %v219 = vunpack.c.h.b16 %v207
      %v220 = vpack.c.b16 %v212, %v212
      %v221 = vpack.c.b16 %v213, %v213
      %v222 = vpack.c.b16 %v214, %v214
      %v223 = vpack.c.b16 %v215, %v215
      %v224 = vpack.c.b16 %v216, %v216
      %v225 = vpack.c.b16 %v217, %v217
      %v226 = vpack.c.b16 %v218, %v218
      %v227 = vpack.c.b16 %v219, %v219
      %vm236 = vcmask 60416
      %237 = vst.msk [vmem:[#allocation2] sm:$0xf] %vm236, %v220
      %238 = vst.msk [vmem:[#allocation2 + $0x4] sm:$0xf] %vm236, %v221
      %239 = vst.msk [vmem:[#allocation2 + $0x8] sm:$0xf] %vm236, %v222
      %240 = vst.msk [vmem:[#allocation2 + $0xc] sm:$0xf] %vm236, %v223
      %241 = vst.msk [vmem:[#allocation2 + $0x10] sm:$0xf] %vm236, %v224
      %242 = vst.msk [vmem:[#allocation2 + $0x14] sm:$0xf] %vm236, %v225
      %243 = vst.msk [vmem:[#allocation2 + $0x18] sm:$0xf] %vm236, %v226
      %244 = vst.msk [vmem:[#allocation2 + $0x1c] sm:$0xf] %vm236, %v227
      %vm261 = vcmask 1046528
      %v262 = vrot.slane %v188, 1
      %v263 = vrot.slane %v189, 1
      %v264 = vsel %vm261, %v262, %v263
      %v265 = vrot.slane %v190, 1
      %v266 = vrot.slane %v191, 1
      %v267 = vsel %vm261, %v265, %v266
      %v268 = vrot.slane %v192, 1
      %v269 = vrot.slane %v193, 1
      %v270 = vsel %vm261, %v268, %v269
      %v271 = vrot.slane %v194, 1
      %v272 = vrot.slane %v195, 1
      %v273 = vsel %vm261, %v271, %v272
      %v274 = vrot.slane %v196, 1
      %v275 = vrot.slane %v197, 1
      %v276 = vsel %vm261, %v274, %v275
      %v277 = vrot.slane %v198, 1
      %v278 = vrot.slane %v199, 1
      %v279 = vsel %vm261, %v277, %v278
      %v280 = vrot.slane %v200, 1
      %v281 = vrot.slane %v201, 1
      %v282 = vsel %vm261, %v280, %v281
      %v283 = vrot.slane %v202, 1
      %v284 = vrot.slane %v203, 1
      %v285 = vsel %vm261, %v283, %v284
      %v294 = vpack.c.bf16 %v267, %v264
      %v295 = vpack.c.bf16 %v273, %v270
      %v296 = vpack.c.bf16 %v279, %v276
      %v297 = vpack.c.bf16 %v285, %v282
      %v302 = vunpack.c.l.b16 %v294
      %v303 = vunpack.c.h.b16 %v294
      %v304 = vunpack.c.l.b16 %v295
      %v305 = vunpack.c.h.b16 %v295
      %v306 = vunpack.c.l.b16 %v296
      %v307 = vunpack.c.h.b16 %v296
      %v308 = vunpack.c.l.b16 %v297
      %v309 = vunpack.c.h.b16 %v297
      %v310 = vpack.c.b16 %v302, %v302
      %v311 = vpack.c.b16 %v303, %v303
      %v312 = vpack.c.b16 %v304, %v304
      %v313 = vpack.c.b16 %v305, %v305
      %v314 = vpack.c.b16 %v306, %v306
      %v315 = vpack.c.b16 %v307, %v307
      %v316 = vpack.c.b16 %v308, %v308
      %v317 = vpack.c.b16 %v309, %v309
      %318 = vrot.lane.b32.xlu0 %v310, 8
      %v319 = vpop.permute.xlu0 %318
      %320 = vrot.lane.b32.xlu0 %v311, 8
      %v321 = vpop.permute.xlu0 %320
      %322 = vrot.lane.b32.xlu0 %v312, 8
      %v323 = vpop.permute.xlu0 %322
      %324 = vrot.lane.b32.xlu0 %v313, 8
      %v325 = vpop.permute.xlu0 %324
      %326 = vrot.lane.b32.xlu0 %v314, 8
      %v327 = vpop.permute.xlu0 %326
      %328 = vrot.lane.b32.xlu0 %v315, 8
      %v329 = vpop.permute.xlu0 %328
      %330 = vrot.lane.b32.xlu0 %v316, 8
      %v331 = vpop.permute.xlu0 %330
      %332 = vrot.lane.b32.xlu0 %v317, 8
      %v333 = vpop.permute.xlu0 %332
      %vm342 = vcmask 126016
      %343 = vst.msk [vmem:[#allocation2] sm:$0xf] %vm342, %v319
      %344 = vst.msk [vmem:[#allocation2 + $0x4] sm:$0xf] %vm342, %v321
      %345 = vst.msk [vmem:[#allocation2 + $0x8] sm:$0xf] %vm342, %v323
      %346 = vst.msk [vmem:[#allocation2 + $0xc] sm:$0xf] %vm342, %v325
      %347 = vst.msk [vmem:[#allocation2 + $0x10] sm:$0xf] %vm342, %v327
      %348 = vst.msk [vmem:[#allocation2 + $0x14] sm:$0xf] %vm342, %v329
      %349 = vst.msk [vmem:[#allocation2 + $0x18] sm:$0xf] %vm342, %v331
      %350 = vst.msk [vmem:[#allocation2 + $0x1c] sm:$0xf] %vm342, %v333
      %vm351 = vcmask 1045504
      %v352 = vrot.slane %v188, 2
      %v353 = vrot.slane %v189, 2
      %v354 = vsel %vm351, %v352, %v353
      %v355 = vrot.slane %v190, 2
      %v356 = vrot.slane %v191, 2
      %v357 = vsel %vm351, %v355, %v356
      %v358 = vrot.slane %v192, 2
      %v359 = vrot.slane %v193, 2
      %v360 = vsel %vm351, %v358, %v359
      %v361 = vrot.slane %v194, 2
      %v362 = vrot.slane %v195, 2
      %v363 = vsel %vm351, %v361, %v362
      %v364 = vrot.slane %v196, 2
      %v365 = vrot.slane %v197, 2
      %v366 = vsel %vm351, %v364, %v365
      %v367 = vrot.slane %v198, 2
      %v368 = vrot.slane %v199, 2
      %v369 = vsel %vm351, %v367, %v368
      %v370 = vrot.slane %v200, 2
      %v371 = vrot.slane %v201, 2
      %v372 = vsel %vm351, %v370, %v371
      %v373 = vrot.slane %v202, 2
      %v374 = vrot.slane %v203, 2
      %v375 = vsel %vm351, %v373, %v374
      %v384 = vpack.c.bf16 %v357, %v354
      %v385 = vpack.c.bf16 %v363, %v360
      %v386 = vpack.c.bf16 %v369, %v366
      %v387 = vpack.c.bf16 %v375, %v372
      %v392 = vunpack.c.l.b16 %v384
      %v393 = vunpack.c.h.b16 %v384
      %v394 = vunpack.c.l.b16 %v385
      %v395 = vunpack.c.h.b16 %v385
      %v396 = vunpack.c.l.b16 %v386
      %v397 = vunpack.c.h.b16 %v386
      %v398 = vunpack.c.l.b16 %v387
      %v399 = vunpack.c.h.b16 %v387
      %v400 = vpack.c.b16 %v392, %v392
      %v401 = vpack.c.b16 %v393, %v393
      %v402 = vpack.c.b16 %v394, %v394
      %v403 = vpack.c.b16 %v395, %v395
      %v404 = vpack.c.b16 %v396, %v396
      %v405 = vpack.c.b16 %v397, %v397
      %v406 = vpack.c.b16 %v398, %v398
      %v407 = vpack.c.b16 %v399, %v399
      %408 = vrot.lane.b32.xlu0 %v400, 16
      %v409 = vpop.permute.xlu0 %408
      %410 = vrot.lane.b32.xlu0 %v401, 16
      %v411 = vpop.permute.xlu0 %410
      %412 = vrot.lane.b32.xlu0 %v402, 16
      %v413 = vpop.permute.xlu0 %412
      %414 = vrot.lane.b32.xlu0 %v403, 16
      %v415 = vpop.permute.xlu0 %414
      %416 = vrot.lane.b32.xlu0 %v404, 16
      %v417 = vpop.permute.xlu0 %416
      %418 = vrot.lane.b32.xlu0 %v405, 16
      %v419 = vpop.permute.xlu0 %418
      %420 = vrot.lane.b32.xlu0 %v406, 16
      %v421 = vpop.permute.xlu0 %420
      %422 = vrot.lane.b32.xlu0 %v407, 16
      %v423 = vpop.permute.xlu0 %422
      %vm432 = vcmask 191616
      %433 = vst.msk [vmem:[#allocation2] sm:$0xf] %vm432, %v409
      %434 = vst.msk [vmem:[#allocation2 + $0x4] sm:$0xf] %vm432, %v411
      %435 = vst.msk [vmem:[#allocation2 + $0x8] sm:$0xf] %vm432, %v413
      %436 = vst.msk [vmem:[#allocation2 + $0xc] sm:$0xf] %vm432, %v415
      %437 = vst.msk [vmem:[#allocation2 + $0x10] sm:$0xf] %vm432, %v417
      %438 = vst.msk [vmem:[#allocation2 + $0x14] sm:$0xf] %vm432, %v419
      %439 = vst.msk [vmem:[#allocation2 + $0x18] sm:$0xf] %vm432, %v421
      %440 = vst.msk [vmem:[#allocation2 + $0x1c] sm:$0xf] %vm432, %v423
      %s441 = sadd.s32 %s168, 1
      %s442 = smul.u32 %s441, 2
      %s443 = smul.addr %s442, 4
      %s444 = scalar_lea.vmem %s156, %s443
      %v445 = vld [vmem:[%s444] sm:$0xf]
      %v446 = vld [vmem:[%s444 + $0x4] sm:$0x1]
      %v447 = vld [vmem:[%s444 + $0x8] sm:$0xf]
      %v448 = vld [vmem:[%s444 + $0xc] sm:$0x1]
      %v449 = vld [vmem:[%s444 + $0x10] sm:$0xf]
      %v450 = vld [vmem:[%s444 + $0x14] sm:$0x1]
      %v451 = vld [vmem:[%s444 + $0x18] sm:$0xf]
      %v452 = vld [vmem:[%s444 + $0x1c] sm:$0x1]
      %v453 = vld [vmem:[%s444 + $0x20] sm:$0xf]
      %v454 = vld [vmem:[%s444 + $0x24] sm:$0x1]
      %v455 = vld [vmem:[%s444 + $0x28] sm:$0xf]
      %v456 = vld [vmem:[%s444 + $0x2c] sm:$0x1]
      %v457 = vld [vmem:[%s444 + $0x30] sm:$0xf]
      %v458 = vld [vmem:[%s444 + $0x34] sm:$0x1]
      %v459 = vld [vmem:[%s444 + $0x38] sm:$0xf]
      %v460 = vld [vmem:[%s444 + $0x3c] sm:$0x1]
      %v461 = vunpack.c.l.bf16 %v445
      %v462 = vunpack.c.l.bf16 %v446
      %v463 = vunpack.c.l.bf16 %v447
      %v464 = vunpack.c.l.bf16 %v448
      %v465 = vunpack.c.l.bf16 %v449
      %v466 = vunpack.c.l.bf16 %v450
      %v467 = vunpack.c.l.bf16 %v451
      %v468 = vunpack.c.l.bf16 %v452
      %v469 = vunpack.c.l.bf16 %v453
      %v470 = vunpack.c.l.bf16 %v454
      %v471 = vunpack.c.l.bf16 %v455
      %v472 = vunpack.c.l.bf16 %v456
      %v473 = vunpack.c.l.bf16 %v457
      %v474 = vunpack.c.l.bf16 %v458
      %v475 = vunpack.c.l.bf16 %v459
      %v476 = vunpack.c.l.bf16 %v460
      %v477 = vpack.c.bf16 %v463, %v461
      %v478 = vpack.c.bf16 %v467, %v465
      %v479 = vpack.c.bf16 %v471, %v469
      %v480 = vpack.c.bf16 %v475, %v473
      %v485 = vunpack.c.l.b16 %v477
      %v486 = vunpack.c.h.b16 %v477
      %v487 = vunpack.c.l.b16 %v478
      %v488 = vunpack.c.h.b16 %v478
      %v489 = vunpack.c.l.b16 %v479
      %v490 = vunpack.c.h.b16 %v479
      %v491 = vunpack.c.l.b16 %v480
      %v492 = vunpack.c.h.b16 %v480
      %v493 = vpack.c.b16 %v485, %v485
      %v494 = vpack.c.b16 %v486, %v486
      %v495 = vpack.c.b16 %v487, %v487
      %v496 = vpack.c.b16 %v488, %v488
      %v497 = vpack.c.b16 %v489, %v489
      %v498 = vpack.c.b16 %v490, %v490
      %v499 = vpack.c.b16 %v491, %v491
      %v500 = vpack.c.b16 %v492, %v492
      %501 = vrot.lane.b32.xlu0 %v493, 24
      %v502 = vpop.permute.xlu0 %501
      %503 = vrot.lane.b32.xlu0 %v494, 24
      %v504 = vpop.permute.xlu0 %503
      %505 = vrot.lane.b32.xlu0 %v495, 24
      %v506 = vpop.permute.xlu0 %505
      %507 = vrot.lane.b32.xlu0 %v496, 24
      %v508 = vpop.permute.xlu0 %507
      %509 = vrot.lane.b32.xlu0 %v497, 24
      %v510 = vpop.permute.xlu0 %509
      %511 = vrot.lane.b32.xlu0 %v498, 24
      %v512 = vpop.permute.xlu0 %511
      %513 = vrot.lane.b32.xlu0 %v499, 24
      %v514 = vpop.permute.xlu0 %513
      %515 = vrot.lane.b32.xlu0 %v500, 24
      %v516 = vpop.permute.xlu0 %515
      %vm525 = vcmask 257216
      %526 = vst.msk [vmem:[#allocation2] sm:$0xf] %vm525, %v502
      %527 = vst.msk [vmem:[#allocation2 + $0x4] sm:$0xf] %vm525, %v504
      %528 = vst.msk [vmem:[#allocation2 + $0x8] sm:$0xf] %vm525, %v506
      %529 = vst.msk [vmem:[#allocation2 + $0xc] sm:$0xf] %vm525, %v508
      %530 = vst.msk [vmem:[#allocation2 + $0x10] sm:$0xf] %vm525, %v510
      %531 = vst.msk [vmem:[#allocation2 + $0x14] sm:$0xf] %vm525, %v512
      %532 = vst.msk [vmem:[#allocation2 + $0x18] sm:$0xf] %vm525, %v514
      %533 = vst.msk [vmem:[#allocation2 + $0x1c] sm:$0xf] %vm525, %v516
      %v550 = vrot.slane %v461, 1
      %v551 = vrot.slane %v462, 1
      %v552 = vsel %vm261, %v550, %v551
      %v553 = vrot.slane %v463, 1
      %v554 = vrot.slane %v464, 1
      %v555 = vsel %vm261, %v553, %v554
      %v556 = vrot.slane %v465, 1
      %v557 = vrot.slane %v466, 1
      %v558 = vsel %vm261, %v556, %v557
      %v559 = vrot.slane %v467, 1
      %v560 = vrot.slane %v468, 1
      %v561 = vsel %vm261, %v559, %v560
      %v562 = vrot.slane %v469, 1
      %v563 = vrot.slane %v470, 1
      %v564 = vsel %vm261, %v562, %v563
      %v565 = vrot.slane %v471, 1
      %v566 = vrot.slane %v472, 1
      %v567 = vsel %vm261, %v565, %v566
      %v568 = vrot.slane %v473, 1
      %v569 = vrot.slane %v474, 1
      %v570 = vsel %vm261, %v568, %v569
      %v571 = vrot.slane %v475, 1
      %v572 = vrot.slane %v476, 1
      %v573 = vsel %vm261, %v571, %v572
      %v582 = vpack.c.bf16 %v555, %v552
      %v583 = vpack.c.bf16 %v561, %v558
      %v584 = vpack.c.bf16 %v567, %v564
      %v585 = vpack.c.bf16 %v573, %v570
      %v590 = vunpack.c.l.b16 %v582
      %v591 = vunpack.c.h.b16 %v582
      %v592 = vunpack.c.l.b16 %v583
      %v593 = vunpack.c.h.b16 %v583
      %v594 = vunpack.c.l.b16 %v584
      %v595 = vunpack.c.h.b16 %v584
      %v596 = vunpack.c.l.b16 %v585
      %v597 = vunpack.c.h.b16 %v585
      %v598 = vpack.c.b16 %v590, %v590
      %v599 = vpack.c.b16 %v591, %v591
      %v600 = vpack.c.b16 %v592, %v592
      %v601 = vpack.c.b16 %v593, %v593
      %v602 = vpack.c.b16 %v594, %v594
      %v603 = vpack.c.b16 %v595, %v595
      %v604 = vpack.c.b16 %v596, %v596
      %v605 = vpack.c.b16 %v597, %v597
      %606 = vrot.lane.b32.xlu0 %v598, 32
      %v607 = vpop.permute.xlu0 %606
      %608 = vrot.lane.b32.xlu0 %v599, 32
      %v609 = vpop.permute.xlu0 %608
      %610 = vrot.lane.b32.xlu0 %v600, 32
      %v611 = vpop.permute.xlu0 %610
      %612 = vrot.lane.b32.xlu0 %v601, 32
      %v613 = vpop.permute.xlu0 %612
      %614 = vrot.lane.b32.xlu0 %v602, 32
      %v615 = vpop.permute.xlu0 %614
      %616 = vrot.lane.b32.xlu0 %v603, 32
      %v617 = vpop.permute.xlu0 %616
      %618 = vrot.lane.b32.xlu0 %v604, 32
      %v619 = vpop.permute.xlu0 %618
      %620 = vrot.lane.b32.xlu0 %v605, 32
      %v621 = vpop.permute.xlu0 %620
      %vm630 = vcmask 322816
      %631 = vst.msk [vmem:[#allocation2] sm:$0xf] %vm630, %v607
      %632 = vst.msk [vmem:[#allocation2 + $0x4] sm:$0xf] %vm630, %v609
      %633 = vst.msk [vmem:[#allocation2 + $0x8] sm:$0xf] %vm630, %v611
      %634 = vst.msk [vmem:[#allocation2 + $0xc] sm:$0xf] %vm630, %v613
      %635 = vst.msk [vmem:[#allocation2 + $0x10] sm:$0xf] %vm630, %v615
      %636 = vst.msk [vmem:[#allocation2 + $0x14] sm:$0xf] %vm630, %v617
      %637 = vst.msk [vmem:[#allocation2 + $0x18] sm:$0xf] %vm630, %v619
      %638 = vst.msk [vmem:[#allocation2 + $0x1c] sm:$0xf] %vm630, %v621
      %v639 = vrot.slane %v461, 2
      %v640 = vrot.slane %v462, 2
      %v641 = vsel %vm351, %v639, %v640
      %v642 = vrot.slane %v463, 2
      %v643 = vrot.slane %v464, 2
      %v644 = vsel %vm351, %v642, %v643
      %v645 = vrot.slane %v465, 2
      %v646 = vrot.slane %v466, 2
      %v647 = vsel %vm351, %v645, %v646
      %v648 = vrot.slane %v467, 2
      %v649 = vrot.slane %v468, 2
      %v650 = vsel %vm351, %v648, %v649
      %v651 = vrot.slane %v469, 2
      %v652 = vrot.slane %v470, 2
      %v653 = vsel %vm351, %v651, %v652
      %v654 = vrot.slane %v471, 2
      %v655 = vrot.slane %v472, 2
      %v656 = vsel %vm351, %v654, %v655
      %v657 = vrot.slane %v473, 2
      %v658 = vrot.slane %v474, 2
      %v659 = vsel %vm351, %v657, %v658
      %v660 = vrot.slane %v475, 2
      %v661 = vrot.slane %v476, 2
      %v662 = vsel %vm351, %v660, %v661
      %v671 = vpack.c.bf16 %v644, %v641
      %v672 = vpack.c.bf16 %v650, %v647
      %v673 = vpack.c.bf16 %v656, %v653
      %v674 = vpack.c.bf16 %v662, %v659
      %v679 = vunpack.c.l.b16 %v671
      %v680 = vunpack.c.h.b16 %v671
      %v681 = vunpack.c.l.b16 %v672
      %v682 = vunpack.c.h.b16 %v672
      %v683 = vunpack.c.l.b16 %v673
      %v684 = vunpack.c.h.b16 %v673
      %v685 = vunpack.c.l.b16 %v674
      %v686 = vunpack.c.h.b16 %v674
      %v687 = vpack.c.b16 %v679, %v679
      %v688 = vpack.c.b16 %v680, %v680
      %v689 = vpack.c.b16 %v681, %v681
      %v690 = vpack.c.b16 %v682, %v682
      %v691 = vpack.c.b16 %v683, %v683
      %v692 = vpack.c.b16 %v684, %v684
      %v693 = vpack.c.b16 %v685, %v685
      %v694 = vpack.c.b16 %v686, %v686
      %695 = vrot.lane.b32.xlu0 %v687, 40
      %v696 = vpop.permute.xlu0 %695
      %697 = vrot.lane.b32.xlu0 %v688, 40
      %v698 = vpop.permute.xlu0 %697
      %699 = vrot.lane.b32.xlu0 %v689, 40
      %v700 = vpop.permute.xlu0 %699
      %701 = vrot.lane.b32.xlu0 %v690, 40
      %v702 = vpop.permute.xlu0 %701
      %703 = vrot.lane.b32.xlu0 %v691, 40
      %v704 = vpop.permute.xlu0 %703
      %705 = vrot.lane.b32.xlu0 %v692, 40
      %v706 = vpop.permute.xlu0 %705
      %707 = vrot.lane.b32.xlu0 %v693, 40
      %v708 = vpop.permute.xlu0 %707
      %709 = vrot.lane.b32.xlu0 %v694, 40
      %v710 = vpop.permute.xlu0 %709
      %vm719 = vcmask 388416
      %720 = vst.msk [vmem:[#allocation2] sm:$0xf] %vm719, %v696
      %721 = vst.msk [vmem:[#allocation2 + $0x4] sm:$0xf] %vm719, %v698
      %722 = vst.msk [vmem:[#allocation2 + $0x8] sm:$0xf] %vm719, %v700
      %723 = vst.msk [vmem:[#allocation2 + $0xc] sm:$0xf] %vm719, %v702
      %724 = vst.msk [vmem:[#allocation2 + $0x10] sm:$0xf] %vm719, %v704
      %725 = vst.msk [vmem:[#allocation2 + $0x14] sm:$0xf] %vm719, %v706
      %726 = vst.msk [vmem:[#allocation2 + $0x18] sm:$0xf] %vm719, %v708
      %727 = vst.msk [vmem:[#allocation2 + $0x1c] sm:$0xf] %vm719, %v710
      %s728 = sadd.s32 %s168, 2
      %s729 = smul.u32 %s728, 2
      %s730 = smul.addr %s729, 4
      %s731 = scalar_lea.vmem %s156, %s730
      %v732 = vld [vmem:[%s731] sm:$0xf]
      %v733 = vld [vmem:[%s731 + $0x4] sm:$0x1]
      %v734 = vld [vmem:[%s731 + $0x8] sm:$0xf]
      %v735 = vld [vmem:[%s731 + $0xc] sm:$0x1]
      %v736 = vld [vmem:[%s731 + $0x10] sm:$0xf]
      %v737 = vld [vmem:[%s731 + $0x14] sm:$0x1]
      %v738 = vld [vmem:[%s731 + $0x18] sm:$0xf]
      %v739 = vld [vmem:[%s731 + $0x1c] sm:$0x1]
      %v740 = vld [vmem:[%s731 + $0x20] sm:$0xf]
      %v741 = vld [vmem:[%s731 + $0x24] sm:$0x1]
      %v742 = vld [vmem:[%s731 + $0x28] sm:$0xf]
      %v743 = vld [vmem:[%s731 + $0x2c] sm:$0x1]
      %v744 = vld [vmem:[%s731 + $0x30] sm:$0xf]
      %v745 = vld [vmem:[%s731 + $0x34] sm:$0x1]
      %v746 = vld [vmem:[%s731 + $0x38] sm:$0xf]
      %v747 = vld [vmem:[%s731 + $0x3c] sm:$0x1]
      %v748 = vunpack.c.l.bf16 %v732
      %v749 = vunpack.c.l.bf16 %v733
      %v750 = vunpack.c.l.bf16 %v734
      %v751 = vunpack.c.l.bf16 %v735
      %v752 = vunpack.c.l.bf16 %v736
      %v753 = vunpack.c.l.bf16 %v737
      %v754 = vunpack.c.l.bf16 %v738
      %v755 = vunpack.c.l.bf16 %v739
      %v756 = vunpack.c.l.bf16 %v740
      %v757 = vunpack.c.l.bf16 %v741
      %v758 = vunpack.c.l.bf16 %v742
      %v759 = vunpack.c.l.bf16 %v743
      %v760 = vunpack.c.l.bf16 %v744
      %v761 = vunpack.c.l.bf16 %v745
      %v762 = vunpack.c.l.bf16 %v746
      %v763 = vunpack.c.l.bf16 %v747
      %v764 = vpack.c.bf16 %v750, %v748
      %v765 = vpack.c.bf16 %v754, %v752
      %v766 = vpack.c.bf16 %v758, %v756
      %v767 = vpack.c.bf16 %v762, %v760
      %v772 = vunpack.c.l.b16 %v764
      %v773 = vunpack.c.h.b16 %v764
      %v774 = vunpack.c.l.b16 %v765
      %v775 = vunpack.c.h.b16 %v765
      %v776 = vunpack.c.l.b16 %v766
      %v777 = vunpack.c.h.b16 %v766
      %v778 = vunpack.c.l.b16 %v767
      %v779 = vunpack.c.h.b16 %v767
      %v780 = vpack.c.b16 %v772, %v772
      %v781 = vpack.c.b16 %v773, %v773
      %v782 = vpack.c.b16 %v774, %v774
      %v783 = vpack.c.b16 %v775, %v775
      %v784 = vpack.c.b16 %v776, %v776
      %v785 = vpack.c.b16 %v777, %v777
      %v786 = vpack.c.b16 %v778, %v778
      %v787 = vpack.c.b16 %v779, %v779
      %788 = vrot.lane.b32.xlu0 %v780, 48
      %v789 = vpop.permute.xlu0 %788
      %790 = vrot.lane.b32.xlu0 %v781, 48
      %v791 = vpop.permute.xlu0 %790
      %792 = vrot.lane.b32.xlu0 %v782, 48
      %v793 = vpop.permute.xlu0 %792
      %794 = vrot.lane.b32.xlu0 %v783, 48
      %v795 = vpop.permute.xlu0 %794
      %796 = vrot.lane.b32.xlu0 %v784, 48
      %v797 = vpop.permute.xlu0 %796
      %798 = vrot.lane.b32.xlu0 %v785, 48
      %v799 = vpop.permute.xlu0 %798
      %800 = vrot.lane.b32.xlu0 %v786, 48
      %v801 = vpop.permute.xlu0 %800
      %802 = vrot.lane.b32.xlu0 %v787, 48
      %v803 = vpop.permute.xlu0 %802
      %vm812 = vcmask 454016
      %813 = vst.msk [vmem:[#allocation2] sm:$0xf] %vm812, %v789
      %814 = vst.msk [vmem:[#allocation2 + $0x4] sm:$0xf] %vm812, %v791
      %815 = vst.msk [vmem:[#allocation2 + $0x8] sm:$0xf] %vm812, %v793
      %816 = vst.msk [vmem:[#allocation2 + $0xc] sm:$0xf] %vm812, %v795
      %817 = vst.msk [vmem:[#allocation2 + $0x10] sm:$0xf] %vm812, %v797
      %818 = vst.msk [vmem:[#allocation2 + $0x14] sm:$0xf] %vm812, %v799
      %819 = vst.msk [vmem:[#allocation2 + $0x18] sm:$0xf] %vm812, %v801
      %820 = vst.msk [vmem:[#allocation2 + $0x1c] sm:$0xf] %vm812, %v803
      %v837 = vrot.slane %v748, 1
      %v838 = vrot.slane %v749, 1
      %v839 = vsel %vm261, %v837, %v838
      %v840 = vrot.slane %v750, 1
      %v841 = vrot.slane %v751, 1
      %v842 = vsel %vm261, %v840, %v841
      %v843 = vrot.slane %v752, 1
      %v844 = vrot.slane %v753, 1
      %v845 = vsel %vm261, %v843, %v844
      %v846 = vrot.slane %v754, 1
      %v847 = vrot.slane %v755, 1
      %v848 = vsel %vm261, %v846, %v847
      %v849 = vrot.slane %v756, 1
      %v850 = vrot.slane %v757, 1
      %v851 = vsel %vm261, %v849, %v850
      %v852 = vrot.slane %v758, 1
      %v853 = vrot.slane %v759, 1
      %v854 = vsel %vm261, %v852, %v853
      %v855 = vrot.slane %v760, 1
      %v856 = vrot.slane %v761, 1
      %v857 = vsel %vm261, %v855, %v856
      %v858 = vrot.slane %v762, 1
      %v859 = vrot.slane %v763, 1
      %v860 = vsel %vm261, %v858, %v859
      %v869 = vpack.c.bf16 %v842, %v839
      %v870 = vpack.c.bf16 %v848, %v845
      %v871 = vpack.c.bf16 %v854, %v851
      %v872 = vpack.c.bf16 %v860, %v857
      %v877 = vunpack.c.l.b16 %v869
      %v878 = vunpack.c.h.b16 %v869
      %v879 = vunpack.c.l.b16 %v870
      %v880 = vunpack.c.h.b16 %v870
      %v881 = vunpack.c.l.b16 %v871
      %v882 = vunpack.c.h.b16 %v871
      %v883 = vunpack.c.l.b16 %v872
      %v884 = vunpack.c.h.b16 %v872
      %v885 = vpack.c.b16 %v877, %v877
      %v886 = vpack.c.b16 %v878, %v878
      %v887 = vpack.c.b16 %v879, %v879
      %v888 = vpack.c.b16 %v880, %v880
      %v889 = vpack.c.b16 %v881, %v881
      %v890 = vpack.c.b16 %v882, %v882
      %v891 = vpack.c.b16 %v883, %v883
      %v892 = vpack.c.b16 %v884, %v884
      %893 = vrot.lane.b32.xlu0 %v885, 56
      %v894 = vpop.permute.xlu0 %893
      %895 = vrot.lane.b32.xlu0 %v886, 56
      %v896 = vpop.permute.xlu0 %895
      %897 = vrot.lane.b32.xlu0 %v887, 56
      %v898 = vpop.permute.xlu0 %897
      %899 = vrot.lane.b32.xlu0 %v888, 56
      %v900 = vpop.permute.xlu0 %899
      %901 = vrot.lane.b32.xlu0 %v889, 56
      %v902 = vpop.permute.xlu0 %901
      %903 = vrot.lane.b32.xlu0 %v890, 56
      %v904 = vpop.permute.xlu0 %903
      %905 = vrot.lane.b32.xlu0 %v891, 56
      %v906 = vpop.permute.xlu0 %905
      %907 = vrot.lane.b32.xlu0 %v892, 56
      %v908 = vpop.permute.xlu0 %907
      %vm917 = vcmask 519616
      %918 = vst.msk [vmem:[#allocation2] sm:$0xf] %vm917, %v894
      %919 = vst.msk [vmem:[#allocation2 + $0x4] sm:$0xf] %vm917, %v896
      %920 = vst.msk [vmem:[#allocation2 + $0x8] sm:$0xf] %vm917, %v898
      %921 = vst.msk [vmem:[#allocation2 + $0xc] sm:$0xf] %vm917, %v900
      %922 = vst.msk [vmem:[#allocation2 + $0x10] sm:$0xf] %vm917, %v902
      %923 = vst.msk [vmem:[#allocation2 + $0x14] sm:$0xf] %vm917, %v904
      %924 = vst.msk [vmem:[#allocation2 + $0x18] sm:$0xf] %vm917, %v906
      %925 = vst.msk [vmem:[#allocation2 + $0x1c] sm:$0xf] %vm917, %v908
      %v926 = vrot.slane %v748, 2
      %v927 = vrot.slane %v749, 2
      %v928 = vsel %vm351, %v926, %v927
      %v929 = vrot.slane %v750, 2
      %v930 = vrot.slane %v751, 2
      %v931 = vsel %vm351, %v929, %v930
      %v932 = vrot.slane %v752, 2
      %v933 = vrot.slane %v753, 2
      %v934 = vsel %vm351, %v932, %v933
      %v935 = vrot.slane %v754, 2
      %v936 = vrot.slane %v755, 2
      %v937 = vsel %vm351, %v935, %v936
      %v938 = vrot.slane %v756, 2
      %v939 = vrot.slane %v757, 2
      %v940 = vsel %vm351, %v938, %v939
      %v941 = vrot.slane %v758, 2
      %v942 = vrot.slane %v759, 2
      %v943 = vsel %vm351, %v941, %v942
      %v944 = vrot.slane %v760, 2
      %v945 = vrot.slane %v761, 2
      %v946 = vsel %vm351, %v944, %v945
      %v947 = vrot.slane %v762, 2
      %v948 = vrot.slane %v763, 2
      %v949 = vsel %vm351, %v947, %v948
      %v958 = vpack.c.bf16 %v931, %v928
      %v959 = vpack.c.bf16 %v937, %v934
      %v960 = vpack.c.bf16 %v943, %v940
      %v961 = vpack.c.bf16 %v949, %v946
      %v966 = vunpack.c.l.b16 %v958
      %v967 = vunpack.c.h.b16 %v958
      %v968 = vunpack.c.l.b16 %v959
      %v969 = vunpack.c.h.b16 %v959
      %v970 = vunpack.c.l.b16 %v960
      %v971 = vunpack.c.h.b16 %v960
      %v972 = vunpack.c.l.b16 %v961
      %v973 = vunpack.c.h.b16 %v961
      %v974 = vpack.c.b16 %v966, %v966
      %v975 = vpack.c.b16 %v967, %v967
      %v976 = vpack.c.b16 %v968, %v968
      %v977 = vpack.c.b16 %v969, %v969
      %v978 = vpack.c.b16 %v970, %v970
      %v979 = vpack.c.b16 %v971, %v971
      %v980 = vpack.c.b16 %v972, %v972
      %v981 = vpack.c.b16 %v973, %v973
      %982 = vrot.lane.b32.xlu0 %v974, 64
      %v983 = vpop.permute.xlu0 %982
      %984 = vrot.lane.b32.xlu0 %v975, 64
      %v985 = vpop.permute.xlu0 %984
      %986 = vrot.lane.b32.xlu0 %v976, 64
      %v987 = vpop.permute.xlu0 %986
      %988 = vrot.lane.b32.xlu0 %v977, 64
      %v989 = vpop.permute.xlu0 %988
      %990 = vrot.lane.b32.xlu0 %v978, 64
      %v991 = vpop.permute.xlu0 %990
      %992 = vrot.lane.b32.xlu0 %v979, 64
      %v993 = vpop.permute.xlu0 %992
      %994 = vrot.lane.b32.xlu0 %v980, 64
      %v995 = vpop.permute.xlu0 %994
      %996 = vrot.lane.b32.xlu0 %v981, 64
      %v997 = vpop.permute.xlu0 %996
      %vm1006 = vcmask 585216
      %1007 = vst.msk [vmem:[#allocation2] sm:$0xf] %vm1006, %v983
      %1008 = vst.msk [vmem:[#allocation2 + $0x4] sm:$0xf] %vm1006, %v985
      %1009 = vst.msk [vmem:[#allocation2 + $0x8] sm:$0xf] %vm1006, %v987
      %1010 = vst.msk [vmem:[#allocation2 + $0xc] sm:$0xf] %vm1006, %v989
      %1011 = vst.msk [vmem:[#allocation2 + $0x10] sm:$0xf] %vm1006, %v991
      %1012 = vst.msk [vmem:[#allocation2 + $0x14] sm:$0xf] %vm1006, %v993
      %1013 = vst.msk [vmem:[#allocation2 + $0x18] sm:$0xf] %vm1006, %v995
      %1014 = vst.msk [vmem:[#allocation2 + $0x1c] sm:$0xf] %vm1006, %v997
      %v1015 = vld [vmem:[#allocation2] sm:$0xf]
      %v1016 = vld [vmem:[#allocation2 + $0x4] sm:$0xf]
      %v1017 = vld [vmem:[#allocation2 + $0x8] sm:$0xf]
      %v1018 = vld [vmem:[#allocation2 + $0xc] sm:$0xf]
      %v1019 = vld [vmem:[#allocation2 + $0x10] sm:$0xf]
      %v1020 = vld [vmem:[#allocation2 + $0x14] sm:$0xf]
      %v1021 = vld [vmem:[#allocation2 + $0x18] sm:$0xf]
      %v1022 = vld [vmem:[#allocation2 + $0x1c] sm:$0xf]
      %v1023 = vld [vmem:[%s1] sm:$0xf]
      %v1024 = vld [vmem:[%s1 + $0x4] sm:$0xf]
      %v1025 = vld [vmem:[%s1 + $0x8] sm:$0xf]
      %v1026 = vld [vmem:[%s1 + $0xc] sm:$0xf]
      %v1027 = vld [vmem:[%s1 + $0x10] sm:$0xf]
      %v1028 = vld [vmem:[%s1 + $0x14] sm:$0xf]
      %v1029 = vld [vmem:[%s1 + $0x18] sm:$0xf]
      %v1030 = vld [vmem:[%s1 + $0x1c] sm:$0xf]
      %v1031 = vld [vmem:[%s1 + $0x20] sm:$0xf]
      %v1040 = vunpack.c.l.b16 %v1015
      %v1041 = vunpack.c.l.b16 %v1016
      %v1042 = vunpack.c.l.b16 %v1017
      %v1043 = vunpack.c.l.b16 %v1018
      %v1044 = vunpack.c.l.b16 %v1019
      %v1045 = vunpack.c.l.b16 %v1020
      %v1046 = vunpack.c.l.b16 %v1021
      %v1047 = vunpack.c.l.b16 %v1022
      %v1048 = vpack.c.b16 %v1041, %v1040
      %v1049 = vpack.c.b16 %v1043, %v1042
      %v1050 = vpack.c.b16 %v1045, %v1044
      %v1051 = vpack.c.b16 %v1047, %v1046
      %v1061 = vunpack.c.l.b16 %v1023
      %v1062 = vunpack.c.l.b16 %v1024
      %v1063 = vunpack.c.l.b16 %v1025
      %v1064 = vunpack.c.l.b16 %v1026
      %v1065 = vunpack.c.l.b16 %v1027
      %v1066 = vunpack.c.l.b16 %v1028
      %v1067 = vunpack.c.l.b16 %v1029
      %v1068 = vunpack.c.l.b16 %v1030
      %v1069 = vunpack.c.l.b16 %v1031
      %v1070 = vpack.c.b16 %v1062, %v1061
      %v1071 = vpack.c.b16 %v1064, %v1063
      %v1072 = vpack.c.b16 %v1066, %v1065
      %v1073 = vpack.c.b16 %v1068, %v1067
      %v1074 = vpack.c.b16 %v1069, %v1069
      %vm1079 = vcmask 588800
      %v1081 = vsel %vm1079, %v1048, 0
      %v1084 = vsel %vm1079, %v1049, 0
      %v1087 = vsel %vm1079, %v1050, 0
      %v1090 = vsel %vm1079, %v1051, 0
      %vm1092 = vcmask 1043456
      %v1094 = vsel %vm1092, %v1074, 0
      %1096 = vmatprep.subr.bf16.mxu0 0
      %1097 = vmatpush1.bf16.msra.mxu0 0
      %1098 = vmatprep.subr.bf16.mxu0 0
      %1099 = vmatpush1.bf16.msra.mxu0 0
      %1100 = vmatprep.subr.bf16.mxu0 0
      %1101 = vmatpush1.bf16.msra.mxu0 0
      %1102 = vmatprep.subr.bf16.mxu0 0
      %1103 = vmatpush1.bf16.msra.mxu0 %v1094
      %1104 = vmatprep.subr.bf16.mxu0 0
      %1105 = vmatpush1.bf16.msra.mxu0 %v1073
      %1106 = vmatprep.subr.bf16.mxu0 0
      %1107 = vmatpush1.bf16.msra.mxu0 %v1072
      %1108 = vmatprep.subr.bf16.mxu0 0
      %1109 = vmatpush1.bf16.msra.mxu0 %v1071
      %1110 = vmatprep.subr.bf16.mxu0 0
      %1111 = vmatpush1.bf16.msra.mxu0 %v1070
      %1112 = vmatprep.subr.bf16.mxu0 0
      %1113 = vmatpush2.bf16.msra.mxu0 0
      %1114 = vmatprep.subr.bf16.mxu0 0
      %1115 = vmatpush2.bf16.msra.mxu0 0
      %1116 = vmatprep.subr.bf16.mxu0 0
      %1117 = vmatpush2.bf16.msra.mxu0 0
      %1118 = vmatprep.subr.bf16.mxu0 0
      %1119 = vmatpush2.bf16.msra.mxu0 0
      %1120 = vmatprep.subr.bf16.mxu0 0
      %1121 = vmatpush2.bf16.msra.mxu0 0
      %1122 = vmatprep.subr.bf16.mxu0 0
      %1123 = vmatpush2.bf16.msra.mxu0 0
      %1124 = vmatprep.subr.bf16.mxu0 0
      %1125 = vmatpush2.bf16.msra.mxu0 0
      %1126 = vmatprep.subr.bf16.mxu0 0
      %1127 = vmatpush2.bf16.msra.mxu0 0
      %1128 = vmatprep.mubr.bf16.mxu0 0
      %1129 = vmatmul.mubr.bf16.gmra.mxu0 %v1081
      %v1130 = vpop.f32.mrf.mxu0
      %v1131 = vadd.f32 0.0, %v1130
      %v1132 = vpop.f32.mrf.mxu0
      %v1133 = vpop.f32.mrf.mxu0
      %v1134 = vadd.f32 0.0, %v1133
      %v1135 = vpop.f32.mrf.mxu0
      %1136 = vmatprep.mubr.bf16.mxu0 0
      %1137 = vmatmul.mubr.bf16.gmra.mxu0 %v1084
      %v1138 = vpop.f32.mrf.mxu0
      %v1139 = vadd.f32 0.0, %v1138
      %v1140 = vpop.f32.mrf.mxu0
      %v1141 = vpop.f32.mrf.mxu0
      %v1142 = vadd.f32 0.0, %v1141
      %v1143 = vpop.f32.mrf.mxu0
      %1144 = vmatprep.mubr.bf16.mxu0 0
      %1145 = vmatmul.mubr.bf16.gmra.mxu0 %v1087
      %v1146 = vpop.f32.mrf.mxu0
      %v1147 = vadd.f32 0.0, %v1146
      %v1148 = vpop.f32.mrf.mxu0
      %v1149 = vpop.f32.mrf.mxu0
      %v1150 = vadd.f32 0.0, %v1149
      %v1151 = vpop.f32.mrf.mxu0
      %1152 = vmatprep.mubr.bf16.mxu0 0
      %1153 = vmatmul.mubr.bf16.gmra.mxu0 %v1090
      %v1154 = vpop.f32.mrf.mxu0
      %v1155 = vadd.f32 0.0, %v1154
      %v1156 = vpop.f32.mrf.mxu0
      %v1157 = vpop.f32.mrf.mxu0
      %v1158 = vadd.f32 0.0, %v1157
      %v1159 = vpop.f32.mrf.mxu0
      %1160 = vdwg.mxu0
      %v1161 = vpack.c.bf16 %v1131, %v1131
      %v1162 = vpack.c.bf16 %v1134, %v1134
      %v1163 = vpack.c.bf16 %v1139, %v1139
      %v1164 = vpack.c.bf16 %v1142, %v1142
      %v1165 = vpack.c.bf16 %v1147, %v1147
      %v1166 = vpack.c.bf16 %v1150, %v1150
      %v1167 = vpack.c.bf16 %v1155, %v1155
      %v1168 = vpack.c.bf16 %v1158, %v1158
      %1169 = vst.msk [vmem:[%s165] sm:$0xf] %vm236, %v1161
      %1170 = vst.msk [vmem:[%s165 + $0x4] sm:$0xf] %vm236, %v1162
      %1171 = vst.msk [vmem:[%s165 + $0x8] sm:$0xf] %vm236, %v1163
      %1172 = vst.msk [vmem:[%s165 + $0xc] sm:$0xf] %vm236, %v1164
      %1173 = vst.msk [vmem:[%s165 + $0x10] sm:$0xf] %vm236, %v1165
      %1174 = vst.msk [vmem:[%s165 + $0x14] sm:$0xf] %vm236, %v1166
      %1175 = vst.msk [vmem:[%s165 + $0x18] sm:$0xf] %vm236, %v1167
      %1176 = vst.msk [vmem:[%s165 + $0x1c] sm:$0xf] %vm236, %v1168
      %s1177 = smul.u32 8, %s18
      %p1178 = scmp.lt.s32.totalorder %s17, 1
      %s1179 = scalar_select %p1178, %s17, 1
      %p1180 = scmp.lt.s32.totalorder %s1177, 7
      %s1181 = scalar_select %p1180, %s1177, 7
      %s1182 = smul.addr %s1179, 8
      %s1183 = sadd.s32 %s1181, %s1182
      %s1184 = smul.addr %s1183, 4
      %s1185 = scalar_lea.vmem %s2, %s1184
      // Predicated region
      $region29: #{octconv_forward.4} parent=27 // pred_check
        %p1186 = pneg %p92
      $region30: #{octconv_forward.4} parent=27 // pred_check_branch
        %1188 = sbr.rel (%p1186) target = $region32
      $region31: #{octconv_forward.4} parent=27 // pred_region
        %s1189 = smul.u32 8, %s18
      $region32: #{octconv_forward.4} parent=27 // pred_fallthru
        _
    $region28: #{octconv_forward.4} parent=5 // pred_fallthru
      _
    %p1190 = scmp.le.s32.totalorder 2, %s8
    // Predicated region
    $region33: #{octconv_forward.4} parent=5 // pred_check
      %p1191 = pneg %p1190
    $region34: #{octconv_forward.4} parent=5 // pred_check_branch
      %1193 = sbr.rel (%p1191) target = $region36
    $region35: #{octconv_forward.4} parent=5 // pred_region
      %s1194 = ssub.s32 %s8, 2
      // Predicated region
      $region37: #{octconv_forward.4} parent=35 // pred_check
        %p1195 = pneg %p98
      $region38: #{octconv_forward.4} parent=35 // pred_check_branch
        %1197 = sbr.rel (%p1195) target = $region40
      $region39: #{octconv_forward.4} parent=35 // pred_region
        %s1198 = smul.u32 8, %s20
        %p1199 = scmp.lt.s32.totalorder %s19, 1
        %s1200 = scalar_select %p1199, %s19, 1
        %p1201 = scmp.lt.s32.totalorder %s1198, 7
        %s1202 = scalar_select %p1201, %s1198, 7
        %s1203 = smul.addr %s1200, 8
        %s1204 = sadd.s32 %s1202, %s1203
        %s1205 = smul.addr %s1204, 4
        %s1206 = scalar_lea.vmem %s2, %s1205
      $region40: #{octconv_forward.4} parent=35 // pred_fallthru
        _
    $region36: #{octconv_forward.4} parent=5 // pred_fallthru
      _
  $region6: #{octconv_forward.4} parent=0 // loop_footer
    %s12 = sadd.s32 1, %s8
  $region7: #{octconv_forward.4} parent=0 // loop_footer_branch
    %7 = sbr.rel target = $region3
  $region8: #{octconv_forward.4} parent=0 // loop_exit
    _

// kernel: tile.33
$region0: #{tile.33}
  #allocation0 [shape = 's32[1]{0}', space=sflag, size = 0x4, scoped, tag = 'scoped memory for tile.33']
  %s0 = inlined_call_operand.vmem [shape: f32[4], index: 0, kind: input, shape index: {}]
  %s1 = inlined_call_operand.vmem [shape: f32[16,4], index: 1, kind: output, shape index: {}]
  // Predicated region
  $region2: #{tile.33} parent=0 // pred_check
    _
  $region3: #{tile.33} parent=0 // pred_check_branch
    %3 = sbr.rel (0) target = $region5
  $region4: #{tile.33} parent=0 // pred_region
    _
  $region5: #{tile.33} parent=0 // pred_fallthru
    _
  %v4 = vld [vmem:[%s0] ss:$0 sm:$0xff]
  %5 = vst [vmem:[%s1] sm:$0xff] %v4
  %s6 = scalar_lea.vmem %s1, 8
  %7 = vst [vmem:[%s6] sm:$0xff] %v4

// kernel: tile.34
$region0: #{tile.34}
  %s0 = inlined_call_operand.vmem [shape: f32[16,4], index: 0, kind: input, shape index: {}]
  %s1 = inlined_call_operand.vmem [shape: f32[1,64], index: 1, kind: output, shape index: {}]
  $region1: #{tile.34} parent=0
    #allocation0 [shape = 'u8[4096]{0}', space=vmem, size = 0x1000, scoped, tag = 'scoped mem for output reshape']
    %v2 = vld [vmem:[%s0] sm:$0x1]
    %vm3 = vcmask 31744
    %4 = vst.msk [vmem:[#allocation0] sm:$0x1] %vm3, %v2
    %s5 = scalar_lea.vmem %s0, 15
    %v6 = vld [vmem:[%s5] sm:$0x1]
    %7 = vrot.lane.b32.xlu0 %v6, 60
    %v8 = vpop.permute.xlu0 %7
    %vm9 = vcmask 523744
    %10 = vst.msk [vmem:[#allocation0] sm:$0x1] %vm9, %v8
    %s11 = scalar_lea.vmem %s0, 14
    %v12 = vld [vmem:[%s11] sm:$0x1]
    %13 = vrot.lane.b32.xlu0 %v12, 56
    %v14 = vpop.permute.xlu0 %13
    %vm15 = vcmask 490944
    %16 = vst.msk [vmem:[#allocation0] sm:$0x1] %vm15, %v14
    %s17 = scalar_lea.vmem %s0, 13
    %v18 = vld [vmem:[%s17] sm:$0x1]
    %19 = vrot.lane.b32.xlu0 %v18, 52
    %v20 = vpop.permute.xlu0 %19
    %vm21 = vcmask 458144
    %22 = vst.msk [vmem:[#allocation0] sm:$0x1] %vm21, %v20
    %s23 = scalar_lea.vmem %s0, 12
    %v24 = vld [vmem:[%s23] sm:$0x1]
    %25 = vrot.lane.b32.xlu0 %v24, 48
    %v26 = vpop.permute.xlu0 %25
    %vm27 = vcmask 425344
    %28 = vst.msk [vmem:[#allocation0] sm:$0x1] %vm27, %v26
    %s29 = scalar_lea.vmem %s0, 11
    %v30 = vld [vmem:[%s29] sm:$0x1]
    %31 = vrot.lane.b32.xlu0 %v30, 44
    %v32 = vpop.permute.xlu0 %31
    %vm33 = vcmask 392544
    %34 = vst.msk [vmem:[#allocation0] sm:$0x1] %vm33, %v32
    %s35 = scalar_lea.vmem %s0, 10
    %v36 = vld [vmem:[%s35] sm:$0x1]
    %37 = vrot.lane.b32.xlu0 %v36, 40
    %v38 = vpop.permute.xlu0 %37
    %vm39 = vcmask 359744
    %40 = vst.msk [vmem:[#allocation0] sm:$0x1] %vm39, %v38
    %s41 = scalar_lea.vmem %s0, 9
    %v42 = vld [vmem:[%s41] sm:$0x1]
    %43 = vrot.lane.b32.xlu0 %v42, 36
    %v44 = vpop.permute.xlu0 %43
    %vm45 = vcmask 326944
    %46 = vst.msk [vmem:[#allocation0] sm:$0x1] %vm45, %v44
    %s47 = scalar_lea.vmem %s0, 8
    %v48 = vld [vmem:[%s47] sm:$0x1]
    %49 = vrot.lane.b32.xlu0 %v48, 32
    %v50 = vpop.permute.xlu0 %49
    %vm51 = vcmask 294144
    %52 = vst.msk [vmem:[#allocation0] sm:$0x1] %vm51, %v50
    %s53 = scalar_lea.vmem %s0, 7
    %v54 = vld [vmem:[%s53] sm:$0x1]
    %55 = vrot.lane.b32.xlu0 %v54, 28
    %v56 = vpop.permute.xlu0 %55
    %vm57 = vcmask 261344
    %58 = vst.msk [vmem:[#allocation0] sm:$0x1] %vm57, %v56
    %s59 = scalar_lea.vmem %s0, 6
    %v60 = vld [vmem:[%s59] sm:$0x1]
    %61 = vrot.lane.b32.xlu0 %v60, 24
    %v62 = vpop.permute.xlu0 %61
    %vm63 = vcmask 228544
    %64 = vst.msk [vmem:[#allocation0] sm:$0x1] %vm63, %v62
    %s65 = scalar_lea.vmem %s0, 5
    %v66 = vld [vmem:[%s65] sm:$0x1]
    %67 = vrot.lane.b32.xlu0 %v66, 20
    %v68 = vpop.permute.xlu0 %67
    %vm69 = vcmask 195744
    %70 = vst.msk [vmem:[#allocation0] sm:$0x1] %vm69, %v68
    %s71 = scalar_lea.vmem %s0, 4
    %v72 = vld [vmem:[%s71] sm:$0x1]
    %73 = vrot.lane.b32.xlu0 %v72, 16
    %v74 = vpop.permute.xlu0 %73
    %vm75 = vcmask 162944
    %76 = vst.msk [vmem:[#allocation0] sm:$0x1] %vm75, %v74
    %s77 = scalar_lea.vmem %s0, 3
    %v78 = vld [vmem:[%s77] sm:$0x1]
    %79 = vrot.lane.b32.xlu0 %v78, 12
    %v80 = vpop.permute.xlu0 %79
    %vm81 = vcmask 130144
    %82 = vst.msk [vmem:[#allocation0] sm:$0x1] %vm81, %v80
    %s83 = scalar_lea.vmem %s0, 2
    %v84 = vld [vmem:[%s83] sm:$0x1]
    %85 = vrot.lane.b32.xlu0 %v84, 8
    %v86 = vpop.permute.xlu0 %85
    %vm87 = vcmask 97344
    %88 = vst.msk [vmem:[#allocation0] sm:$0x1] %vm87, %v86
    %s89 = scalar_lea.vmem %s0, 1
    %v90 = vld [vmem:[%s89] sm:$0x1]
    %91 = vrot.lane.b32.xlu0 %v90, 4
    %v92 = vpop.permute.xlu0 %91
    %vm93 = vcmask 64544
    %94 = vst.msk [vmem:[#allocation0] sm:$0x1] %vm93, %v92
    %s96 = sshll.u32 1, 1
    %s97 = ssub.s32 %s96, 1
    %v99 = vld [vmem:[#allocation0] sm:%s97]
    %s100 = sshll.u32 1, 1
    %s101 = ssub.s32 %s100, 1
    %102 = vst [vmem:[%s1] sm:%s101] %v99

// kernel: octconv_forward.6
$region0: #{octconv_forward.6}
  #allocation0 [shape = 'u32[]', space=smem, size = 0x4, offset = 0x4, fixed_abs, tag = 'smem constant byte address 0x4 - core index']
  #allocation1 [shape = 'u32[144,128]{1,0:T(1,128)}', space=vmem, size = 0x12000, scoped, tag = 'internal scratch']
  %s0 = inlined_call_operand.vmem [shape: bf16[32,64], index: 0, kind: input, shape index: {}]
  %s1 = inlined_call_operand.vmem [shape: f32[1,64], index: 1, kind: input, shape index: {}]
  %s2 = inlined_call_operand.vmem [shape: f32[1,64], index: 2, kind: input, shape index: {}]
  %s3 = inlined_call_operand.vmem [shape: f32[1,64], index: 3, kind: input, shape index: {}]
  %s4 = inlined_call_operand.vmem [shape: f32[32,64], index: 4, kind: output, shape index: {}]
  %s5 = sld [smem:[#allocation0]]
  $region26: #{octconv_forward.6} parent=0
    _
  %s7 = ssub.s32 1, %s5
  %s8 = scalar_select 0, %s7, %s5
  // Predicated region
  $region2: #{octconv_forward.6} parent=0 // pred_check
    _
  $region3: #{octconv_forward.6} parent=0 // pred_check_branch
    %10 = sbr.rel (0) target = $region5
  $region4: #{octconv_forward.6} parent=0 // pred_region
    _
  $region5: #{octconv_forward.6} parent=0 // pred_fallthru
    _
  // Predicated region
  $region6: #{octconv_forward.6} parent=0 // pred_check
    _
  $region7: #{octconv_forward.6} parent=0 // pred_check_branch
    %12 = sbr.rel (0) target = $region9
  $region8: #{octconv_forward.6} parent=0 // pred_region
    _
  $region9: #{octconv_forward.6} parent=0 // pred_fallthru
    _
  // Predicated region
  $region10: #{octconv_forward.6} parent=0 // pred_check
    _
  $region11: #{octconv_forward.6} parent=0 // pred_check_branch
    %14 = sbr.rel (0) target = $region13
  $region12: #{octconv_forward.6} parent=0 // pred_region
    _
  $region13: #{octconv_forward.6} parent=0 // pred_fallthru
    _
  // Predicated region
  $region14: #{octconv_forward.6} parent=0 // pred_check
    _
  $region15: #{octconv_forward.6} parent=0 // pred_check_branch
    %16 = sbr.rel (0) target = $region17
  $region16: #{octconv_forward.6} parent=0 // pred_region
    _
  $region17: #{octconv_forward.6} parent=0 // pred_fallthru
    _
  %v17 = vld [vmem:[%s0] sm:$0xf]
  %v18 = vld [vmem:[%s0 + $0x4] sm:$0xf]
  %v19 = vld [vmem:[%s0 + $0x8] sm:$0xf]
  %v20 = vld [vmem:[%s0 + $0xc] sm:$0xf]
  %v21 = vunpack.c.l.bf16 %v17
  %v22 = vunpack.c.l.bf16 %v18
  %v23 = vunpack.c.l.bf16 %v19
  %v24 = vunpack.c.l.bf16 %v20
  %v25 = vld [vmem:[%s1] sm:$0x1]
  %v27 = vlaneseq
  %v28 = vshrl.u32 %v27, 7
  %v29 = vsub.s32 0, %v28
  %v30 = vrot.slane %v25, %v29
  %v32 = vmul.f32 %v21, %v30
  %v33 = vmul.f32 %v22, %v30
  %v34 = vmul.f32 %v23, %v30
  %v35 = vmul.f32 %v24, %v30
  %v36 = vld [vmem:[%s2] sm:$0x1]
  %v38 = vlaneseq
  %v39 = vshrl.u32 %v38, 7
  %v40 = vsub.s32 0, %v39
  %v41 = vrot.slane %v36, %v40
  %v43 = vadd.f32 %v32, %v41
  %v44 = vadd.f32 %v33, %v41
  %v45 = vadd.f32 %v34, %v41
  %v46 = vadd.f32 %v35, %v41
  %vm47 = vcmp.ge.f32.partialorder %v43, 0.0
  %vm48 = vcmp.ge.f32.partialorder %v44, 0.0
  %vm49 = vcmp.ge.f32.partialorder %v45, 0.0
  %vm50 = vcmp.ge.f32.partialorder %v46, 0.0
  %v51 = vld [vmem:[%s3] sm:$0x1]
  %v53 = vlaneseq
  %v54 = vshrl.u32 %v53, 7
  %v55 = vsub.s32 0, %v54
  %v56 = vrot.slane %v51, %v55
  %v58 = vmul.f32 %v56, %v43
  %v59 = vmul.f32 %v56, %v44
  %v60 = vmul.f32 %v56, %v45
  %v61 = vmul.f32 %v56, %v46
  %v62 = vsel %vm47, %v43, %v58
  %v63 = vsel %vm48, %v44, %v59
  %v64 = vsel %vm49, %v45, %v60
  %v65 = vsel %vm50, %v46, %v61
  %vm66 = vcmask 523264
  %67 = vst.msk [vmem:[%s4] sm:$0xff] %vm66, %v62
  %68 = vst.msk [vmem:[%s4 + $0x8] sm:$0xff] %vm66, %v63
  %69 = vst.msk [vmem:[%s4 + $0x10] sm:$0xff] %vm66, %v64
  %70 = vst.msk [vmem:[%s4 + $0x18] sm:$0xff] %vm66, %v65
  // Predicated region
  $region18: #{octconv_forward.6} parent=0 // pred_check
    _
  $region19: #{octconv_forward.6} parent=0 // pred_check_branch
    %72 = sbr.rel (0) target = $region21
  $region20: #{octconv_forward.6} parent=0 // pred_region
    _
  $region21: #{octconv_forward.6} parent=0 // pred_fallthru
    _
  // Predicated region
  $region22: #{octconv_forward.6} parent=0 // pred_check
    _
  $region23: #{octconv_forward.6} parent=0 // pred_check_branch
    %74 = sbr.rel (0) target = $region25
  $region24: #{octconv_forward.6} parent=0 // pred_region
    _
  $region25: #{octconv_forward.6} parent=0 // pred_fallthru
    _

// kernel: octconv_forward.5
$region0: #{octconv_forward.5}
  #allocation0 [shape = 'u32[]', space=smem, size = 0x4, offset = 0x4, fixed_abs, tag = 'smem constant byte address 0x4 - core index']
  #allocation1 [shape = 'u32[144,128]{1,0:T(1,128)}', space=vmem, size = 0x12000, scoped, tag = 'internal scratch']
  #allocation2 [shape = 'bf16[256,36]{1,0:T(8,128)(2,1)}', space=vmem, size = 0x10000, scoped, tag = 'scratch operand']
  %s0 = inlined_call_operand.vmem [shape: bf16[2,18,18,4], index: 0, kind: input, shape index: {}]
  %s1 = inlined_call_operand.vmem [shape: bf16[36,4], index: 1, kind: input, shape index: {}]
  %s2 = inlined_call_operand.vmem [shape: bf16[2,16,16,4], index: 2, kind: input, shape index: {}]
  %s3 = inlined_call_operand.vmem [shape: bf16[2,16,16,4], index: 3, kind: output, shape index: {}]
  %s4 = sld [smem:[#allocation0]]
  $region45: #{octconv_forward.5} parent=0
    _
  %s6 = ssub.s32 1, %s4
  %s7 = scalar_select 0, %s6, %s4
  loop: start=0, step=1, limit=4
  $region2: #{octconv_forward.5} parent=0 // loop_pre_header
    _
  $region3: #{octconv_forward.5} parent=0 // loop_header
    %s9 = sphi 0, %s13
    %p10 = scmp.ge.s32.totalorder %s9, 4
    %s16 = sphi 0, %s28
    %s17 = sphi 0, %s24
    %s18 = sphi 0, %s16
    %s19 = sphi 0, %s17
    %s20 = sphi 0, %s18
    %s21 = sphi 0, %s19
    %s31 = sphi 0, %s33
    %s34 = sphi 0, %s31
    %s35 = sphi 0, %s34
    %s51 = sphi 0, %s35
    %s55 = sphi 0, %s55
    %s57 = sphi 0, %s55
    %s58 = sphi 0, %s57
    %s72 = sphi 0, %s58
    %s80 = sphi 0, %s82
    %s83 = sphi 0, %s80
    %s84 = sphi 0, %s83
    %s100 = sphi 0, %s84
    %s108 = sphi 0, %s110
    %s111 = sphi 0, %s108
    %s112 = sphi 0, %s111
    %s128 = sphi 0, %s112
  $region4: #{octconv_forward.5} parent=0 // loop_header_branch
    %12 = sbr.rel (%p10) target = $region8
  $region5: #{octconv_forward.5} parent=0 // loop_body
    %s14 = ssub.s32 %s9, 1
    %s15 = ssub.s32 %s9, 2
    %s22 = sadd.s32 1, %s17
    %p23 = scmp.ge.s32.totalorder %s22, 1
    %s24 = scalar_select %p23, 0, %s22
    %s25 = sadd.s32 1, %s16
    %s26 = scalar_select %p23, %s25, %s16
    %p27 = scmp.ge.s32.totalorder %s26, 2
    %s28 = scalar_select %p27, 0, %s26
    %s29 = ssub.s32 %s16, %s28
    %p30 = scmp.eq.s32.totalorder %s29, 0
    %s32 = sadd.s32 %s31, 1
    %s33 = scalar_select %p30, %s31, %s32
    %p36 = pneg %p30
    %p37 = scmp.eq.s32.totalorder %s9, 1
    %p38 = por %p36, %p37
    %p39 = scmp.ne.s32.totalorder %s31, %s34
    %p40 = scmp.eq.s32.totalorder %s9, 0
    %p41 = por %p39, %p40
    %p42 = scmp.ne.s32.totalorder %s31, %s34
    %p43 = scmp.eq.s32.totalorder %s14, 1
    %p44 = por %p42, %p43
    %p45 = scmp.ne.s32.totalorder %s34, %s35
    %p46 = scmp.eq.s32.totalorder %s14, 0
    %p47 = por %p45, %p46
    %p48 = scmp.ne.s32.totalorder %s34, %s35
    %p49 = scmp.eq.s32.totalorder %s15, 1
    %p50 = por %p48, %p49
    %p52 = scmp.ne.s32.totalorder %s35, %s51
    %p53 = scmp.eq.s32.totalorder %s15, 0
    %p54 = por %p52, %p53
    %s56 = sadd.s32 %s55, 1
    %p59 = scmp.eq.s32.totalorder %s9, 1
    %p60 = scmp.ne.s32.totalorder %s55, %s57
    %p61 = scmp.eq.s32.totalorder %s9, 0
    %p62 = por %p60, %p61
    %p63 = scmp.ne.s32.totalorder %s55, %s57
    %p64 = scmp.eq.s32.totalorder %s14, 1
    %p65 = por %p63, %p64
    %p66 = scmp.ne.s32.totalorder %s57, %s58
    %p67 = scmp.eq.s32.totalorder %s14, 0
    %p68 = por %p66, %p67
    %p69 = scmp.ne.s32.totalorder %s57, %s58
    %p70 = scmp.eq.s32.totalorder %s15, 1
    %p71 = por %p69, %p70
    %p73 = scmp.ne.s32.totalorder %s58, %s72
    %p74 = scmp.eq.s32.totalorder %s15, 0
    %p75 = por %p73, %p74
    %s76 = ssub.s32 %s16, %s28
    %s77 = ssub.s32 %s17, %s24
    %s78 = sor.u32 %s76, %s77
    %p79 = scmp.eq.s32.totalorder %s78, 0
    %s81 = sadd.s32 %s80, 1
    %s82 = scalar_select %p79, %s80, %s81
    %p85 = pneg %p79
    %p86 = scmp.eq.s32.totalorder %s9, 1
    %p87 = por %p85, %p86
    %p88 = scmp.ne.s32.totalorder %s80, %s83
    %p89 = scmp.eq.s32.totalorder %s9, 0
    %p90 = por %p88, %p89
    %p91 = scmp.ne.s32.totalorder %s80, %s83
    %p92 = scmp.eq.s32.totalorder %s14, 1
    %p93 = por %p91, %p92
    %p94 = scmp.ne.s32.totalorder %s83, %s84
    %p95 = scmp.eq.s32.totalorder %s14, 0
    %p96 = por %p94, %p95
    %p97 = scmp.ne.s32.totalorder %s83, %s84
    %p98 = scmp.eq.s32.totalorder %s15, 1
    %p99 = por %p97, %p98
    %p101 = scmp.ne.s32.totalorder %s84, %s100
    %p102 = scmp.eq.s32.totalorder %s15, 0
    %p103 = por %p101, %p102
    %s104 = ssub.s32 %s16, %s28
    %s105 = ssub.s32 %s17, %s24
    %s106 = sor.u32 %s104, %s105
    %p107 = scmp.eq.s32.totalorder %s106, 0
    %s109 = sadd.s32 %s108, 1
    %s110 = scalar_select %p107, %s108, %s109
    %p113 = pneg %p107
    %p114 = scmp.eq.s32.totalorder %s9, 1
    %p115 = por %p113, %p114
    %p116 = scmp.ne.s32.totalorder %s108, %s111
    %p117 = scmp.eq.s32.totalorder %s9, 0
    %p118 = por %p116, %p117
    %p119 = scmp.ne.s32.totalorder %s108, %s111
    %p120 = scmp.eq.s32.totalorder %s14, 1
    %p121 = por %p119, %p120
    %p122 = scmp.ne.s32.totalorder %s111, %s112
    %p123 = scmp.eq.s32.totalorder %s14, 0
    %p124 = por %p122, %p123
    %p125 = scmp.ne.s32.totalorder %s111, %s112
    %p126 = scmp.eq.s32.totalorder %s15, 1
    %p127 = por %p125, %p126
    %p129 = scmp.ne.s32.totalorder %s112, %s128
    %p130 = scmp.eq.s32.totalorder %s15, 0
    %p131 = por %p129, %p130
    %p132 = scmp.le.s32.totalorder 1, %s9
    %p133 = scmp.lt.s32.totalorder %s9, 3
    %p134 = pnand %p132, %p133
    %p135 = pneg %p134
    // Predicated region
    $region9: #{octconv_forward.5} parent=5 // pred_check
      _
    $region10: #{octconv_forward.5} parent=5 // pred_check_branch
      %137 = sbr.rel (%p134) target = $region12
    $region11: #{octconv_forward.5} parent=5 // pred_region
      %s138 = ssub.s32 %s9, 1
      // Predicated region
      $region13: #{octconv_forward.5} parent=11 // pred_check
        %p139 = pneg %p68
      $region14: #{octconv_forward.5} parent=11 // pred_check_branch
        %141 = sbr.rel (%p139) target = $region16
      $region15: #{octconv_forward.5} parent=11 // pred_region
        _
      $region16: #{octconv_forward.5} parent=11 // pred_fallthru
        _
    $region12: #{octconv_forward.5} parent=5 // pred_fallthru
      _
    %p142 = scmp.lt.s32.totalorder %s9, 2
    // Predicated region
    $region17: #{octconv_forward.5} parent=5 // pred_check
      %p143 = pneg %p142
    $region18: #{octconv_forward.5} parent=5 // pred_check_branch
      %145 = sbr.rel (%p143) target = $region20
    $region19: #{octconv_forward.5} parent=5 // pred_region
      // Predicated region
      $region21: #{octconv_forward.5} parent=19 // pred_check
        %p146 = pneg %p41
      $region22: #{octconv_forward.5} parent=19 // pred_check_branch
        %148 = sbr.rel (%p146) target = $region24
      $region23: #{octconv_forward.5} parent=19 // pred_region
        %p149 = scmp.lt.s32.totalorder %s16, 1
        %s150 = scalar_select %p149, %s16, 1
        %s151 = smul.addr %s150, 54
        %s152 = smul.addr %s151, 4
        %s153 = scalar_lea.vmem %s0, %s152
      $region24: #{octconv_forward.5} parent=19 // pred_fallthru
        _
      // Predicated region
      $region25: #{octconv_forward.5} parent=19 // pred_check
        %p154 = pneg %p90
      $region26: #{octconv_forward.5} parent=19 // pred_check_branch
        %156 = sbr.rel (%p154) target = $region28
      $region27: #{octconv_forward.5} parent=19 // pred_region
        %s157 = smul.u32 16, %s17
        %p158 = scmp.lt.s32.totalorder %s16, 1
        %s159 = scalar_select %p158, %s16, 1
        %p160 = scmp.lt.s32.totalorder %s157, 15
        %s161 = scalar_select %p160, %s157, 15
        %s162 = smul.addr %s161, 2
        %s163 = smul.addr %s159, 32
        %s164 = sadd.s32 %s162, %s163
        %s165 = smul.addr %s164, 4
        %s166 = scalar_lea.vmem %s2, %s165
        %s167 = smul.u32 16, %s17
      $region28: #{octconv_forward.5} parent=19 // pred_fallthru
        _
    $region20: #{octconv_forward.5} parent=5 // pred_fallthru
      _
    %p168 = scmp.le.s32.totalorder 1, %s9
    %p169 = scmp.lt.s32.totalorder %s9, 3
    %p170 = pnand %p168, %p169
    %p171 = pneg %p170
    // Predicated region
    $region29: #{octconv_forward.5} parent=5 // pred_check
      _
    $region30: #{octconv_forward.5} parent=5 // pred_check_branch
      %173 = sbr.rel (%p170) target = $region32
    $region31: #{octconv_forward.5} parent=5 // pred_region
      %s174 = ssub.s32 %s9, 1
      %p175 = scmp.lt.s32.totalorder %s18, 1
      %s176 = scalar_select %p175, %s18, 1
      %s177 = smul.addr %s176, 54
      %s178 = smul.addr %s177, 4
      %s179 = scalar_lea.vmem %s0, %s178
      %p180 = pneg %p47
      %p181 = pneg %p44
      %p182 = pneg %p68
      %p183 = pneg %p65
      %s184 = smul.u32 16, %s19
      %p185 = scmp.lt.s32.totalorder %s18, 1
      %s186 = scalar_select %p185, %s18, 1
      %p187 = scmp.lt.s32.totalorder %s184, 15
      %s188 = scalar_select %p187, %s184, 15
      %s189 = smul.addr %s188, 2
      %s190 = smul.addr %s186, 32
      %s191 = sadd.s32 %s189, %s190
      %s192 = smul.addr %s191, 4
      %s193 = scalar_lea.vmem %s2, %s192
      %p194 = pneg %p96
      %p195 = pneg %p93
      %p196 = pneg %p124
      %p197 = pneg %p121
      %s198 = smul.u32 16, %s19
      %p199 = scmp.lt.s32.totalorder %s18, 1
      %s200 = scalar_select %p199, %s18, 1
      %p201 = scmp.lt.s32.totalorder %s198, 15
      %s202 = scalar_select %p201, %s198, 15
      %s203 = smul.addr %s202, 2
      %s204 = smul.addr %s200, 32
      %s205 = sadd.s32 %s203, %s204
      %s206 = smul.addr %s205, 4
      %s207 = scalar_lea.vmem %s3, %s206
      %p208 = scmp.lt.s32.totalorder %s18, 1
      %s209 = scalar_select %p208, %s18, 1
      %s210 = smul.addr %s209, 54
      %s211 = smul.addr %s210, 4
      %s212 = scalar_lea.vmem %s0, %s211
      %s213 = smul.u32 16, %s19
      %p214 = scmp.lt.s32.totalorder %s18, 1
      %s215 = scalar_select %p214, %s18, 1
      %p216 = scmp.lt.s32.totalorder %s213, 15
      %s217 = scalar_select %p216, %s213, 15
      %s218 = smul.addr %s217, 2
      %s219 = smul.addr %s215, 32
      %s220 = sadd.s32 %s218, %s219
      %s221 = smul.addr %s220, 4
      %s222 = scalar_lea.vmem %s2, %s221
      %s223 = smul.u32 16, %s19
      %s224 = smul.u32 16, %s19
      %p225 = scmp.lt.s32.totalorder %s18, 1
      %s226 = scalar_select %p225, %s18, 1
      %p227 = scmp.lt.s32.totalorder %s224, 15
      %s228 = scalar_select %p227, %s224, 15
      %s229 = smul.addr %s228, 2
      %s230 = smul.addr %s226, 32
      %s231 = sadd.s32 %s229, %s230
      %s232 = smul.addr %s231, 4
      %s233 = scalar_lea.vmem %s3, %s232
      %s234 = smul.u32 16, %s19
      %s236 = smul.u32 %s19, 16
      %s237 = smul.u32 %s236, 3
      %s238 = smul.addr %s237, 4
      %s239 = scalar_lea.vmem %s212, %s238
      %v240 = vld [vmem:[%s239] sm:$0xf]
      %v241 = vld [vmem:[%s239 + $0x4] sm:$0xf]
      %v242 = vld [vmem:[%s239 + $0x8] sm:$0x1]
      %v243 = vld [vmem:[%s239 + $0xc] sm:$0xf]
      %v244 = vld [vmem:[%s239 + $0x10] sm:$0xf]
      %v245 = vld [vmem:[%s239 + $0x14] sm:$0x1]
      %v246 = vld [vmem:[%s239 + $0x18] sm:$0xf]
      %v247 = vld [vmem:[%s239 + $0x1c] sm:$0xf]
      %v248 = vld [vmem:[%s239 + $0x20] sm:$0x1]
      %v249 = vld [vmem:[%s239 + $0x24] sm:$0xf]
      %v250 = vld [vmem:[%s239 + $0x28] sm:$0xf]
      %v251 = vld [vmem:[%s239 + $0x2c] sm:$0x1]
      %v252 = vld [vmem:[%s239 + $0x30] sm:$0xf]
      %v253 = vld [vmem:[%s239 + $0x34] sm:$0xf]
      %v254 = vld [vmem:[%s239 + $0x38] sm:$0x1]
      %v255 = vld [vmem:[%s239 + $0x3c] sm:$0xf]
      %v256 = vld [vmem:[%s239 + $0x40] sm:$0xf]
      %v257 = vld [vmem:[%s239 + $0x44] sm:$0x1]
      %v258 = vld [vmem:[%s239 + $0x48] sm:$0xf]
      %v259 = vld [vmem:[%s239 + $0x4c] sm:$0xf]
      %v260 = vld [vmem:[%s239 + $0x50] sm:$0x1]
      %v261 = vld [vmem:[%s239 + $0x54] sm:$0xf]
      %v262 = vld [vmem:[%s239 + $0x58] sm:$0xf]
      %v263 = vld [vmem:[%s239 + $0x5c] sm:$0x1]
      %v264 = vld [vmem:[%s239 + $0x60] sm:$0xf]
      %v265 = vld [vmem:[%s239 + $0x64] sm:$0xf]
      %v266 = vld [vmem:[%s239 + $0x68] sm:$0x1]
      %v267 = vld [vmem:[%s239 + $0x6c] sm:$0xf]
      %v268 = vld [vmem:[%s239 + $0x70] sm:$0xf]
      %v269 = vld [vmem:[%s239 + $0x74] sm:$0x1]
      %v270 = vld [vmem:[%s239 + $0x78] sm:$0xf]
      %v271 = vld [vmem:[%s239 + $0x7c] sm:$0xf]
      %v272 = vld [vmem:[%s239 + $0x80] sm:$0x1]
      %v273 = vld [vmem:[%s239 + $0x84] sm:$0xf]
      %v274 = vld [vmem:[%s239 + $0x88] sm:$0xf]
      %v275 = vld [vmem:[%s239 + $0x8c] sm:$0x1]
      %v276 = vld [vmem:[%s239 + $0x90] sm:$0xf]
      %v277 = vld [vmem:[%s239 + $0x94] sm:$0xf]
      %v278 = vld [vmem:[%s239 + $0x98] sm:$0x1]
      %v279 = vld [vmem:[%s239 + $0x9c] sm:$0xf]
      %v280 = vld [vmem:[%s239 + $0xa0] sm:$0xf]
      %v281 = vld [vmem:[%s239 + $0xa4] sm:$0x1]
      %v282 = vld [vmem:[%s239 + $0xa8] sm:$0xf]
      %v283 = vld [vmem:[%s239 + $0xac] sm:$0xf]
      %v284 = vld [vmem:[%s239 + $0xb0] sm:$0x1]
      %v285 = vld [vmem:[%s239 + $0xb4] sm:$0xf]
      %v286 = vld [vmem:[%s239 + $0xb8] sm:$0xf]
      %v287 = vld [vmem:[%s239 + $0xbc] sm:$0x1]
      %v288 = vunpack.c.l.bf16 %v240
      %v289 = vunpack.c.l.bf16 %v241
      %v290 = vunpack.c.l.bf16 %v242
      %v291 = vunpack.c.l.bf16 %v243
      %v292 = vunpack.c.l.bf16 %v244
      %v293 = vunpack.c.l.bf16 %v245
      %v294 = vunpack.c.l.bf16 %v246
      %v295 = vunpack.c.l.bf16 %v247
      %v296 = vunpack.c.l.bf16 %v248
      %v297 = vunpack.c.l.bf16 %v249
      %v298 = vunpack.c.l.bf16 %v250
      %v299 = vunpack.c.l.bf16 %v251
      %v300 = vunpack.c.l.bf16 %v252
      %v301 = vunpack.c.l.bf16 %v253
      %v302 = vunpack.c.l.bf16 %v254
      %v303 = vunpack.c.l.bf16 %v255
      %v304 = vunpack.c.l.bf16 %v256
      %v305 = vunpack.c.l.bf16 %v257
      %v306 = vunpack.c.l.bf16 %v258
      %v307 = vunpack.c.l.bf16 %v259
      %v308 = vunpack.c.l.bf16 %v260
      %v309 = vunpack.c.l.bf16 %v261
      %v310 = vunpack.c.l.bf16 %v262
      %v311 = vunpack.c.l.bf16 %v263
      %v312 = vunpack.c.l.bf16 %v264
      %v313 = vunpack.c.l.bf16 %v265
      %v314 = vunpack.c.l.bf16 %v266
      %v315 = vunpack.c.l.bf16 %v267
      %v316 = vunpack.c.l.bf16 %v268
      %v317 = vunpack.c.l.bf16 %v269
      %v318 = vunpack.c.l.bf16 %v270
      %v319 = vunpack.c.l.bf16 %v271
      %v320 = vunpack.c.l.bf16 %v272
      %v321 = vunpack.c.l.bf16 %v273
      %v322 = vunpack.c.l.bf16 %v274
      %v323 = vunpack.c.l.bf16 %v275
      %v324 = vunpack.c.l.bf16 %v276
      %v325 = vunpack.c.l.bf16 %v277
      %v326 = vunpack.c.l.bf16 %v278
      %v327 = vunpack.c.l.bf16 %v279
      %v328 = vunpack.c.l.bf16 %v280
      %v329 = vunpack.c.l.bf16 %v281
      %v330 = vunpack.c.l.bf16 %v282
      %v331 = vunpack.c.l.bf16 %v283
      %v332 = vunpack.c.l.bf16 %v284
      %v333 = vunpack.c.l.bf16 %v285
      %v334 = vunpack.c.l.bf16 %v286
      %v335 = vunpack.c.l.bf16 %v287
      %v336 = vpack.c.bf16 %v289, %v288
      %v337 = vpack.c.bf16 %v292, %v291
      %v338 = vpack.c.bf16 %v295, %v294
      %v339 = vpack.c.bf16 %v298, %v297
      %v340 = vpack.c.bf16 %v301, %v300
      %v341 = vpack.c.bf16 %v304, %v303
      %v342 = vpack.c.bf16 %v307, %v306
      %v343 = vpack.c.bf16 %v310, %v309
      %v344 = vpack.c.bf16 %v313, %v312
      %v345 = vpack.c.bf16 %v316, %v315
      %v346 = vpack.c.bf16 %v319, %v318
      %v347 = vpack.c.bf16 %v322, %v321
      %v348 = vpack.c.bf16 %v325, %v324
      %v349 = vpack.c.bf16 %v328, %v327
      %v350 = vpack.c.bf16 %v331, %v330
      %v351 = vpack.c.bf16 %v334, %v333
      %v368 = vunpack.c.l.b16 %v336
      %v369 = vunpack.c.h.b16 %v336
      %v370 = vunpack.c.l.b16 %v337
      %v371 = vunpack.c.h.b16 %v337
      %v372 = vunpack.c.l.b16 %v338
      %v373 = vunpack.c.h.b16 %v338
      %v374 = vunpack.c.l.b16 %v339
      %v375 = vunpack.c.h.b16 %v339
      %v376 = vunpack.c.l.b16 %v340
      %v377 = vunpack.c.h.b16 %v340
      %v378 = vunpack.c.l.b16 %v341
      %v379 = vunpack.c.h.b16 %v341
      %v380 = vunpack.c.l.b16 %v342
      %v381 = vunpack.c.h.b16 %v342
      %v382 = vunpack.c.l.b16 %v343
      %v383 = vunpack.c.h.b16 %v343
      %v384 = vunpack.c.l.b16 %v344
      %v385 = vunpack.c.h.b16 %v344
      %v386 = vunpack.c.l.b16 %v345
      %v387 = vunpack.c.h.b16 %v345
      %v388 = vunpack.c.l.b16 %v346
      %v389 = vunpack.c.h.b16 %v346
      %v390 = vunpack.c.l.b16 %v347
      %v391 = vunpack.c.h.b16 %v347
      %v392 = vunpack.c.l.b16 %v348
      %v393 = vunpack.c.h.b16 %v348
      %v394 = vunpack.c.l.b16 %v349
      %v395 = vunpack.c.h.b16 %v349
      %v396 = vunpack.c.l.b16 %v350
      %v397 = vunpack.c.h.b16 %v350
      %v398 = vunpack.c.l.b16 %v351
      %v399 = vunpack.c.h.b16 %v351
      %v400 = vpack.c.b16 %v368, %v368
      %v401 = vpack.c.b16 %v369, %v369
      %v402 = vpack.c.b16 %v370, %v370
      %v403 = vpack.c.b16 %v371, %v371
      %v404 = vpack.c.b16 %v372, %v372
      %v405 = vpack.c.b16 %v373, %v373
      %v406 = vpack.c.b16 %v374, %v374
      %v407 = vpack.c.b16 %v375, %v375
      %v408 = vpack.c.b16 %v376, %v376
      %v409 = vpack.c.b16 %v377, %v377
      %v410 = vpack.c.b16 %v378, %v378
      %v411 = vpack.c.b16 %v379, %v379
      %v412 = vpack.c.b16 %v380, %v380
      %v413 = vpack.c.b16 %v381, %v381
      %v414 = vpack.c.b16 %v382, %v382
      %v415 = vpack.c.b16 %v383, %v383
      %v416 = vpack.c.b16 %v384, %v384
      %v417 = vpack.c.b16 %v385, %v385
      %v418 = vpack.c.b16 %v386, %v386
      %v419 = vpack.c.b16 %v387, %v387
      %v420 = vpack.c.b16 %v388, %v388
      %v421 = vpack.c.b16 %v389, %v389
      %v422 = vpack.c.b16 %v390, %v390
      %v423 = vpack.c.b16 %v391, %v391
      %v424 = vpack.c.b16 %v392, %v392
      %v425 = vpack.c.b16 %v393, %v393
      %v426 = vpack.c.b16 %v394, %v394
      %v427 = vpack.c.b16 %v395, %v395
      %v428 = vpack.c.b16 %v396, %v396
      %v429 = vpack.c.b16 %v397, %v397
      %v430 = vpack.c.b16 %v398, %v398
      %v431 = vpack.c.b16 %v399, %v399
      %vm464 = vcmask 27648
      %465 = vst.msk [vmem:[#allocation2] sm:$0xf] %vm464, %v400
      %466 = vst.msk [vmem:[#allocation2 + $0x4] sm:$0xf] %vm464, %v401
      %467 = vst.msk [vmem:[#allocation2 + $0x8] sm:$0xf] %vm464, %v402
      %468 = vst.msk [vmem:[#allocation2 + $0xc] sm:$0xf] %vm464, %v403
      %469 = vst.msk [vmem:[#allocation2 + $0x10] sm:$0xf] %vm464, %v404
      %470 = vst.msk [vmem:[#allocation2 + $0x14] sm:$0xf] %vm464, %v405
      %471 = vst.msk [vmem:[#allocation2 + $0x18] sm:$0xf] %vm464, %v406
      %472 = vst.msk [vmem:[#allocation2 + $0x1c] sm:$0xf] %vm464, %v407
      %473 = vst.msk [vmem:[#allocation2 + $0x20] sm:$0xf] %vm464, %v408
      %474 = vst.msk [vmem:[#allocation2 + $0x24] sm:$0xf] %vm464, %v409
      %475 = vst.msk [vmem:[#allocation2 + $0x28] sm:$0xf] %vm464, %v410
      %476 = vst.msk [vmem:[#allocation2 + $0x2c] sm:$0xf] %vm464, %v411
      %477 = vst.msk [vmem:[#allocation2 + $0x30] sm:$0xf] %vm464, %v412
      %478 = vst.msk [vmem:[#allocation2 + $0x34] sm:$0xf] %vm464, %v413
      %479 = vst.msk [vmem:[#allocation2 + $0x38] sm:$0xf] %vm464, %v414
      %480 = vst.msk [vmem:[#allocation2 + $0x3c] sm:$0xf] %vm464, %v415
      %481 = vst.msk [vmem:[#allocation2 + $0x40] sm:$0xf] %vm464, %v416
      %482 = vst.msk [vmem:[#allocation2 + $0x44] sm:$0xf] %vm464, %v417
      %483 = vst.msk [vmem:[#allocation2 + $0x48] sm:$0xf] %vm464, %v418
      %484 = vst.msk [vmem:[#allocation2 + $0x4c] sm:$0xf] %vm464, %v419
      %485 = vst.msk [vmem:[#allocation2 + $0x50] sm:$0xf] %vm464, %v420
      %486 = vst.msk [vmem:[#allocation2 + $0x54] sm:$0xf] %vm464, %v421
      %487 = vst.msk [vmem:[#allocation2 + $0x58] sm:$0xf] %vm464, %v422
      %488 = vst.msk [vmem:[#allocation2 + $0x5c] sm:$0xf] %vm464, %v423
      %489 = vst.msk [vmem:[#allocation2 + $0x60] sm:$0xf] %vm464, %v424
      %490 = vst.msk [vmem:[#allocation2 + $0x64] sm:$0xf] %vm464, %v425
      %491 = vst.msk [vmem:[#allocation2 + $0x68] sm:$0xf] %vm464, %v426
      %492 = vst.msk [vmem:[#allocation2 + $0x6c] sm:$0xf] %vm464, %v427
      %493 = vst.msk [vmem:[#allocation2 + $0x70] sm:$0xf] %vm464, %v428
      %494 = vst.msk [vmem:[#allocation2 + $0x74] sm:$0xf] %vm464, %v429
      %495 = vst.msk [vmem:[#allocation2 + $0x78] sm:$0xf] %vm464, %v430
      %496 = vst.msk [vmem:[#allocation2 + $0x7c] sm:$0xf] %vm464, %v431
      %vm545 = vcmask 1046528
      %v546 = vrot.slane %v288, 1
      %v547 = vrot.slane %v289, 1
      %v548 = vsel %vm545, %v546, %v547
      %v549 = vrot.slane %v290, 1
      %v550 = vsel %vm545, %v547, %v549
      %v551 = vrot.slane %v291, 1
      %v552 = vrot.slane %v292, 1
      %v553 = vsel %vm545, %v551, %v552
      %v554 = vrot.slane %v293, 1
      %v555 = vsel %vm545, %v552, %v554
      %v556 = vrot.slane %v294, 1
      %v557 = vrot.slane %v295, 1
      %v558 = vsel %vm545, %v556, %v557
      %v559 = vrot.slane %v296, 1
      %v560 = vsel %vm545, %v557, %v559
      %v561 = vrot.slane %v297, 1
      %v562 = vrot.slane %v298, 1
      %v563 = vsel %vm545, %v561, %v562
      %v564 = vrot.slane %v299, 1
      %v565 = vsel %vm545, %v562, %v564
      %v566 = vrot.slane %v300, 1
      %v567 = vrot.slane %v301, 1
      %v568 = vsel %vm545, %v566, %v567
      %v569 = vrot.slane %v302, 1
      %v570 = vsel %vm545, %v567, %v569
      %v571 = vrot.slane %v303, 1
      %v572 = vrot.slane %v304, 1
      %v573 = vsel %vm545, %v571, %v572
      %v574 = vrot.slane %v305, 1
      %v575 = vsel %vm545, %v572, %v574
      %v576 = vrot.slane %v306, 1
      %v577 = vrot.slane %v307, 1
      %v578 = vsel %vm545, %v576, %v577
      %v579 = vrot.slane %v308, 1
      %v580 = vsel %vm545, %v577, %v579
      %v581 = vrot.slane %v309, 1
      %v582 = vrot.slane %v310, 1
      %v583 = vsel %vm545, %v581, %v582
      %v584 = vrot.slane %v311, 1
      %v585 = vsel %vm545, %v582, %v584
      %v586 = vrot.slane %v312, 1
      %v587 = vrot.slane %v313, 1
      %v588 = vsel %vm545, %v586, %v587
      %v589 = vrot.slane %v314, 1
      %v590 = vsel %vm545, %v587, %v589
      %v591 = vrot.slane %v315, 1
      %v592 = vrot.slane %v316, 1
      %v593 = vsel %vm545, %v591, %v592
      %v594 = vrot.slane %v317, 1
      %v595 = vsel %vm545, %v592, %v594
      %v596 = vrot.slane %v318, 1
      %v597 = vrot.slane %v319, 1
      %v598 = vsel %vm545, %v596, %v597
      %v599 = vrot.slane %v320, 1
      %v600 = vsel %vm545, %v597, %v599
      %v601 = vrot.slane %v321, 1
      %v602 = vrot.slane %v322, 1
      %v603 = vsel %vm545, %v601, %v602
      %v604 = vrot.slane %v323, 1
      %v605 = vsel %vm545, %v602, %v604
      %v606 = vrot.slane %v324, 1
      %v607 = vrot.slane %v325, 1
      %v608 = vsel %vm545, %v606, %v607
      %v609 = vrot.slane %v326, 1
      %v610 = vsel %vm545, %v607, %v609
      %v611 = vrot.slane %v327, 1
      %v612 = vrot.slane %v328, 1
      %v613 = vsel %vm545, %v611, %v612
      %v614 = vrot.slane %v329, 1
      %v615 = vsel %vm545, %v612, %v614
      %v616 = vrot.slane %v330, 1
      %v617 = vrot.slane %v331, 1
      %v618 = vsel %vm545, %v616, %v617
      %v619 = vrot.slane %v332, 1
      %v620 = vsel %vm545, %v617, %v619
      %v621 = vrot.slane %v333, 1
      %v622 = vrot.slane %v334, 1
      %v623 = vsel %vm545, %v621, %v622
      %v624 = vrot.slane %v335, 1
      %v625 = vsel %vm545, %v622, %v624
      %v658 = vpack.c.bf16 %v550, %v548
      %v659 = vpack.c.bf16 %v555, %v553
      %v660 = vpack.c.bf16 %v560, %v558
      %v661 = vpack.c.bf16 %v565, %v563
      %v662 = vpack.c.bf16 %v570, %v568
      %v663 = vpack.c.bf16 %v575, %v573
      %v664 = vpack.c.bf16 %v580, %v578
      %v665 = vpack.c.bf16 %v585, %v583
      %v666 = vpack.c.bf16 %v590, %v588
      %v667 = vpack.c.bf16 %v595, %v593
      %v668 = vpack.c.bf16 %v600, %v598
      %v669 = vpack.c.bf16 %v605, %v603
      %v670 = vpack.c.bf16 %v610, %v608
      %v671 = vpack.c.bf16 %v615, %v613
      %v672 = vpack.c.bf16 %v620, %v618
      %v673 = vpack.c.bf16 %v625, %v623
      %v690 = vunpack.c.l.b16 %v658
      %v691 = vunpack.c.h.b16 %v658
      %v692 = vunpack.c.l.b16 %v659
      %v693 = vunpack.c.h.b16 %v659
      %v694 = vunpack.c.l.b16 %v660
      %v695 = vunpack.c.h.b16 %v660
      %v696 = vunpack.c.l.b16 %v661
      %v697 = vunpack.c.h.b16 %v661
      %v698 = vunpack.c.l.b16 %v662
      %v699 = vunpack.c.h.b16 %v662
      %v700 = vunpack.c.l.b16 %v663
      %v701 = vunpack.c.h.b16 %v663
      %v702 = vunpack.c.l.b16 %v664
      %v703 = vunpack.c.h.b16 %v664
      %v704 = vunpack.c.l.b16 %v665
      %v705 = vunpack.c.h.b16 %v665
      %v706 = vunpack.c.l.b16 %v666
      %v707 = vunpack.c.h.b16 %v666
      %v708 = vunpack.c.l.b16 %v667
      %v709 = vunpack.c.h.b16 %v667
      %v710 = vunpack.c.l.b16 %v668
      %v711 = vunpack.c.h.b16 %v668
      %v712 = vunpack.c.l.b16 %v669
      %v713 = vunpack.c.h.b16 %v669
      %v714 = vunpack.c.l.b16 %v670
      %v715 = vunpack.c.h.b16 %v670
      %v716 = vunpack.c.l.b16 %v671
      %v717 = vunpack.c.h.b16 %v671
      %v718 = vunpack.c.l.b16 %v672
      %v719 = vunpack.c.h.b16 %v672
      %v720 = vunpack.c.l.b16 %v673
      %v721 = vunpack.c.h.b16 %v673
      %v722 = vpack.c.b16 %v690, %v690
      %v723 = vpack.c.b16 %v691, %v691
      %v724 = vpack.c.b16 %v692, %v692
      %v725 = vpack.c.b16 %v693, %v693
      %v726 = vpack.c.b16 %v694, %v694
      %v727 = vpack.c.b16 %v695, %v695
      %v728 = vpack.c.b16 %v696, %v696
      %v729 = vpack.c.b16 %v697, %v697
      %v730 = vpack.c.b16 %v698, %v698
      %v731 = vpack.c.b16 %v699, %v699
      %v732 = vpack.c.b16 %v700, %v700
      %v733 = vpack.c.b16 %v701, %v701
      %v734 = vpack.c.b16 %v702, %v702
      %v735 = vpack.c.b16 %v703, %v703
      %v736 = vpack.c.b16 %v704, %v704
      %v737 = vpack.c.b16 %v705, %v705
      %v738 = vpack.c.b16 %v706, %v706
      %v739 = vpack.c.b16 %v707, %v707
      %v740 = vpack.c.b16 %v708, %v708
      %v741 = vpack.c.b16 %v709, %v709
      %v742 = vpack.c.b16 %v710, %v710
      %v743 = vpack.c.b16 %v711, %v711
      %v744 = vpack.c.b16 %v712, %v712
      %v745 = vpack.c.b16 %v713, %v713
      %v746 = vpack.c.b16 %v714, %v714
      %v747 = vpack.c.b16 %v715, %v715
      %v748 = vpack.c.b16 %v716, %v716
      %v749 = vpack.c.b16 %v717, %v717
      %v750 = vpack.c.b16 %v718, %v718
      %v751 = vpack.c.b16 %v719, %v719
      %v752 = vpack.c.b16 %v720, %v720
      %v753 = vpack.c.b16 %v721, %v721
      %754 = vrot.lane.b32.xlu0 %v722, 4
      %v755 = vpop.permute.xlu0 %754
      %756 = vrot.lane.b32.xlu0 %v723, 4
      %v757 = vpop.permute.xlu0 %756
      %758 = vrot.lane.b32.xlu0 %v724, 4
      %v759 = vpop.permute.xlu0 %758
      %760 = vrot.lane.b32.xlu0 %v725, 4
      %v761 = vpop.permute.xlu0 %760
      %762 = vrot.lane.b32.xlu0 %v726, 4
      %v763 = vpop.permute.xlu0 %762
      %764 = vrot.lane.b32.xlu0 %v727, 4
      %v765 = vpop.permute.xlu0 %764
      %766 = vrot.lane.b32.xlu0 %v728, 4
      %v767 = vpop.permute.xlu0 %766
      %768 = vrot.lane.b32.xlu0 %v729, 4
      %v769 = vpop.permute.xlu0 %768
      %770 = vrot.lane.b32.xlu0 %v730, 4
      %v771 = vpop.permute.xlu0 %770
      %772 = vrot.lane.b32.xlu0 %v731, 4
      %v773 = vpop.permute.xlu0 %772
      %774 = vrot.lane.b32.xlu0 %v732, 4
      %v775 = vpop.permute.xlu0 %774
      %776 = vrot.lane.b32.xlu0 %v733, 4
      %v777 = vpop.permute.xlu0 %776
      %778 = vrot.lane.b32.xlu0 %v734, 4
      %v779 = vpop.permute.xlu0 %778
      %780 = vrot.lane.b32.xlu0 %v735, 4
      %v781 = vpop.permute.xlu0 %780
      %782 = vrot.lane.b32.xlu0 %v736, 4
      %v783 = vpop.permute.xlu0 %782
      %784 = vrot.lane.b32.xlu0 %v737, 4
      %v785 = vpop.permute.xlu0 %784
      %786 = vrot.lane.b32.xlu0 %v738, 4
      %v787 = vpop.permute.xlu0 %786
      %788 = vrot.lane.b32.xlu0 %v739, 4
      %v789 = vpop.permute.xlu0 %788
      %790 = vrot.lane.b32.xlu0 %v740, 4
      %v791 = vpop.permute.xlu0 %790
      %792 = vrot.lane.b32.xlu0 %v741, 4
      %v793 = vpop.permute.xlu0 %792
      %794 = vrot.lane.b32.xlu0 %v742, 4
      %v795 = vpop.permute.xlu0 %794
      %796 = vrot.lane.b32.xlu0 %v743, 4
      %v797 = vpop.permute.xlu0 %796
      %798 = vrot.lane.b32.xlu0 %v744, 4
      %v799 = vpop.permute.xlu0 %798
      %800 = vrot.lane.b32.xlu0 %v745, 4
      %v801 = vpop.permute.xlu0 %800
      %802 = vrot.lane.b32.xlu0 %v746, 4
      %v803 = vpop.permute.xlu0 %802
      %804 = vrot.lane.b32.xlu0 %v747, 4
      %v805 = vpop.permute.xlu0 %804
      %806 = vrot.lane.b32.xlu0 %v748, 4
      %v807 = vpop.permute.xlu0 %806
      %808 = vrot.lane.b32.xlu0 %v749, 4
      %v809 = vpop.permute.xlu0 %808
      %810 = vrot.lane.b32.xlu0 %v750, 4
      %v811 = vpop.permute.xlu0 %810
      %812 = vrot.lane.b32.xlu0 %v751, 4
      %v813 = vpop.permute.xlu0 %812
      %814 = vrot.lane.b32.xlu0 %v752, 4
      %v815 = vpop.permute.xlu0 %814
      %816 = vrot.lane.b32.xlu0 %v753, 4
      %v817 = vpop.permute.xlu0 %816
      %vm850 = vcmask 60448
      %851 = vst.msk [vmem:[#allocation2] sm:$0xf] %vm850, %v755
      %852 = vst.msk [vmem:[#allocation2 + $0x4] sm:$0xf] %vm850, %v757
      %853 = vst.msk [vmem:[#allocation2 + $0x8] sm:$0xf] %vm850, %v759
      %854 = vst.msk [vmem:[#allocation2 + $0xc] sm:$0xf] %vm850, %v761
      %855 = vst.msk [vmem:[#allocation2 + $0x10] sm:$0xf] %vm850, %v763
      %856 = vst.msk [vmem:[#allocation2 + $0x14] sm:$0xf] %vm850, %v765
      %857 = vst.msk [vmem:[#allocation2 + $0x18] sm:$0xf] %vm850, %v767
      %858 = vst.msk [vmem:[#allocation2 + $0x1c] sm:$0xf] %vm850, %v769
      %859 = vst.msk [vmem:[#allocation2 + $0x20] sm:$0xf] %vm850, %v771
      %860 = vst.msk [vmem:[#allocation2 + $0x24] sm:$0xf] %vm850, %v773
      %861 = vst.msk [vmem:[#allocation2 + $0x28] sm:$0xf] %vm850, %v775
      %862 = vst.msk [vmem:[#allocation2 + $0x2c] sm:$0xf] %vm850, %v777
      %863 = vst.msk [vmem:[#allocation2 + $0x30] sm:$0xf] %vm850, %v779
      %864 = vst.msk [vmem:[#allocation2 + $0x34] sm:$0xf] %vm850, %v781
      %865 = vst.msk [vmem:[#allocation2 + $0x38] sm:$0xf] %vm850, %v783
      %866 = vst.msk [vmem:[#allocation2 + $0x3c] sm:$0xf] %vm850, %v785
      %867 = vst.msk [vmem:[#allocation2 + $0x40] sm:$0xf] %vm850, %v787
      %868 = vst.msk [vmem:[#allocation2 + $0x44] sm:$0xf] %vm850, %v789
      %869 = vst.msk [vmem:[#allocation2 + $0x48] sm:$0xf] %vm850, %v791
      %870 = vst.msk [vmem:[#allocation2 + $0x4c] sm:$0xf] %vm850, %v793
      %871 = vst.msk [vmem:[#allocation2 + $0x50] sm:$0xf] %vm850, %v795
      %872 = vst.msk [vmem:[#allocation2 + $0x54] sm:$0xf] %vm850, %v797
      %873 = vst.msk [vmem:[#allocation2 + $0x58] sm:$0xf] %vm850, %v799
      %874 = vst.msk [vmem:[#allocation2 + $0x5c] sm:$0xf] %vm850, %v801
      %875 = vst.msk [vmem:[#allocation2 + $0x60] sm:$0xf] %vm850, %v803
      %876 = vst.msk [vmem:[#allocation2 + $0x64] sm:$0xf] %vm850, %v805
      %877 = vst.msk [vmem:[#allocation2 + $0x68] sm:$0xf] %vm850, %v807
      %878 = vst.msk [vmem:[#allocation2 + $0x6c] sm:$0xf] %vm850, %v809
      %879 = vst.msk [vmem:[#allocation2 + $0x70] sm:$0xf] %vm850, %v811
      %880 = vst.msk [vmem:[#allocation2 + $0x74] sm:$0xf] %vm850, %v813
      %881 = vst.msk [vmem:[#allocation2 + $0x78] sm:$0xf] %vm850, %v815
      %882 = vst.msk [vmem:[#allocation2 + $0x7c] sm:$0xf] %vm850, %v817
      %vm883 = vcmask 1045504
      %v884 = vrot.slane %v288, 2
      %v885 = vrot.slane %v289, 2
      %v886 = vsel %vm883, %v884, %v885
      %v887 = vrot.slane %v290, 2
      %v888 = vsel %vm883, %v885, %v887
      %v889 = vrot.slane %v291, 2
      %v890 = vrot.slane %v292, 2
      %v891 = vsel %vm883, %v889, %v890
      %v892 = vrot.slane %v293, 2
      %v893 = vsel %vm883, %v890, %v892
      %v894 = vrot.slane %v294, 2
      %v895 = vrot.slane %v295, 2
      %v896 = vsel %vm883, %v894, %v895
      %v897 = vrot.slane %v296, 2
      %v898 = vsel %vm883, %v895, %v897
      %v899 = vrot.slane %v297, 2
      %v900 = vrot.slane %v298, 2
      %v901 = vsel %vm883, %v899, %v900
      %v902 = vrot.slane %v299, 2
      %v903 = vsel %vm883, %v900, %v902
      %v904 = vrot.slane %v300, 2
      %v905 = vrot.slane %v301, 2
      %v906 = vsel %vm883, %v904, %v905
      %v907 = vrot.slane %v302, 2
      %v908 = vsel %vm883, %v905, %v907
      %v909 = vrot.slane %v303, 2
      %v910 = vrot.slane %v304, 2
      %v911 = vsel %vm883, %v909, %v910
      %v912 = vrot.slane %v305, 2
      %v913 = vsel %vm883, %v910, %v912
      %v914 = vrot.slane %v306, 2
      %v915 = vrot.slane %v307, 2
      %v916 = vsel %vm883, %v914, %v915
      %v917 = vrot.slane %v308, 2
      %v918 = vsel %vm883, %v915, %v917
      %v919 = vrot.slane %v309, 2
      %v920 = vrot.slane %v310, 2
      %v921 = vsel %vm883, %v919, %v920
      %v922 = vrot.slane %v311, 2
      %v923 = vsel %vm883, %v920, %v922
      %v924 = vrot.slane %v312, 2
      %v925 = vrot.slane %v313, 2
      %v926 = vsel %vm883, %v924, %v925
      %v927 = vrot.slane %v314, 2
      %v928 = vsel %vm883, %v925, %v927
      %v929 = vrot.slane %v315, 2
      %v930 = vrot.slane %v316, 2
      %v931 = vsel %vm883, %v929, %v930
      %v932 = vrot.slane %v317, 2
      %v933 = vsel %vm883, %v930, %v932
      %v934 = vrot.slane %v318, 2
      %v935 = vrot.slane %v319, 2
      %v936 = vsel %vm883, %v934, %v935
      %v937 = vrot.slane %v320, 2
      %v938 = vsel %vm883, %v935, %v937
      %v939 = vrot.slane %v321, 2
      %v940 = vrot.slane %v322, 2
      %v941 = vsel %vm883, %v939, %v940
      %v942 = vrot.slane %v323, 2
      %v943 = vsel %vm883, %v940, %v942
      %v944 = vrot.slane %v324, 2
      %v945 = vrot.slane %v325, 2
      %v946 = vsel %vm883, %v944, %v945
      %v947 = vrot.slane %v326, 2
      %v948 = vsel %vm883, %v945, %v947
      %v949 = vrot.slane %v327, 2
      %v950 = vrot.slane %v328, 2
      %v951 = vsel %vm883, %v949, %v950
      %v952 = vrot.slane %v329, 2
      %v953 = vsel %vm883, %v950, %v952
      %v954 = vrot.slane %v330, 2
      %v955 = vrot.slane %v331, 2
      %v956 = vsel %vm883, %v954, %v955
      %v957 = vrot.slane %v332, 2
      %v958 = vsel %vm883, %v955, %v957
      %v959 = vrot.slane %v333, 2
      %v960 = vrot.slane %v334, 2
      %v961 = vsel %vm883, %v959, %v960
      %v962 = vrot.slane %v335, 2
      %v963 = vsel %vm883, %v960, %v962
      %v996 = vpack.c.bf16 %v888, %v886
      %v997 = vpack.c.bf16 %v893, %v891
      %v998 = vpack.c.bf16 %v898, %v896
      %v999 = vpack.c.bf16 %v903, %v901
      %v1000 = vpack.c.bf16 %v908, %v906
      %v1001 = vpack.c.bf16 %v913, %v911
      %v1002 = vpack.c.bf16 %v918, %v916
      %v1003 = vpack.c.bf16 %v923, %v921
      %v1004 = vpack.c.bf16 %v928, %v926
      %v1005 = vpack.c.bf16 %v933, %v931
      %v1006 = vpack.c.bf16 %v938, %v936
      %v1007 = vpack.c.bf16 %v943, %v941
      %v1008 = vpack.c.bf16 %v948, %v946
      %v1009 = vpack.c.bf16 %v953, %v951
      %v1010 = vpack.c.bf16 %v958, %v956
      %v1011 = vpack.c.bf16 %v963, %v961
      %v1028 = vunpack.c.l.b16 %v996
      %v1029 = vunpack.c.h.b16 %v996
      %v1030 = vunpack.c.l.b16 %v997
      %v1031 = vunpack.c.h.b16 %v997
      %v1032 = vunpack.c.l.b16 %v998
      %v1033 = vunpack.c.h.b16 %v998
      %v1034 = vunpack.c.l.b16 %v999
      %v1035 = vunpack.c.h.b16 %v999
      %v1036 = vunpack.c.l.b16 %v1000
      %v1037 = vunpack.c.h.b16 %v1000
      %v1038 = vunpack.c.l.b16 %v1001
      %v1039 = vunpack.c.h.b16 %v1001
      %v1040 = vunpack.c.l.b16 %v1002
      %v1041 = vunpack.c.h.b16 %v1002
      %v1042 = vunpack.c.l.b16 %v1003
      %v1043 = vunpack.c.h.b16 %v1003
      %v1044 = vunpack.c.l.b16 %v1004
      %v1045 = vunpack.c.h.b16 %v1004
      %v1046 = vunpack.c.l.b16 %v1005
      %v1047 = vunpack.c.h.b16 %v1005
      %v1048 = vunpack.c.l.b16 %v1006
      %v1049 = vunpack.c.h.b16 %v1006
      %v1050 = vunpack.c.l.b16 %v1007
      %v1051 = vunpack.c.h.b16 %v1007
      %v1052 = vunpack.c.l.b16 %v1008
      %v1053 = vunpack.c.h.b16 %v1008
      %v1054 = vunpack.c.l.b16 %v1009
      %v1055 = vunpack.c.h.b16 %v1009
      %v1056 = vunpack.c.l.b16 %v1010
      %v1057 = vunpack.c.h.b16 %v1010
      %v1058 = vunpack.c.l.b16 %v1011
      %v1059 = vunpack.c.h.b16 %v1011
      %v1060 = vpack.c.b16 %v1028, %v1028
      %v1061 = vpack.c.b16 %v1029, %v1029
      %v1062 = vpack.c.b16 %v1030, %v1030
      %v1063 = vpack.c.b16 %v1031, %v1031
      %v1064 = vpack.c.b16 %v1032, %v1032
      %v1065 = vpack.c.b16 %v1033, %v1033
      %v1066 = vpack.c.b16 %v1034, %v1034
      %v1067 = vpack.c.b16 %v1035, %v1035
      %v1068 = vpack.c.b16 %v1036, %v1036
      %v1069 = vpack.c.b16 %v1037, %v1037
      %v1070 = vpack.c.b16 %v1038, %v1038
      %v1071 = vpack.c.b16 %v1039, %v1039
      %v1072 = vpack.c.b16 %v1040, %v1040
      %v1073 = vpack.c.b16 %v1041, %v1041
      %v1074 = vpack.c.b16 %v1042, %v1042
      %v1075 = vpack.c.b16 %v1043, %v1043
      %v1076 = vpack.c.b16 %v1044, %v1044
      %v1077 = vpack.c.b16 %v1045, %v1045
      %v1078 = vpack.c.b16 %v1046, %v1046
      %v1079 = vpack.c.b16 %v1047, %v1047
      %v1080 = vpack.c.b16 %v1048, %v1048
      %v1081 = vpack.c.b16 %v1049, %v1049
      %v1082 = vpack.c.b16 %v1050, %v1050
      %v1083 = vpack.c.b16 %v1051, %v1051
      %v1084 = vpack.c.b16 %v1052, %v1052
      %v1085 = vpack.c.b16 %v1053, %v1053
      %v1086 = vpack.c.b16 %v1054, %v1054
      %v1087 = vpack.c.b16 %v1055, %v1055
      %v1088 = vpack.c.b16 %v1056, %v1056
      %v1089 = vpack.c.b16 %v1057, %v1057
      %v1090 = vpack.c.b16 %v1058, %v1058
      %v1091 = vpack.c.b16 %v1059, %v1059
      %1092 = vrot.lane.b32.xlu0 %v1060, 8
      %v1093 = vpop.permute.xlu0 %1092
      %1094 = vrot.lane.b32.xlu0 %v1061, 8
      %v1095 = vpop.permute.xlu0 %1094
      %1096 = vrot.lane.b32.xlu0 %v1062, 8
      %v1097 = vpop.permute.xlu0 %1096
      %1098 = vrot.lane.b32.xlu0 %v1063, 8
      %v1099 = vpop.permute.xlu0 %1098
      %1100 = vrot.lane.b32.xlu0 %v1064, 8
      %v1101 = vpop.permute.xlu0 %1100
      %1102 = vrot.lane.b32.xlu0 %v1065, 8
      %v1103 = vpop.permute.xlu0 %1102
      %1104 = vrot.lane.b32.xlu0 %v1066, 8
      %v1105 = vpop.permute.xlu0 %1104
      %1106 = vrot.lane.b32.xlu0 %v1067, 8
      %v1107 = vpop.permute.xlu0 %1106
      %1108 = vrot.lane.b32.xlu0 %v1068, 8
      %v1109 = vpop.permute.xlu0 %1108
      %1110 = vrot.lane.b32.xlu0 %v1069, 8
      %v1111 = vpop.permute.xlu0 %1110
      %1112 = vrot.lane.b32.xlu0 %v1070, 8
      %v1113 = vpop.permute.xlu0 %1112
      %1114 = vrot.lane.b32.xlu0 %v1071, 8
      %v1115 = vpop.permute.xlu0 %1114
      %1116 = vrot.lane.b32.xlu0 %v1072, 8
      %v1117 = vpop.permute.xlu0 %1116
      %1118 = vrot.lane.b32.xlu0 %v1073, 8
      %v1119 = vpop.permute.xlu0 %1118
      %1120 = vrot.lane.b32.xlu0 %v1074, 8
      %v1121 = vpop.permute.xlu0 %1120
      %1122 = vrot.lane.b32.xlu0 %v1075, 8
      %v1123 = vpop.permute.xlu0 %1122
      %1124 = vrot.lane.b32.xlu0 %v1076, 8
      %v1125 = vpop.permute.xlu0 %1124
      %1126 = vrot.lane.b32.xlu0 %v1077, 8
      %v1127 = vpop.permute.xlu0 %1126
      %1128 = vrot.lane.b32.xlu0 %v1078, 8
      %v1129 = vpop.permute.xlu0 %1128
      %1130 = vrot.lane.b32.xlu0 %v1079, 8
      %v1131 = vpop.permute.xlu0 %1130
      %1132 = vrot.lane.b32.xlu0 %v1080, 8
      %v1133 = vpop.permute.xlu0 %1132
      %1134 = vrot.lane.b32.xlu0 %v1081, 8
      %v1135 = vpop.permute.xlu0 %1134
      %1136 = vrot.lane.b32.xlu0 %v1082, 8
      %v1137 = vpop.permute.xlu0 %1136
      %1138 = vrot.lane.b32.xlu0 %v1083, 8
      %v1139 = vpop.permute.xlu0 %1138
      %1140 = vrot.lane.b32.xlu0 %v1084, 8
      %v1141 = vpop.permute.xlu0 %1140
      %1142 = vrot.lane.b32.xlu0 %v1085, 8
      %v1143 = vpop.permute.xlu0 %1142
      %1144 = vrot.lane.b32.xlu0 %v1086, 8
      %v1145 = vpop.permute.xlu0 %1144
      %1146 = vrot.lane.b32.xlu0 %v1087, 8
      %v1147 = vpop.permute.xlu0 %1146
      %1148 = vrot.lane.b32.xlu0 %v1088, 8
      %v1149 = vpop.permute.xlu0 %1148
      %1150 = vrot.lane.b32.xlu0 %v1089, 8
      %v1151 = vpop.permute.xlu0 %1150
      %1152 = vrot.lane.b32.xlu0 %v1090, 8
      %v1153 = vpop.permute.xlu0 %1152
      %1154 = vrot.lane.b32.xlu0 %v1091, 8
      %v1155 = vpop.permute.xlu0 %1154
      %vm1188 = vcmask 93248
      %1189 = vst.msk [vmem:[#allocation2] sm:$0xf] %vm1188, %v1093
      %1190 = vst.msk [vmem:[#allocation2 + $0x4] sm:$0xf] %vm1188, %v1095
      %1191 = vst.msk [vmem:[#allocation2 + $0x8] sm:$0xf] %vm1188, %v1097
      %1192 = vst.msk [vmem:[#allocation2 + $0xc] sm:$0xf] %vm1188, %v1099
      %1193 = vst.msk [vmem:[#allocation2 + $0x10] sm:$0xf] %vm1188, %v1101
      %1194 = vst.msk [vmem:[#allocation2 + $0x14] sm:$0xf] %vm1188, %v1103
      %1195 = vst.msk [vmem:[#allocation2 + $0x18] sm:$0xf] %vm1188, %v1105
      %1196 = vst.msk [vmem:[#allocation2 + $0x1c] sm:$0xf] %vm1188, %v1107
      %1197 = vst.msk [vmem:[#allocation2 + $0x20] sm:$0xf] %vm1188, %v1109
      %1198 = vst.msk [vmem:[#allocation2 + $0x24] sm:$0xf] %vm1188, %v1111
      %1199 = vst.msk [vmem:[#allocation2 + $0x28] sm:$0xf] %vm1188, %v1113
      %1200 = vst.msk [vmem:[#allocation2 + $0x2c] sm:$0xf] %vm1188, %v1115
      %1201 = vst.msk [vmem:[#allocation2 + $0x30] sm:$0xf] %vm1188, %v1117
      %1202 = vst.msk [vmem:[#allocation2 + $0x34] sm:$0xf] %vm1188, %v1119
      %1203 = vst.msk [vmem:[#allocation2 + $0x38] sm:$0xf] %vm1188, %v1121
      %1204 = vst.msk [vmem:[#allocation2 + $0x3c] sm:$0xf] %vm1188, %v1123
      %1205 = vst.msk [vmem:[#allocation2 + $0x40] sm:$0xf] %vm1188, %v1125
      %1206 = vst.msk [vmem:[#allocation2 + $0x44] sm:$0xf] %vm1188, %v1127
      %1207 = vst.msk [vmem:[#allocation2 + $0x48] sm:$0xf] %vm1188, %v1129
      %1208 = vst.msk [vmem:[#allocation2 + $0x4c] sm:$0xf] %vm1188, %v1131
      %1209 = vst.msk [vmem:[#allocation2 + $0x50] sm:$0xf] %vm1188, %v1133
      %1210 = vst.msk [vmem:[#allocation2 + $0x54] sm:$0xf] %vm1188, %v1135
      %1211 = vst.msk [vmem:[#allocation2 + $0x58] sm:$0xf] %vm1188, %v1137
      %1212 = vst.msk [vmem:[#allocation2 + $0x5c] sm:$0xf] %vm1188, %v1139
      %1213 = vst.msk [vmem:[#allocation2 + $0x60] sm:$0xf] %vm1188, %v1141
      %1214 = vst.msk [vmem:[#allocation2 + $0x64] sm:$0xf] %vm1188, %v1143
      %1215 = vst.msk [vmem:[#allocation2 + $0x68] sm:$0xf] %vm1188, %v1145
      %1216 = vst.msk [vmem:[#allocation2 + $0x6c] sm:$0xf] %vm1188, %v1147
      %1217 = vst.msk [vmem:[#allocation2 + $0x70] sm:$0xf] %vm1188, %v1149
      %1218 = vst.msk [vmem:[#allocation2 + $0x74] sm:$0xf] %vm1188, %v1151
      %1219 = vst.msk [vmem:[#allocation2 + $0x78] sm:$0xf] %vm1188, %v1153
      %1220 = vst.msk [vmem:[#allocation2 + $0x7c] sm:$0xf] %vm1188, %v1155
      %s1221 = sadd.s32 %s236, 1
      %s1222 = smul.u32 %s1221, 3
      %s1223 = smul.addr %s1222, 4
      %s1224 = scalar_lea.vmem %s212, %s1223
      %v1225 = vld [vmem:[%s1224] sm:$0xf]
      %v1226 = vld [vmem:[%s1224 + $0x4] sm:$0xf]
      %v1227 = vld [vmem:[%s1224 + $0x8] sm:$0x1]
      %v1228 = vld [vmem:[%s1224 + $0xc] sm:$0xf]
      %v1229 = vld [vmem:[%s1224 + $0x10] sm:$0xf]
      %v1230 = vld [vmem:[%s1224 + $0x14] sm:$0x1]
      %v1231 = vld [vmem:[%s1224 + $0x18] sm:$0xf]
      %v1232 = vld [vmem:[%s1224 + $0x1c] sm:$0xf]
      %v1233 = vld [vmem:[%s1224 + $0x20] sm:$0x1]
      %v1234 = vld [vmem:[%s1224 + $0x24] sm:$0xf]
      %v1235 = vld [vmem:[%s1224 + $0x28] sm:$0xf]
      %v1236 = vld [vmem:[%s1224 + $0x2c] sm:$0x1]
      %v1237 = vld [vmem:[%s1224 + $0x30] sm:$0xf]
      %v1238 = vld [vmem:[%s1224 + $0x34] sm:$0xf]
      %v1239 = vld [vmem:[%s1224 + $0x38] sm:$0x1]
      %v1240 = vld [vmem:[%s1224 + $0x3c] sm:$0xf]
      %v1241 = vld [vmem:[%s1224 + $0x40] sm:$0xf]
      %v1242 = vld [vmem:[%s1224 + $0x44] sm:$0x1]
      %v1243 = vld [vmem:[%s1224 + $0x48] sm:$0xf]
      %v1244 = vld [vmem:[%s1224 + $0x4c] sm:$0xf]
      %v1245 = vld [vmem:[%s1224 + $0x50] sm:$0x1]
      %v1246 = vld [vmem:[%s1224 + $0x54] sm:$0xf]
      %v1247 = vld [vmem:[%s1224 + $0x58] sm:$0xf]
      %v1248 = vld [vmem:[%s1224 + $0x5c] sm:$0x1]
      %v1249 = vld [vmem:[%s1224 + $0x60] sm:$0xf]
      %v1250 = vld [vmem:[%s1224 + $0x64] sm:$0xf]
      %v1251 = vld [vmem:[%s1224 + $0x68] sm:$0x1]
      %v1252 = vld [vmem:[%s1224 + $0x6c] sm:$0xf]
      %v1253 = vld [vmem:[%s1224 + $0x70] sm:$0xf]
      %v1254 = vld [vmem:[%s1224 + $0x74] sm:$0x1]
      %v1255 = vld [vmem:[%s1224 + $0x78] sm:$0xf]
      %v1256 = vld [vmem:[%s1224 + $0x7c] sm:$0xf]
      %v1257 = vld [vmem:[%s1224 + $0x80] sm:$0x1]
      %v1258 = vld [vmem:[%s1224 + $0x84] sm:$0xf]
      %v1259 = vld [vmem:[%s1224 + $0x88] sm:$0xf]
      %v1260 = vld [vmem:[%s1224 + $0x8c] sm:$0x1]
      %v1261 = vld [vmem:[%s1224 + $0x90] sm:$0xf]
      %v1262 = vld [vmem:[%s1224 + $0x94] sm:$0xf]
      %v1263 = vld [vmem:[%s1224 + $0x98] sm:$0x1]
      %v1264 = vld [vmem:[%s1224 + $0x9c] sm:$0xf]
      %v1265 = vld [vmem:[%s1224 + $0xa0] sm:$0xf]
      %v1266 = vld [vmem:[%s1224 + $0xa4] sm:$0x1]
      %v1267 = vld [vmem:[%s1224 + $0xa8] sm:$0xf]
      %v1268 = vld [vmem:[%s1224 + $0xac] sm:$0xf]
      %v1269 = vld [vmem:[%s1224 + $0xb0] sm:$0x1]
      %v1270 = vld [vmem:[%s1224 + $0xb4] sm:$0xf]
      %v1271 = vld [vmem:[%s1224 + $0xb8] sm:$0xf]
      %v1272 = vld [vmem:[%s1224 + $0xbc] sm:$0x1]
      %v1273 = vunpack.c.l.bf16 %v1225
      %v1274 = vunpack.c.l.bf16 %v1226
      %v1275 = vunpack.c.l.bf16 %v1227
      %v1276 = vunpack.c.l.bf16 %v1228
      %v1277 = vunpack.c.l.bf16 %v1229
      %v1278 = vunpack.c.l.bf16 %v1230
      %v1279 = vunpack.c.l.bf16 %v1231
      %v1280 = vunpack.c.l.bf16 %v1232
      %v1281 = vunpack.c.l.bf16 %v1233
      %v1282 = vunpack.c.l.bf16 %v1234
      %v1283 = vunpack.c.l.bf16 %v1235
      %v1284 = vunpack.c.l.bf16 %v1236
      %v1285 = vunpack.c.l.bf16 %v1237
      %v1286 = vunpack.c.l.bf16 %v1238
      %v1287 = vunpack.c.l.bf16 %v1239
      %v1288 = vunpack.c.l.bf16 %v1240
      %v1289 = vunpack.c.l.bf16 %v1241
      %v1290 = vunpack.c.l.bf16 %v1242
      %v1291 = vunpack.c.l.bf16 %v1243
      %v1292 = vunpack.c.l.bf16 %v1244
      %v1293 = vunpack.c.l.bf16 %v1245
      %v1294 = vunpack.c.l.bf16 %v1246
      %v1295 = vunpack.c.l.bf16 %v1247
      %v1296 = vunpack.c.l.bf16 %v1248
      %v1297 = vunpack.c.l.bf16 %v1249
      %v1298 = vunpack.c.l.bf16 %v1250
      %v1299 = vunpack.c.l.bf16 %v1251
      %v1300 = vunpack.c.l.bf16 %v1252
      %v1301 = vunpack.c.l.bf16 %v1253
      %v1302 = vunpack.c.l.bf16 %v1254
      %v1303 = vunpack.c.l.bf16 %v1255
      %v1304 = vunpack.c.l.bf16 %v1256
      %v1305 = vunpack.c.l.bf16 %v1257
      %v1306 = vunpack.c.l.bf16 %v1258
      %v1307 = vunpack.c.l.bf16 %v1259
      %v1308 = vunpack.c.l.bf16 %v1260
      %v1309 = vunpack.c.l.bf16 %v1261
      %v1310 = vunpack.c.l.bf16 %v1262
      %v1311 = vunpack.c.l.bf16 %v1263
      %v1312 = vunpack.c.l.bf16 %v1264
      %v1313 = vunpack.c.l.bf16 %v1265
      %v1314 = vunpack.c.l.bf16 %v1266
      %v1315 = vunpack.c.l.bf16 %v1267
      %v1316 = vunpack.c.l.bf16 %v1268
      %v1317 = vunpack.c.l.bf16 %v1269
      %v1318 = vunpack.c.l.bf16 %v1270
      %v1319 = vunpack.c.l.bf16 %v1271
      %v1320 = vunpack.c.l.bf16 %v1272
      %v1321 = vpack.c.bf16 %v1274, %v1273
      %v1322 = vpack.c.bf16 %v1277, %v1276
      %v1323 = vpack.c.bf16 %v1280, %v1279
      %v1324 = vpack.c.bf16 %v1283, %v1282
      %v1325 = vpack.c.bf16 %v1286, %v1285
      %v1326 = vpack.c.bf16 %v1289, %v1288
      %v1327 = vpack.c.bf16 %v1292, %v1291
      %v1328 = vpack.c.bf16 %v1295, %v1294
      %v1329 = vpack.c.bf16 %v1298, %v1297
      %v1330 = vpack.c.bf16 %v1301, %v1300
      %v1331 = vpack.c.bf16 %v1304, %v1303
      %v1332 = vpack.c.bf16 %v1307, %v1306
      %v1333 = vpack.c.bf16 %v1310, %v1309
      %v1334 = vpack.c.bf16 %v1313, %v1312
      %v1335 = vpack.c.bf16 %v1316, %v1315
      %v1336 = vpack.c.bf16 %v1319, %v1318
      %v1353 = vunpack.c.l.b16 %v1321
      %v1354 = vunpack.c.h.b16 %v1321
      %v1355 = vunpack.c.l.b16 %v1322
      %v1356 = vunpack.c.h.b16 %v1322
      %v1357 = vunpack.c.l.b16 %v1323
      %v1358 = vunpack.c.h.b16 %v1323
      %v1359 = vunpack.c.l.b16 %v1324
      %v1360 = vunpack.c.h.b16 %v1324
      %v1361 = vunpack.c.l.b16 %v1325
      %v1362 = vunpack.c.h.b16 %v1325
      %v1363 = vunpack.c.l.b16 %v1326
      %v1364 = vunpack.c.h.b16 %v1326
      %v1365 = vunpack.c.l.b16 %v1327
      %v1366 = vunpack.c.h.b16 %v1327
      %v1367 = vunpack.c.l.b16 %v1328
      %v1368 = vunpack.c.h.b16 %v1328
      %v1369 = vunpack.c.l.b16 %v1329
      %v1370 = vunpack.c.h.b16 %v1329
      %v1371 = vunpack.c.l.b16 %v1330
      %v1372 = vunpack.c.h.b16 %v1330
      %v1373 = vunpack.c.l.b16 %v1331
      %v1374 = vunpack.c.h.b16 %v1331
      %v1375 = vunpack.c.l.b16 %v1332
      %v1376 = vunpack.c.h.b16 %v1332
      %v1377 = vunpack.c.l.b16 %v1333
      %v1378 = vunpack.c.h.b16 %v1333
      %v1379 = vunpack.c.l.b16 %v1334
      %v1380 = vunpack.c.h.b16 %v1334
      %v1381 = vunpack.c.l.b16 %v1335
      %v1382 = vunpack.c.h.b16 %v1335
      %v1383 = vunpack.c.l.b16 %v1336
      %v1384 = vunpack.c.h.b16 %v1336
      %v1385 = vpack.c.b16 %v1353, %v1353
      %v1386 = vpack.c.b16 %v1354, %v1354
      %v1387 = vpack.c.b16 %v1355, %v1355
      %v1388 = vpack.c.b16 %v1356, %v1356
      %v1389 = vpack.c.b16 %v1357, %v1357
      %v1390 = vpack.c.b16 %v1358, %v1358
      %v1391 = vpack.c.b16 %v1359, %v1359
      %v1392 = vpack.c.b16 %v1360, %v1360
      %v1393 = vpack.c.b16 %v1361, %v1361
      %v1394 = vpack.c.b16 %v1362, %v1362
      %v1395 = vpack.c.b16 %v1363, %v1363
      %v1396 = vpack.c.b16 %v1364, %v1364
      %v1397 = vpack.c.b16 %v1365, %v1365
      %v1398 = vpack.c.b16 %v1366, %v1366
      %v1399 = vpack.c.b16 %v1367, %v1367
      %v1400 = vpack.c.b16 %v1368, %v1368
      %v1401 = vpack.c.b16 %v1369, %v1369
      %v1402 = vpack.c.b16 %v1370, %v1370
      %v1403 = vpack.c.b16 %v1371, %v1371
      %v1404 = vpack.c.b16 %v1372, %v1372
      %v1405 = vpack.c.b16 %v1373, %v1373
      %v1406 = vpack.c.b16 %v1374, %v1374
      %v1407 = vpack.c.b16 %v1375, %v1375
      %v1408 = vpack.c.b16 %v1376, %v1376
      %v1409 = vpack.c.b16 %v1377, %v1377
      %v1410 = vpack.c.b16 %v1378, %v1378
      %v1411 = vpack.c.b16 %v1379, %v1379
      %v1412 = vpack.c.b16 %v1380, %v1380
      %v1413 = vpack.c.b16 %v1381, %v1381
      %v1414 = vpack.c.b16 %v1382, %v1382
      %v1415 = vpack.c.b16 %v1383, %v1383
      %v1416 = vpack.c.b16 %v1384, %v1384
      %1417 = vrot.lane.b32.xlu0 %v1385, 12
      %v1418 = vpop.permute.xlu0 %1417
      %1419 = vrot.lane.b32.xlu0 %v1386, 12
      %v1420 = vpop.permute.xlu0 %1419
      %1421 = vrot.lane.b32.xlu0 %v1387, 12
      %v1422 = vpop.permute.xlu0 %1421
      %1423 = vrot.lane.b32.xlu0 %v1388, 12
      %v1424 = vpop.permute.xlu0 %1423
      %1425 = vrot.lane.b32.xlu0 %v1389, 12
      %v1426 = vpop.permute.xlu0 %1425
      %1427 = vrot.lane.b32.xlu0 %v1390, 12
      %v1428 = vpop.permute.xlu0 %1427
      %1429 = vrot.lane.b32.xlu0 %v1391, 12
      %v1430 = vpop.permute.xlu0 %1429
      %1431 = vrot.lane.b32.xlu0 %v1392, 12
      %v1432 = vpop.permute.xlu0 %1431
      %1433 = vrot.lane.b32.xlu0 %v1393, 12
      %v1434 = vpop.permute.xlu0 %1433
      %1435 = vrot.lane.b32.xlu0 %v1394, 12
      %v1436 = vpop.permute.xlu0 %1435
      %1437 = vrot.lane.b32.xlu0 %v1395, 12
      %v1438 = vpop.permute.xlu0 %1437
      %1439 = vrot.lane.b32.xlu0 %v1396, 12
      %v1440 = vpop.permute.xlu0 %1439
      %1441 = vrot.lane.b32.xlu0 %v1397, 12
      %v1442 = vpop.permute.xlu0 %1441
      %1443 = vrot.lane.b32.xlu0 %v1398, 12
      %v1444 = vpop.permute.xlu0 %1443
      %1445 = vrot.lane.b32.xlu0 %v1399, 12
      %v1446 = vpop.permute.xlu0 %1445
      %1447 = vrot.lane.b32.xlu0 %v1400, 12
      %v1448 = vpop.permute.xlu0 %1447
      %1449 = vrot.lane.b32.xlu0 %v1401, 12
      %v1450 = vpop.permute.xlu0 %1449
      %1451 = vrot.lane.b32.xlu0 %v1402, 12
      %v1452 = vpop.permute.xlu0 %1451
      %1453 = vrot.lane.b32.xlu0 %v1403, 12
      %v1454 = vpop.permute.xlu0 %1453
      %1455 = vrot.lane.b32.xlu0 %v1404, 12
      %v1456 = vpop.permute.xlu0 %1455
      %1457 = vrot.lane.b32.xlu0 %v1405, 12
      %v1458 = vpop.permute.xlu0 %1457
      %1459 = vrot.lane.b32.xlu0 %v1406, 12
      %v1460 = vpop.permute.xlu0 %1459
      %1461 = vrot.lane.b32.xlu0 %v1407, 12
      %v1462 = vpop.permute.xlu0 %1461
      %1463 = vrot.lane.b32.xlu0 %v1408, 12
      %v1464 = vpop.permute.xlu0 %1463
      %1465 = vrot.lane.b32.xlu0 %v1409, 12
      %v1466 = vpop.permute.xlu0 %1465
      %1467 = vrot.lane.b32.xlu0 %v1410, 12
      %v1468 = vpop.permute.xlu0 %1467
      %1469 = vrot.lane.b32.xlu0 %v1411, 12
      %v1470 = vpop.permute.xlu0 %1469
      %1471 = vrot.lane.b32.xlu0 %v1412, 12
      %v1472 = vpop.permute.xlu0 %1471
      %1473 = vrot.lane.b32.xlu0 %v1413, 12
      %v1474 = vpop.permute.xlu0 %1473
      %1475 = vrot.lane.b32.xlu0 %v1414, 12
      %v1476 = vpop.permute.xlu0 %1475
      %1477 = vrot.lane.b32.xlu0 %v1415, 12
      %v1478 = vpop.permute.xlu0 %1477
      %1479 = vrot.lane.b32.xlu0 %v1416, 12
      %v1480 = vpop.permute.xlu0 %1479
      %vm1513 = vcmask 126048
      %1514 = vst.msk [vmem:[#allocation2] sm:$0xf] %vm1513, %v1418
      %1515 = vst.msk [vmem:[#allocation2 + $0x4] sm:$0xf] %vm1513, %v1420
      %1516 = vst.msk [vmem:[#allocation2 + $0x8] sm:$0xf] %vm1513, %v1422
      %1517 = vst.msk [vmem:[#allocation2 + $0xc] sm:$0xf] %vm1513, %v1424
      %1518 = vst.msk [vmem:[#allocation2 + $0x10] sm:$0xf] %vm1513, %v1426
      %1519 = vst.msk [vmem:[#allocation2 + $0x14] sm:$0xf] %vm1513, %v1428
      %1520 = vst.msk [vmem:[#allocation2 + $0x18] sm:$0xf] %vm1513, %v1430
      %1521 = vst.msk [vmem:[#allocation2 + $0x1c] sm:$0xf] %vm1513, %v1432
      %1522 = vst.msk [vmem:[#allocation2 + $0x20] sm:$0xf] %vm1513, %v1434
      %1523 = vst.msk [vmem:[#allocation2 + $0x24] sm:$0xf] %vm1513, %v1436
      %1524 = vst.msk [vmem:[#allocation2 + $0x28] sm:$0xf] %vm1513, %v1438
      %1525 = vst.msk [vmem:[#allocation2 + $0x2c] sm:$0xf] %vm1513, %v1440
      %1526 = vst.msk [vmem:[#allocation2 + $0x30] sm:$0xf] %vm1513, %v1442
      %1527 = vst.msk [vmem:[#allocation2 + $0x34] sm:$0xf] %vm1513, %v1444
      %1528 = vst.msk [vmem:[#allocation2 + $0x38] sm:$0xf] %vm1513, %v1446
      %1529 = vst.msk [vmem:[#allocation2 + $0x3c] sm:$0xf] %vm1513, %v1448
      %1530 = vst.msk [vmem:[#allocation2 + $0x40] sm:$0xf] %vm1513, %v1450
      %1531 = vst.msk [vmem:[#allocation2 + $0x44] sm:$0xf] %vm1513, %v1452
      %1532 = vst.msk [vmem:[#allocation2 + $0x48] sm:$0xf] %vm1513, %v1454
      %1533 = vst.msk [vmem:[#allocation2 + $0x4c] sm:$0xf] %vm1513, %v1456
      %1534 = vst.msk [vmem:[#allocation2 + $0x50] sm:$0xf] %vm1513, %v1458
      %1535 = vst.msk [vmem:[#allocation2 + $0x54] sm:$0xf] %vm1513, %v1460
      %1536 = vst.msk [vmem:[#allocation2 + $0x58] sm:$0xf] %vm1513, %v1462
      %1537 = vst.msk [vmem:[#allocation2 + $0x5c] sm:$0xf] %vm1513, %v1464
      %1538 = vst.msk [vmem:[#allocation2 + $0x60] sm:$0xf] %vm1513, %v1466
      %1539 = vst.msk [vmem:[#allocation2 + $0x64] sm:$0xf] %vm1513, %v1468
      %1540 = vst.msk [vmem:[#allocation2 + $0x68] sm:$0xf] %vm1513, %v1470
      %1541 = vst.msk [vmem:[#allocation2 + $0x6c] sm:$0xf] %vm1513, %v1472
      %1542 = vst.msk [vmem:[#allocation2 + $0x70] sm:$0xf] %vm1513, %v1474
      %1543 = vst.msk [vmem:[#allocation2 + $0x74] sm:$0xf] %vm1513, %v1476
      %1544 = vst.msk [vmem:[#allocation2 + $0x78] sm:$0xf] %vm1513, %v1478
      %1545 = vst.msk [vmem:[#allocation2 + $0x7c] sm:$0xf] %vm1513, %v1480
      %v1594 = vrot.slane %v1273, 1
      %v1595 = vrot.slane %v1274, 1
      %v1596 = vsel %vm545, %v1594, %v1595
      %v1597 = vrot.slane %v1275, 1
      %v1598 = vsel %vm545, %v1595, %v1597
      %v1599 = vrot.slane %v1276, 1
      %v1600 = vrot.slane %v1277, 1
      %v1601 = vsel %vm545, %v1599, %v1600
      %v1602 = vrot.slane %v1278, 1
      %v1603 = vsel %vm545, %v1600, %v1602
      %v1604 = vrot.slane %v1279, 1
      %v1605 = vrot.slane %v1280, 1
      %v1606 = vsel %vm545, %v1604, %v1605
      %v1607 = vrot.slane %v1281, 1
      %v1608 = vsel %vm545, %v1605, %v1607
      %v1609 = vrot.slane %v1282, 1
      %v1610 = vrot.slane %v1283, 1
      %v1611 = vsel %vm545, %v1609, %v1610
      %v1612 = vrot.slane %v1284, 1
      %v1613 = vsel %vm545, %v1610, %v1612
      %v1614 = vrot.slane %v1285, 1
      %v1615 = vrot.slane %v1286, 1
      %v1616 = vsel %vm545, %v1614, %v1615
      %v1617 = vrot.slane %v1287, 1
      %v1618 = vsel %vm545, %v1615, %v1617
      %v1619 = vrot.slane %v1288, 1
      %v1620 = vrot.slane %v1289, 1
      %v1621 = vsel %vm545, %v1619, %v1620
      %v1622 = vrot.slane %v1290, 1
      %v1623 = vsel %vm545, %v1620, %v1622
      %v1624 = vrot.slane %v1291, 1
      %v1625 = vrot.slane %v1292, 1
      %v1626 = vsel %vm545, %v1624, %v1625
      %v1627 = vrot.slane %v1293, 1
      %v1628 = vsel %vm545, %v1625, %v1627
      %v1629 = vrot.slane %v1294, 1
      %v1630 = vrot.slane %v1295, 1
      %v1631 = vsel %vm545, %v1629, %v1630
      %v1632 = vrot.slane %v1296, 1
      %v1633 = vsel %vm545, %v1630, %v1632
      %v1634 = vrot.slane %v1297, 1
      %v1635 = vrot.slane %v1298, 1
      %v1636 = vsel %vm545, %v1634, %v1635
      %v1637 = vrot.slane %v1299, 1
      %v1638 = vsel %vm545, %v1635, %v1637
      %v1639 = vrot.slane %v1300, 1
      %v1640 = vrot.slane %v1301, 1
      %v1641 = vsel %vm545, %v1639, %v1640
      %v1642 = vrot.slane %v1302, 1
      %v1643 = vsel %vm545, %v1640, %v1642
      %v1644 = vrot.slane %v1303, 1
      %v1645 = vrot.slane %v1304, 1
      %v1646 = vsel %vm545, %v1644, %v1645
      %v1647 = vrot.slane %v1305, 1
      %v1648 = vsel %vm545, %v1645, %v1647
      %v1649 = vrot.slane %v1306, 1
      %v1650 = vrot.slane %v1307, 1
      %v1651 = vsel %vm545, %v1649, %v1650
      %v1652 = vrot.slane %v1308, 1
      %v1653 = vsel %vm545, %v1650, %v1652
      %v1654 = vrot.slane %v1309, 1
      %v1655 = vrot.slane %v1310, 1
      %v1656 = vsel %vm545, %v1654, %v1655
      %v1657 = vrot.slane %v1311, 1
      %v1658 = vsel %vm545, %v1655, %v1657
      %v1659 = vrot.slane %v1312, 1
      %v1660 = vrot.slane %v1313, 1
      %v1661 = vsel %vm545, %v1659, %v1660
      %v1662 = vrot.slane %v1314, 1
      %v1663 = vsel %vm545, %v1660, %v1662
      %v1664 = vrot.slane %v1315, 1
      %v1665 = vrot.slane %v1316, 1
      %v1666 = vsel %vm545, %v1664, %v1665
      %v1667 = vrot.slane %v1317, 1
      %v1668 = vsel %vm545, %v1665, %v1667
      %v1669 = vrot.slane %v1318, 1
      %v1670 = vrot.slane %v1319, 1
      %v1671 = vsel %vm545, %v1669, %v1670
      %v1672 = vrot.slane %v1320, 1
      %v1673 = vsel %vm545, %v1670, %v1672
      %v1706 = vpack.c.bf16 %v1598, %v1596
      %v1707 = vpack.c.bf16 %v1603, %v1601
      %v1708 = vpack.c.bf16 %v1608, %v1606
      %v1709 = vpack.c.bf16 %v1613, %v1611
      %v1710 = vpack.c.bf16 %v1618, %v1616
      %v1711 = vpack.c.bf16 %v1623, %v1621
      %v1712 = vpack.c.bf16 %v1628, %v1626
      %v1713 = vpack.c.bf16 %v1633, %v1631
      %v1714 = vpack.c.bf16 %v1638, %v1636
      %v1715 = vpack.c.bf16 %v1643, %v1641
      %v1716 = vpack.c.bf16 %v1648, %v1646
      %v1717 = vpack.c.bf16 %v1653, %v1651
      %v1718 = vpack.c.bf16 %v1658, %v1656
      %v1719 = vpack.c.bf16 %v1663, %v1661
      %v1720 = vpack.c.bf16 %v1668, %v1666
      %v1721 = vpack.c.bf16 %v1673, %v1671
      %v1738 = vunpack.c.l.b16 %v1706
      %v1739 = vunpack.c.h.b16 %v1706
      %v1740 = vunpack.c.l.b16 %v1707
      %v1741 = vunpack.c.h.b16 %v1707
      %v1742 = vunpack.c.l.b16 %v1708
      %v1743 = vunpack.c.h.b16 %v1708
      %v1744 = vunpack.c.l.b16 %v1709
      %v1745 = vunpack.c.h.b16 %v1709
      %v1746 = vunpack.c.l.b16 %v1710
      %v1747 = vunpack.c.h.b16 %v1710
      %v1748 = vunpack.c.l.b16 %v1711
      %v1749 = vunpack.c.h.b16 %v1711
      %v1750 = vunpack.c.l.b16 %v1712
      %v1751 = vunpack.c.h.b16 %v1712
      %v1752 = vunpack.c.l.b16 %v1713
      %v1753 = vunpack.c.h.b16 %v1713
      %v1754 = vunpack.c.l.b16 %v1714
      %v1755 = vunpack.c.h.b16 %v1714
      %v1756 = vunpack.c.l.b16 %v1715
      %v1757 = vunpack.c.h.b16 %v1715
      %v1758 = vunpack.c.l.b16 %v1716
      %v1759 = vunpack.c.h.b16 %v1716
      %v1760 = vunpack.c.l.b16 %v1717
      %v1761 = vunpack.c.h.b16 %v1717
      %v1762 = vunpack.c.l.b16 %v1718
      %v1763 = vunpack.c.h.b16 %v1718
      %v1764 = vunpack.c.l.b16 %v1719
      %v1765 = vunpack.c.h.b16 %v1719
      %v1766 = vunpack.c.l.b16 %v1720
      %v1767 = vunpack.c.h.b16 %v1720
      %v1768 = vunpack.c.l.b16 %v1721
      %v1769 = vunpack.c.h.b16 %v1721
      %v1770 = vpack.c.b16 %v1738, %v1738
      %v1771 = vpack.c.b16 %v1739, %v1739
      %v1772 = vpack.c.b16 %v1740, %v1740
      %v1773 = vpack.c.b16 %v1741, %v1741
      %v1774 = vpack.c.b16 %v1742, %v1742
      %v1775 = vpack.c.b16 %v1743, %v1743
      %v1776 = vpack.c.b16 %v1744, %v1744
      %v1777 = vpack.c.b16 %v1745, %v1745
      %v1778 = vpack.c.b16 %v1746, %v1746
      %v1779 = vpack.c.b16 %v1747, %v1747
      %v1780 = vpack.c.b16 %v1748, %v1748
      %v1781 = vpack.c.b16 %v1749, %v1749
      %v1782 = vpack.c.b16 %v1750, %v1750
      %v1783 = vpack.c.b16 %v1751, %v1751
      %v1784 = vpack.c.b16 %v1752, %v1752
      %v1785 = vpack.c.b16 %v1753, %v1753
      %v1786 = vpack.c.b16 %v1754, %v1754
      %v1787 = vpack.c.b16 %v1755, %v1755
      %v1788 = vpack.c.b16 %v1756, %v1756
      %v1789 = vpack.c.b16 %v1757, %v1757
      %v1790 = vpack.c.b16 %v1758, %v1758
      %v1791 = vpack.c.b16 %v1759, %v1759
      %v1792 = vpack.c.b16 %v1760, %v1760
      %v1793 = vpack.c.b16 %v1761, %v1761
      %v1794 = vpack.c.b16 %v1762, %v1762
      %v1795 = vpack.c.b16 %v1763, %v1763
      %v1796 = vpack.c.b16 %v1764, %v1764
      %v1797 = vpack.c.b16 %v1765, %v1765
      %v1798 = vpack.c.b16 %v1766, %v1766
      %v1799 = vpack.c.b16 %v1767, %v1767
      %v1800 = vpack.c.b16 %v1768, %v1768
      %v1801 = vpack.c.b16 %v1769, %v1769
      %1802 = vrot.lane.b32.xlu0 %v1770, 16
      %v1803 = vpop.permute.xlu0 %1802
      %1804 = vrot.lane.b32.xlu0 %v1771, 16
      %v1805 = vpop.permute.xlu0 %1804
      %1806 = vrot.lane.b32.xlu0 %v1772, 16
      %v1807 = vpop.permute.xlu0 %1806
      %1808 = vrot.lane.b32.xlu0 %v1773, 16
      %v1809 = vpop.permute.xlu0 %1808
      %1810 = vrot.lane.b32.xlu0 %v1774, 16
      %v1811 = vpop.permute.xlu0 %1810
      %1812 = vrot.lane.b32.xlu0 %v1775, 16
      %v1813 = vpop.permute.xlu0 %1812
      %1814 = vrot.lane.b32.xlu0 %v1776, 16
      %v1815 = vpop.permute.xlu0 %1814
      %1816 = vrot.lane.b32.xlu0 %v1777, 16
      %v1817 = vpop.permute.xlu0 %1816
      %1818 = vrot.lane.b32.xlu0 %v1778, 16
      %v1819 = vpop.permute.xlu0 %1818
      %1820 = vrot.lane.b32.xlu0 %v1779, 16
      %v1821 = vpop.permute.xlu0 %1820
      %1822 = vrot.lane.b32.xlu0 %v1780, 16
      %v1823 = vpop.permute.xlu0 %1822
      %1824 = vrot.lane.b32.xlu0 %v1781, 16
      %v1825 = vpop.permute.xlu0 %1824
      %1826 = vrot.lane.b32.xlu0 %v1782, 16
      %v1827 = vpop.permute.xlu0 %1826
      %1828 = vrot.lane.b32.xlu0 %v1783, 16
      %v1829 = vpop.permute.xlu0 %1828
      %1830 = vrot.lane.b32.xlu0 %v1784, 16
      %v1831 = vpop.permute.xlu0 %1830
      %1832 = vrot.lane.b32.xlu0 %v1785, 16
      %v1833 = vpop.permute.xlu0 %1832
      %1834 = vrot.lane.b32.xlu0 %v1786, 16
      %v1835 = vpop.permute.xlu0 %1834
      %1836 = vrot.lane.b32.xlu0 %v1787, 16
      %v1837 = vpop.permute.xlu0 %1836
      %1838 = vrot.lane.b32.xlu0 %v1788, 16
      %v1839 = vpop.permute.xlu0 %1838
      %1840 = vrot.lane.b32.xlu0 %v1789, 16
      %v1841 = vpop.permute.xlu0 %1840
      %1842 = vrot.lane.b32.xlu0 %v1790, 16
      %v1843 = vpop.permute.xlu0 %1842
      %1844 = vrot.lane.b32.xlu0 %v1791, 16
      %v1845 = vpop.permute.xlu0 %1844
      %1846 = vrot.lane.b32.xlu0 %v1792, 16
      %v1847 = vpop.permute.xlu0 %1846
      %1848 = vrot.lane.b32.xlu0 %v1793, 16
      %v1849 = vpop.permute.xlu0 %1848
      %1850 = vrot.lane.b32.xlu0 %v1794, 16
      %v1851 = vpop.permute.xlu0 %1850
      %1852 = vrot.lane.b32.xlu0 %v1795, 16
      %v1853 = vpop.permute.xlu0 %1852
      %1854 = vrot.lane.b32.xlu0 %v1796, 16
      %v1855 = vpop.permute.xlu0 %1854
      %1856 = vrot.lane.b32.xlu0 %v1797, 16
      %v1857 = vpop.permute.xlu0 %1856
      %1858 = vrot.lane.b32.xlu0 %v1798, 16
      %v1859 = vpop.permute.xlu0 %1858
      %1860 = vrot.lane.b32.xlu0 %v1799, 16
      %v1861 = vpop.permute.xlu0 %1860
      %1862 = vrot.lane.b32.xlu0 %v1800, 16
      %v1863 = vpop.permute.xlu0 %1862
      %1864 = vrot.lane.b32.xlu0 %v1801, 16
      %v1865 = vpop.permute.xlu0 %1864
      %vm1898 = vcmask 158848
      %1899 = vst.msk [vmem:[#allocation2] sm:$0xf] %vm1898, %v1803
      %1900 = vst.msk [vmem:[#allocation2 + $0x4] sm:$0xf] %vm1898, %v1805
      %1901 = vst.msk [vmem:[#allocation2 + $0x8] sm:$0xf] %vm1898, %v1807
      %1902 = vst.msk [vmem:[#allocation2 + $0xc] sm:$0xf] %vm1898, %v1809
      %1903 = vst.msk [vmem:[#allocation2 + $0x10] sm:$0xf] %vm1898, %v1811
      %1904 = vst.msk [vmem:[#allocation2 + $0x14] sm:$0xf] %vm1898, %v1813
      %1905 = vst.msk [vmem:[#allocation2 + $0x18] sm:$0xf] %vm1898, %v1815
      %1906 = vst.msk [vmem:[#allocation2 + $0x1c] sm:$0xf] %vm1898, %v1817
      %1907 = vst.msk [vmem:[#allocation2 + $0x20] sm:$0xf] %vm1898, %v1819
      %1908 = vst.msk [vmem:[#allocation2 + $0x24] sm:$0xf] %vm1898, %v1821
      %1909 = vst.msk [vmem:[#allocation2 + $0x28] sm:$0xf] %vm1898, %v1823
      %1910 = vst.msk [vmem:[#allocation2 + $0x2c] sm:$0xf] %vm1898, %v1825
      %1911 = vst.msk [vmem:[#allocation2 + $0x30] sm:$0xf] %vm1898, %v1827
      %1912 = vst.msk [vmem:[#allocation2 + $0x34] sm:$0xf] %vm1898, %v1829
      %1913 = vst.msk [vmem:[#allocation2 + $0x38] sm:$0xf] %vm1898, %v1831
      %1914 = vst.msk [vmem:[#allocation2 + $0x3c] sm:$0xf] %vm1898, %v1833
      %1915 = vst.msk [vmem:[#allocation2 + $0x40] sm:$0xf] %vm1898, %v1835
      %1916 = vst.msk [vmem:[#allocation2 + $0x44] sm:$0xf] %vm1898, %v1837
      %1917 = vst.msk [vmem:[#allocation2 + $0x48] sm:$0xf] %vm1898, %v1839
      %1918 = vst.msk [vmem:[#allocation2 + $0x4c] sm:$0xf] %vm1898, %v1841
      %1919 = vst.msk [vmem:[#allocation2 + $0x50] sm:$0xf] %vm1898, %v1843
      %1920 = vst.msk [vmem:[#allocation2 + $0x54] sm:$0xf] %vm1898, %v1845
      %1921 = vst.msk [vmem:[#allocation2 + $0x58] sm:$0xf] %vm1898, %v1847
      %1922 = vst.msk [vmem:[#allocation2 + $0x5c] sm:$0xf] %vm1898, %v1849
      %1923 = vst.msk [vmem:[#allocation2 + $0x60] sm:$0xf] %vm1898, %v1851
      %1924 = vst.msk [vmem:[#allocation2 + $0x64] sm:$0xf] %vm1898, %v1853
      %1925 = vst.msk [vmem:[#allocation2 + $0x68] sm:$0xf] %vm1898, %v1855
      %1926 = vst.msk [vmem:[#allocation2 + $0x6c] sm:$0xf] %vm1898, %v1857
      %1927 = vst.msk [vmem:[#allocation2 + $0x70] sm:$0xf] %vm1898, %v1859
      %1928 = vst.msk [vmem:[#allocation2 + $0x74] sm:$0xf] %vm1898, %v1861
      %1929 = vst.msk [vmem:[#allocation2 + $0x78] sm:$0xf] %vm1898, %v1863
      %1930 = vst.msk [vmem:[#allocation2 + $0x7c] sm:$0xf] %vm1898, %v1865
      %v1931 = vrot.slane %v1273, 2
      %v1932 = vrot.slane %v1274, 2
      %v1933 = vsel %vm883, %v1931, %v1932
      %v1934 = vrot.slane %v1275, 2
      %v1935 = vsel %vm883, %v1932, %v1934
      %v1936 = vrot.slane %v1276, 2
      %v1937 = vrot.slane %v1277, 2
      %v1938 = vsel %vm883, %v1936, %v1937
      %v1939 = vrot.slane %v1278, 2
      %v1940 = vsel %vm883, %v1937, %v1939
      %v1941 = vrot.slane %v1279, 2
      %v1942 = vrot.slane %v1280, 2
      %v1943 = vsel %vm883, %v1941, %v1942
      %v1944 = vrot.slane %v1281, 2
      %v1945 = vsel %vm883, %v1942, %v1944
      %v1946 = vrot.slane %v1282, 2
      %v1947 = vrot.slane %v1283, 2
      %v1948 = vsel %vm883, %v1946, %v1947
      %v1949 = vrot.slane %v1284, 2
      %v1950 = vsel %vm883, %v1947, %v1949
      %v1951 = vrot.slane %v1285, 2
      %v1952 = vrot.slane %v1286, 2
      %v1953 = vsel %vm883, %v1951, %v1952
      %v1954 = vrot.slane %v1287, 2
      %v1955 = vsel %vm883, %v1952, %v1954
      %v1956 = vrot.slane %v1288, 2
      %v1957 = vrot.slane %v1289, 2
      %v1958 = vsel %vm883, %v1956, %v1957
      %v1959 = vrot.slane %v1290, 2
      %v1960 = vsel %vm883, %v1957, %v1959
      %v1961 = vrot.slane %v1291, 2
      %v1962 = vrot.slane %v1292, 2
      %v1963 = vsel %vm883, %v1961, %v1962
      %v1964 = vrot.slane %v1293, 2
      %v1965 = vsel %vm883, %v1962, %v1964
      %v1966 = vrot.slane %v1294, 2
      %v1967 = vrot.slane %v1295, 2
      %v1968 = vsel %vm883, %v1966, %v1967
      %v1969 = vrot.slane %v1296, 2
      %v1970 = vsel %vm883, %v1967, %v1969
      %v1971 = vrot.slane %v1297, 2
      %v1972 = vrot.slane %v1298, 2
      %v1973 = vsel %vm883, %v1971, %v1972
      %v1974 = vrot.slane %v1299, 2
      %v1975 = vsel %vm883, %v1972, %v1974
      %v1976 = vrot.slane %v1300, 2
      %v1977 = vrot.slane %v1301, 2
      %v1978 = vsel %vm883, %v1976, %v1977
      %v1979 = vrot.slane %v1302, 2
      %v1980 = vsel %vm883, %v1977, %v1979
      %v1981 = vrot.slane %v1303, 2
      %v1982 = vrot.slane %v1304, 2
      %v1983 = vsel %vm883, %v1981, %v1982
      %v1984 = vrot.slane %v1305, 2
      %v1985 = vsel %vm883, %v1982, %v1984
      %v1986 = vrot.slane %v1306, 2
      %v1987 = vrot.slane %v1307, 2
      %v1988 = vsel %vm883, %v1986, %v1987
      %v1989 = vrot.slane %v1308, 2
      %v1990 = vsel %vm883, %v1987, %v1989
      %v1991 = vrot.slane %v1309, 2
      %v1992 = vrot.slane %v1310, 2
      %v1993 = vsel %vm883, %v1991, %v1992
      %v1994 = vrot.slane %v1311, 2
      %v1995 = vsel %vm883, %v1992, %v1994
      %v1996 = vrot.slane %v1312, 2
      %v1997 = vrot.slane %v1313, 2
      %v1998 = vsel %vm883, %v1996, %v1997
      %v1999 = vrot.slane %v1314, 2
      %v2000 = vsel %vm883, %v1997, %v1999
      %v2001 = vrot.slane %v1315, 2
      %v2002 = vrot.slane %v1316, 2
      %v2003 = vsel %vm883, %v2001, %v2002
      %v2004 = vrot.slane %v1317, 2
      %v2005 = vsel %vm883, %v2002, %v2004
      %v2006 = vrot.slane %v1318, 2
      %v2007 = vrot.slane %v1319, 2
      %v2008 = vsel %vm883, %v2006, %v2007
      %v2009 = vrot.slane %v1320, 2
      %v2010 = vsel %vm883, %v2007, %v2009
      %v2043 = vpack.c.bf16 %v1935, %v1933
      %v2044 = vpack.c.bf16 %v1940, %v1938
      %v2045 = vpack.c.bf16 %v1945, %v1943
      %v2046 = vpack.c.bf16 %v1950, %v1948
      %v2047 = vpack.c.bf16 %v1955, %v1953
      %v2048 = vpack.c.bf16 %v1960, %v1958
      %v2049 = vpack.c.bf16 %v1965, %v1963
      %v2050 = vpack.c.bf16 %v1970, %v1968
      %v2051 = vpack.c.bf16 %v1975, %v1973
      %v2052 = vpack.c.bf16 %v1980, %v1978
      %v2053 = vpack.c.bf16 %v1985, %v1983
      %v2054 = vpack.c.bf16 %v1990, %v1988
      %v2055 = vpack.c.bf16 %v1995, %v1993
      %v2056 = vpack.c.bf16 %v2000, %v1998
      %v2057 = vpack.c.bf16 %v2005, %v2003
      %v2058 = vpack.c.bf16 %v2010, %v2008
      %v2075 = vunpack.c.l.b16 %v2043
      %v2076 = vunpack.c.h.b16 %v2043
      %v2077 = vunpack.c.l.b16 %v2044
      %v2078 = vunpack.c.h.b16 %v2044
      %v2079 = vunpack.c.l.b16 %v2045
      %v2080 = vunpack.c.h.b16 %v2045
      %v2081 = vunpack.c.l.b16 %v2046
      %v2082 = vunpack.c.h.b16 %v2046
      %v2083 = vunpack.c.l.b16 %v2047
      %v2084 = vunpack.c.h.b16 %v2047
      %v2085 = vunpack.c.l.b16 %v2048
      %v2086 = vunpack.c.h.b16 %v2048
      %v2087 = vunpack.c.l.b16 %v2049
      %v2088 = vunpack.c.h.b16 %v2049
      %v2089 = vunpack.c.l.b16 %v2050
      %v2090 = vunpack.c.h.b16 %v2050
      %v2091 = vunpack.c.l.b16 %v2051
      %v2092 = vunpack.c.h.b16 %v2051
      %v2093 = vunpack.c.l.b16 %v2052
      %v2094 = vunpack.c.h.b16 %v2052
      %v2095 = vunpack.c.l.b16 %v2053
      %v2096 = vunpack.c.h.b16 %v2053
      %v2097 = vunpack.c.l.b16 %v2054
      %v2098 = vunpack.c.h.b16 %v2054
      %v2099 = vunpack.c.l.b16 %v2055
      %v2100 = vunpack.c.h.b16 %v2055
      %v2101 = vunpack.c.l.b16 %v2056
      %v2102 = vunpack.c.h.b16 %v2056
      %v2103 = vunpack.c.l.b16 %v2057
      %v2104 = vunpack.c.h.b16 %v2057
      %v2105 = vunpack.c.l.b16 %v2058
      %v2106 = vunpack.c.h.b16 %v2058
      %v2107 = vpack.c.b16 %v2075, %v2075
      %v2108 = vpack.c.b16 %v2076, %v2076
      %v2109 = vpack.c.b16 %v2077, %v2077
      %v2110 = vpack.c.b16 %v2078, %v2078
      %v2111 = vpack.c.b16 %v2079, %v2079
      %v2112 = vpack.c.b16 %v2080, %v2080
      %v2113 = vpack.c.b16 %v2081, %v2081
      %v2114 = vpack.c.b16 %v2082, %v2082
      %v2115 = vpack.c.b16 %v2083, %v2083
      %v2116 = vpack.c.b16 %v2084, %v2084
      %v2117 = vpack.c.b16 %v2085, %v2085
      %v2118 = vpack.c.b16 %v2086, %v2086
      %v2119 = vpack.c.b16 %v2087, %v2087
      %v2120 = vpack.c.b16 %v2088, %v2088
      %v2121 = vpack.c.b16 %v2089, %v2089
      %v2122 = vpack.c.b16 %v2090, %v2090
      %v2123 = vpack.c.b16 %v2091, %v2091
      %v2124 = vpack.c.b16 %v2092, %v2092
      %v2125 = vpack.c.b16 %v2093, %v2093
      %v2126 = vpack.c.b16 %v2094, %v2094
      %v2127 = vpack.c.b16 %v2095, %v2095
      %v2128 = vpack.c.b16 %v2096, %v2096
      %v2129 = vpack.c.b16 %v2097, %v2097
      %v2130 = vpack.c.b16 %v2098, %v2098
      %v2131 = vpack.c.b16 %v2099, %v2099
      %v2132 = vpack.c.b16 %v2100, %v2100
      %v2133 = vpack.c.b16 %v2101, %v2101
      %v2134 = vpack.c.b16 %v2102, %v2102
      %v2135 = vpack.c.b16 %v2103, %v2103
      %v2136 = vpack.c.b16 %v2104, %v2104
      %v2137 = vpack.c.b16 %v2105, %v2105
      %v2138 = vpack.c.b16 %v2106, %v2106
      %2139 = vrot.lane.b32.xlu0 %v2107, 20
      %v2140 = vpop.permute.xlu0 %2139
      %2141 = vrot.lane.b32.xlu0 %v2108, 20
      %v2142 = vpop.permute.xlu0 %2141
      %2143 = vrot.lane.b32.xlu0 %v2109, 20
      %v2144 = vpop.permute.xlu0 %2143
      %2145 = vrot.lane.b32.xlu0 %v2110, 20
      %v2146 = vpop.permute.xlu0 %2145
      %2147 = vrot.lane.b32.xlu0 %v2111, 20
      %v2148 = vpop.permute.xlu0 %2147
      %2149 = vrot.lane.b32.xlu0 %v2112, 20
      %v2150 = vpop.permute.xlu0 %2149
      %2151 = vrot.lane.b32.xlu0 %v2113, 20
      %v2152 = vpop.permute.xlu0 %2151
      %2153 = vrot.lane.b32.xlu0 %v2114, 20
      %v2154 = vpop.permute.xlu0 %2153
      %2155 = vrot.lane.b32.xlu0 %v2115, 20
      %v2156 = vpop.permute.xlu0 %2155
      %2157 = vrot.lane.b32.xlu0 %v2116, 20
      %v2158 = vpop.permute.xlu0 %2157
      %2159 = vrot.lane.b32.xlu0 %v2117, 20
      %v2160 = vpop.permute.xlu0 %2159
      %2161 = vrot.lane.b32.xlu0 %v2118, 20
      %v2162 = vpop.permute.xlu0 %2161
      %2163 = vrot.lane.b32.xlu0 %v2119, 20
      %v2164 = vpop.permute.xlu0 %2163
      %2165 = vrot.lane.b32.xlu0 %v2120, 20
      %v2166 = vpop.permute.xlu0 %2165
      %2167 = vrot.lane.b32.xlu0 %v2121, 20
      %v2168 = vpop.permute.xlu0 %2167
      %2169 = vrot.lane.b32.xlu0 %v2122, 20
      %v2170 = vpop.permute.xlu0 %2169
      %2171 = vrot.lane.b32.xlu0 %v2123, 20
      %v2172 = vpop.permute.xlu0 %2171
      %2173 = vrot.lane.b32.xlu0 %v2124, 20
      %v2174 = vpop.permute.xlu0 %2173
      %2175 = vrot.lane.b32.xlu0 %v2125, 20
      %v2176 = vpop.permute.xlu0 %2175
      %2177 = vrot.lane.b32.xlu0 %v2126, 20
      %v2178 = vpop.permute.xlu0 %2177
      %2179 = vrot.lane.b32.xlu0 %v2127, 20
      %v2180 = vpop.permute.xlu0 %2179
      %2181 = vrot.lane.b32.xlu0 %v2128, 20
      %v2182 = vpop.permute.xlu0 %2181
      %2183 = vrot.lane.b32.xlu0 %v2129, 20
      %v2184 = vpop.permute.xlu0 %2183
      %2185 = vrot.lane.b32.xlu0 %v2130, 20
      %v2186 = vpop.permute.xlu0 %2185
      %2187 = vrot.lane.b32.xlu0 %v2131, 20
      %v2188 = vpop.permute.xlu0 %2187
      %2189 = vrot.lane.b32.xlu0 %v2132, 20
      %v2190 = vpop.permute.xlu0 %2189
      %2191 = vrot.lane.b32.xlu0 %v2133, 20
      %v2192 = vpop.permute.xlu0 %2191
      %2193 = vrot.lane.b32.xlu0 %v2134, 20
      %v2194 = vpop.permute.xlu0 %2193
      %2195 = vrot.lane.b32.xlu0 %v2135, 20
      %v2196 = vpop.permute.xlu0 %2195
      %2197 = vrot.lane.b32.xlu0 %v2136, 20
      %v2198 = vpop.permute.xlu0 %2197
      %2199 = vrot.lane.b32.xlu0 %v2137, 20
      %v2200 = vpop.permute.xlu0 %2199
      %2201 = vrot.lane.b32.xlu0 %v2138, 20
      %v2202 = vpop.permute.xlu0 %2201
      %vm2235 = vcmask 191648
      %2236 = vst.msk [vmem:[#allocation2] sm:$0xf] %vm2235, %v2140
      %2237 = vst.msk [vmem:[#allocation2 + $0x4] sm:$0xf] %vm2235, %v2142
      %2238 = vst.msk [vmem:[#allocation2 + $0x8] sm:$0xf] %vm2235, %v2144
      %2239 = vst.msk [vmem:[#allocation2 + $0xc] sm:$0xf] %vm2235, %v2146
      %2240 = vst.msk [vmem:[#allocation2 + $0x10] sm:$0xf] %vm2235, %v2148
      %2241 = vst.msk [vmem:[#allocation2 + $0x14] sm:$0xf] %vm2235, %v2150
      %2242 = vst.msk [vmem:[#allocation2 + $0x18] sm:$0xf] %vm2235, %v2152
      %2243 = vst.msk [vmem:[#allocation2 + $0x1c] sm:$0xf] %vm2235, %v2154
      %2244 = vst.msk [vmem:[#allocation2 + $0x20] sm:$0xf] %vm2235, %v2156
      %2245 = vst.msk [vmem:[#allocation2 + $0x24] sm:$0xf] %vm2235, %v2158
      %2246 = vst.msk [vmem:[#allocation2 + $0x28] sm:$0xf] %vm2235, %v2160
      %2247 = vst.msk [vmem:[#allocation2 + $0x2c] sm:$0xf] %vm2235, %v2162
      %2248 = vst.msk [vmem:[#allocation2 + $0x30] sm:$0xf] %vm2235, %v2164
      %2249 = vst.msk [vmem:[#allocation2 + $0x34] sm:$0xf] %vm2235, %v2166
      %2250 = vst.msk [vmem:[#allocation2 + $0x38] sm:$0xf] %vm2235, %v2168
      %2251 = vst.msk [vmem:[#allocation2 + $0x3c] sm:$0xf] %vm2235, %v2170
      %2252 = vst.msk [vmem:[#allocation2 + $0x40] sm:$0xf] %vm2235, %v2172
      %2253 = vst.msk [vmem:[#allocation2 + $0x44] sm:$0xf] %vm2235, %v2174
      %2254 = vst.msk [vmem:[#allocation2 + $0x48] sm:$0xf] %vm2235, %v2176
      %2255 = vst.msk [vmem:[#allocation2 + $0x4c] sm:$0xf] %vm2235, %v2178
      %2256 = vst.msk [vmem:[#allocation2 + $0x50] sm:$0xf] %vm2235, %v2180
      %2257 = vst.msk [vmem:[#allocation2 + $0x54] sm:$0xf] %vm2235, %v2182
      %2258 = vst.msk [vmem:[#allocation2 + $0x58] sm:$0xf] %vm2235, %v2184
      %2259 = vst.msk [vmem:[#allocation2 + $0x5c] sm:$0xf] %vm2235, %v2186
      %2260 = vst.msk [vmem:[#allocation2 + $0x60] sm:$0xf] %vm2235, %v2188
      %2261 = vst.msk [vmem:[#allocation2 + $0x64] sm:$0xf] %vm2235, %v2190
      %2262 = vst.msk [vmem:[#allocation2 + $0x68] sm:$0xf] %vm2235, %v2192
      %2263 = vst.msk [vmem:[#allocation2 + $0x6c] sm:$0xf] %vm2235, %v2194
      %2264 = vst.msk [vmem:[#allocation2 + $0x70] sm:$0xf] %vm2235, %v2196
      %2265 = vst.msk [vmem:[#allocation2 + $0x74] sm:$0xf] %vm2235, %v2198
      %2266 = vst.msk [vmem:[#allocation2 + $0x78] sm:$0xf] %vm2235, %v2200
      %2267 = vst.msk [vmem:[#allocation2 + $0x7c] sm:$0xf] %vm2235, %v2202
      %s2268 = sadd.s32 %s236, 2
      %s2269 = smul.u32 %s2268, 3
      %s2270 = smul.addr %s2269, 4
      %s2271 = scalar_lea.vmem %s212, %s2270
      %v2272 = vld [vmem:[%s2271] sm:$0xf]
      %v2273 = vld [vmem:[%s2271 + $0x4] sm:$0xf]
      %v2274 = vld [vmem:[%s2271 + $0x8] sm:$0x1]
      %v2275 = vld [vmem:[%s2271 + $0xc] sm:$0xf]
      %v2276 = vld [vmem:[%s2271 + $0x10] sm:$0xf]
      %v2277 = vld [vmem:[%s2271 + $0x14] sm:$0x1]
      %v2278 = vld [vmem:[%s2271 + $0x18] sm:$0xf]
      %v2279 = vld [vmem:[%s2271 + $0x1c] sm:$0xf]
      %v2280 = vld [vmem:[%s2271 + $0x20] sm:$0x1]
      %v2281 = vld [vmem:[%s2271 + $0x24] sm:$0xf]
      %v2282 = vld [vmem:[%s2271 + $0x28] sm:$0xf]
      %v2283 = vld [vmem:[%s2271 + $0x2c] sm:$0x1]
      %v2284 = vld [vmem:[%s2271 + $0x30] sm:$0xf]
      %v2285 = vld [vmem:[%s2271 + $0x34] sm:$0xf]
      %v2286 = vld [vmem:[%s2271 + $0x38] sm:$0x1]
      %v2287 = vld [vmem:[%s2271 + $0x3c] sm:$0xf]
      %v2288 = vld [vmem:[%s2271 + $0x40] sm:$0xf]
      %v2289 = vld [vmem:[%s2271 + $0x44] sm:$0x1]
      %v2290 = vld [vmem:[%s2271 + $0x48] sm:$0xf]
      %v2291 = vld [vmem:[%s2271 + $0x4c] sm:$0xf]
      %v2292 = vld [vmem:[%s2271 + $0x50] sm:$0x1]
      %v2293 = vld [vmem:[%s2271 + $0x54] sm:$0xf]
      %v2294 = vld [vmem:[%s2271 + $0x58] sm:$0xf]
      %v2295 = vld [vmem:[%s2271 + $0x5c] sm:$0x1]
      %v2296 = vld [vmem:[%s2271 + $0x60] sm:$0xf]
      %v2297 = vld [vmem:[%s2271 + $0x64] sm:$0xf]
      %v2298 = vld [vmem:[%s2271 + $0x68] sm:$0x1]
      %v2299 = vld [vmem:[%s2271 + $0x6c] sm:$0xf]
      %v2300 = vld [vmem:[%s2271 + $0x70] sm:$0xf]
      %v2301 = vld [vmem:[%s2271 + $0x74] sm:$0x1]
      %v2302 = vld [vmem:[%s2271 + $0x78] sm:$0xf]
      %v2303 = vld [vmem:[%s2271 + $0x7c] sm:$0xf]
      %v2304 = vld [vmem:[%s2271 + $0x80] sm:$0x1]
      %v2305 = vld [vmem:[%s2271 + $0x84] sm:$0xf]
      %v2306 = vld [vmem:[%s2271 + $0x88] sm:$0xf]
      %v2307 = vld [vmem:[%s2271 + $0x8c] sm:$0x1]
      %v2308 = vld [vmem:[%s2271 + $0x90] sm:$0xf]
      %v2309 = vld [vmem:[%s2271 + $0x94] sm:$0xf]
      %v2310 = vld [vmem:[%s2271 + $0x98] sm:$0x1]
      %v2311 = vld [vmem:[%s2271 + $0x9c] sm:$0xf]
      %v2312 = vld [vmem:[%s2271 + $0xa0] sm:$0xf]
      %v2313 = vld [vmem:[%s2271 + $0xa4] sm:$0x1]
      %v2314 = vld [vmem:[%s2271 + $0xa8] sm:$0xf]
      %v2315 = vld [vmem:[%s2271 + $0xac] sm:$0xf]
      %v2316 = vld [vmem:[%s2271 + $0xb0] sm:$0x1]
      %v2317 = vld [vmem:[%s2271 + $0xb4] sm:$0xf]
      %v2318 = vld [vmem:[%s2271 + $0xb8] sm:$0xf]
      %v2319 = vld [vmem:[%s2271 + $0xbc] sm:$0x1]
      %v2320 = vunpack.c.l.bf16 %v2272
      %v2321 = vunpack.c.l.bf16 %v2273
      %v2322 = vunpack.c.l.bf16 %v2274
      %v2323 = vunpack.c.l.bf16 %v2275
      %v2324 = vunpack.c.l.bf16 %v2276
      %v2325 = vunpack.c.l.bf16 %v2277
      %v2326 = vunpack.c.l.bf16 %v2278
      %v2327 = vunpack.c.l.bf16 %v2279
      %v2328 = vunpack.c.l.bf16 %v2280
      %v2329 = vunpack.c.l.bf16 %v2281
      %v2330 = vunpack.c.l.bf16 %v2282
      %v2331 = vunpack.c.l.bf16 %v2283
      %v2332 = vunpack.c.l.bf16 %v2284
      %v2333 = vunpack.c.l.bf16 %v2285
      %v2334 = vunpack.c.l.bf16 %v2286
      %v2335 = vunpack.c.l.bf16 %v2287
      %v2336 = vunpack.c.l.bf16 %v2288
      %v2337 = vunpack.c.l.bf16 %v2289
      %v2338 = vunpack.c.l.bf16 %v2290
      %v2339 = vunpack.c.l.bf16 %v2291
      %v2340 = vunpack.c.l.bf16 %v2292
      %v2341 = vunpack.c.l.bf16 %v2293
      %v2342 = vunpack.c.l.bf16 %v2294
      %v2343 = vunpack.c.l.bf16 %v2295
      %v2344 = vunpack.c.l.bf16 %v2296
      %v2345 = vunpack.c.l.bf16 %v2297
      %v2346 = vunpack.c.l.bf16 %v2298
      %v2347 = vunpack.c.l.bf16 %v2299
      %v2348 = vunpack.c.l.bf16 %v2300
      %v2349 = vunpack.c.l.bf16 %v2301
      %v2350 = vunpack.c.l.bf16 %v2302
      %v2351 = vunpack.c.l.bf16 %v2303
      %v2352 = vunpack.c.l.bf16 %v2304
      %v2353 = vunpack.c.l.bf16 %v2305
      %v2354 = vunpack.c.l.bf16 %v2306
      %v2355 = vunpack.c.l.bf16 %v2307
      %v2356 = vunpack.c.l.bf16 %v2308
      %v2357 = vunpack.c.l.bf16 %v2309
      %v2358 = vunpack.c.l.bf16 %v2310
      %v2359 = vunpack.c.l.bf16 %v2311
      %v2360 = vunpack.c.l.bf16 %v2312
      %v2361 = vunpack.c.l.bf16 %v2313
      %v2362 = vunpack.c.l.bf16 %v2314
      %v2363 = vunpack.c.l.bf16 %v2315
      %v2364 = vunpack.c.l.bf16 %v2316
      %v2365 = vunpack.c.l.bf16 %v2317
      %v2366 = vunpack.c.l.bf16 %v2318
      %v2367 = vunpack.c.l.bf16 %v2319
      %v2368 = vpack.c.bf16 %v2321, %v2320
      %v2369 = vpack.c.bf16 %v2324, %v2323
      %v2370 = vpack.c.bf16 %v2327, %v2326
      %v2371 = vpack.c.bf16 %v2330, %v2329
      %v2372 = vpack.c.bf16 %v2333, %v2332
      %v2373 = vpack.c.bf16 %v2336, %v2335
      %v2374 = vpack.c.bf16 %v2339, %v2338
      %v2375 = vpack.c.bf16 %v2342, %v2341
      %v2376 = vpack.c.bf16 %v2345, %v2344
      %v2377 = vpack.c.bf16 %v2348, %v2347
      %v2378 = vpack.c.bf16 %v2351, %v2350
      %v2379 = vpack.c.bf16 %v2354, %v2353
      %v2380 = vpack.c.bf16 %v2357, %v2356
      %v2381 = vpack.c.bf16 %v2360, %v2359
      %v2382 = vpack.c.bf16 %v2363, %v2362
      %v2383 = vpack.c.bf16 %v2366, %v2365
      %v2400 = vunpack.c.l.b16 %v2368
      %v2401 = vunpack.c.h.b16 %v2368
      %v2402 = vunpack.c.l.b16 %v2369
      %v2403 = vunpack.c.h.b16 %v2369
      %v2404 = vunpack.c.l.b16 %v2370
      %v2405 = vunpack.c.h.b16 %v2370
      %v2406 = vunpack.c.l.b16 %v2371
      %v2407 = vunpack.c.h.b16 %v2371
      %v2408 = vunpack.c.l.b16 %v2372
      %v2409 = vunpack.c.h.b16 %v2372
      %v2410 = vunpack.c.l.b16 %v2373
      %v2411 = vunpack.c.h.b16 %v2373
      %v2412 = vunpack.c.l.b16 %v2374
      %v2413 = vunpack.c.h.b16 %v2374
      %v2414 = vunpack.c.l.b16 %v2375
      %v2415 = vunpack.c.h.b16 %v2375
      %v2416 = vunpack.c.l.b16 %v2376
      %v2417 = vunpack.c.h.b16 %v2376
      %v2418 = vunpack.c.l.b16 %v2377
      %v2419 = vunpack.c.h.b16 %v2377
      %v2420 = vunpack.c.l.b16 %v2378
      %v2421 = vunpack.c.h.b16 %v2378
      %v2422 = vunpack.c.l.b16 %v2379
      %v2423 = vunpack.c.h.b16 %v2379
      %v2424 = vunpack.c.l.b16 %v2380
      %v2425 = vunpack.c.h.b16 %v2380
      %v2426 = vunpack.c.l.b16 %v2381
      %v2427 = vunpack.c.h.b16 %v2381
      %v2428 = vunpack.c.l.b16 %v2382
      %v2429 = vunpack.c.h.b16 %v2382
      %v2430 = vunpack.c.l.b16 %v2383
      %v2431 = vunpack.c.h.b16 %v2383
      %v2432 = vpack.c.b16 %v2400, %v2400
      %v2433 = vpack.c.b16 %v2401, %v2401
      %v2434 = vpack.c.b16 %v2402, %v2402
      %v2435 = vpack.c.b16 %v2403, %v2403
      %v2436 = vpack.c.b16 %v2404, %v2404
      %v2437 = vpack.c.b16 %v2405, %v2405
      %v2438 = vpack.c.b16 %v2406, %v2406
      %v2439 = vpack.c.b16 %v2407, %v2407
      %v2440 = vpack.c.b16 %v2408, %v2408
      %v2441 = vpack.c.b16 %v2409, %v2409
      %v2442 = vpack.c.b16 %v2410, %v2410
      %v2443 = vpack.c.b16 %v2411, %v2411
      %v2444 = vpack.c.b16 %v2412, %v2412
      %v2445 = vpack.c.b16 %v2413, %v2413
      %v2446 = vpack.c.b16 %v2414, %v2414
      %v2447 = vpack.c.b16 %v2415, %v2415
      %v2448 = vpack.c.b16 %v2416, %v2416
      %v2449 = vpack.c.b16 %v2417, %v2417
      %v2450 = vpack.c.b16 %v2418, %v2418
      %v2451 = vpack.c.b16 %v2419, %v2419
      %v2452 = vpack.c.b16 %v2420, %v2420
      %v2453 = vpack.c.b16 %v2421, %v2421
      %v2454 = vpack.c.b16 %v2422, %v2422
      %v2455 = vpack.c.b16 %v2423, %v2423
      %v2456 = vpack.c.b16 %v2424, %v2424
      %v2457 = vpack.c.b16 %v2425, %v2425
      %v2458 = vpack.c.b16 %v2426, %v2426
      %v2459 = vpack.c.b16 %v2427, %v2427
      %v2460 = vpack.c.b16 %v2428, %v2428
      %v2461 = vpack.c.b16 %v2429, %v2429
      %v2462 = vpack.c.b16 %v2430, %v2430
      %v2463 = vpack.c.b16 %v2431, %v2431
      %2464 = vrot.lane.b32.xlu0 %v2432, 24
      %v2465 = vpop.permute.xlu0 %2464
      %2466 = vrot.lane.b32.xlu0 %v2433, 24
      %v2467 = vpop.permute.xlu0 %2466
      %2468 = vrot.lane.b32.xlu0 %v2434, 24
      %v2469 = vpop.permute.xlu0 %2468
      %2470 = vrot.lane.b32.xlu0 %v2435, 24
      %v2471 = vpop.permute.xlu0 %2470
      %2472 = vrot.lane.b32.xlu0 %v2436, 24
      %v2473 = vpop.permute.xlu0 %2472
      %2474 = vrot.lane.b32.xlu0 %v2437, 24
      %v2475 = vpop.permute.xlu0 %2474
      %2476 = vrot.lane.b32.xlu0 %v2438, 24
      %v2477 = vpop.permute.xlu0 %2476
      %2478 = vrot.lane.b32.xlu0 %v2439, 24
      %v2479 = vpop.permute.xlu0 %2478
      %2480 = vrot.lane.b32.xlu0 %v2440, 24
      %v2481 = vpop.permute.xlu0 %2480
      %2482 = vrot.lane.b32.xlu0 %v2441, 24
      %v2483 = vpop.permute.xlu0 %2482
      %2484 = vrot.lane.b32.xlu0 %v2442, 24
      %v2485 = vpop.permute.xlu0 %2484
      %2486 = vrot.lane.b32.xlu0 %v2443, 24
      %v2487 = vpop.permute.xlu0 %2486
      %2488 = vrot.lane.b32.xlu0 %v2444, 24
      %v2489 = vpop.permute.xlu0 %2488
      %2490 = vrot.lane.b32.xlu0 %v2445, 24
      %v2491 = vpop.permute.xlu0 %2490
      %2492 = vrot.lane.b32.xlu0 %v2446, 24
      %v2493 = vpop.permute.xlu0 %2492
      %2494 = vrot.lane.b32.xlu0 %v2447, 24
      %v2495 = vpop.permute.xlu0 %2494
      %2496 = vrot.lane.b32.xlu0 %v2448, 24
      %v2497 = vpop.permute.xlu0 %2496
      %2498 = vrot.lane.b32.xlu0 %v2449, 24
      %v2499 = vpop.permute.xlu0 %2498
      %2500 = vrot.lane.b32.xlu0 %v2450, 24
      %v2501 = vpop.permute.xlu0 %2500
      %2502 = vrot.lane.b32.xlu0 %v2451, 24
      %v2503 = vpop.permute.xlu0 %2502
      %2504 = vrot.lane.b32.xlu0 %v2452, 24
      %v2505 = vpop.permute.xlu0 %2504
      %2506 = vrot.lane.b32.xlu0 %v2453, 24
      %v2507 = vpop.permute.xlu0 %2506
      %2508 = vrot.lane.b32.xlu0 %v2454, 24
      %v2509 = vpop.permute.xlu0 %2508
      %2510 = vrot.lane.b32.xlu0 %v2455, 24
      %v2511 = vpop.permute.xlu0 %2510
      %2512 = vrot.lane.b32.xlu0 %v2456, 24
      %v2513 = vpop.permute.xlu0 %2512
      %2514 = vrot.lane.b32.xlu0 %v2457, 24
      %v2515 = vpop.permute.xlu0 %2514
      %2516 = vrot.lane.b32.xlu0 %v2458, 24
      %v2517 = vpop.permute.xlu0 %2516
      %2518 = vrot.lane.b32.xlu0 %v2459, 24
      %v2519 = vpop.permute.xlu0 %2518
      %2520 = vrot.lane.b32.xlu0 %v2460, 24
      %v2521 = vpop.permute.xlu0 %2520
      %2522 = vrot.lane.b32.xlu0 %v2461, 24
      %v2523 = vpop.permute.xlu0 %2522
      %2524 = vrot.lane.b32.xlu0 %v2462, 24
      %v2525 = vpop.permute.xlu0 %2524
      %2526 = vrot.lane.b32.xlu0 %v2463, 24
      %v2527 = vpop.permute.xlu0 %2526
      %vm2560 = vcmask 224448
      %2561 = vst.msk [vmem:[#allocation2] sm:$0xf] %vm2560, %v2465
      %2562 = vst.msk [vmem:[#allocation2 + $0x4] sm:$0xf] %vm2560, %v2467
      %2563 = vst.msk [vmem:[#allocation2 + $0x8] sm:$0xf] %vm2560, %v2469
      %2564 = vst.msk [vmem:[#allocation2 + $0xc] sm:$0xf] %vm2560, %v2471
      %2565 = vst.msk [vmem:[#allocation2 + $0x10] sm:$0xf] %vm2560, %v2473
      %2566 = vst.msk [vmem:[#allocation2 + $0x14] sm:$0xf] %vm2560, %v2475
      %2567 = vst.msk [vmem:[#allocation2 + $0x18] sm:$0xf] %vm2560, %v2477
      %2568 = vst.msk [vmem:[#allocation2 + $0x1c] sm:$0xf] %vm2560, %v2479
      %2569 = vst.msk [vmem:[#allocation2 + $0x20] sm:$0xf] %vm2560, %v2481
      %2570 = vst.msk [vmem:[#allocation2 + $0x24] sm:$0xf] %vm2560, %v2483
      %2571 = vst.msk [vmem:[#allocation2 + $0x28] sm:$0xf] %vm2560, %v2485
      %2572 = vst.msk [vmem:[#allocation2 + $0x2c] sm:$0xf] %vm2560, %v2487
      %2573 = vst.msk [vmem:[#allocation2 + $0x30] sm:$0xf] %vm2560, %v2489
      %2574 = vst.msk [vmem:[#allocation2 + $0x34] sm:$0xf] %vm2560, %v2491
      %2575 = vst.msk [vmem:[#allocation2 + $0x38] sm:$0xf] %vm2560, %v2493
      %2576 = vst.msk [vmem:[#allocation2 + $0x3c] sm:$0xf] %vm2560, %v2495
      %2577 = vst.msk [vmem:[#allocation2 + $0x40] sm:$0xf] %vm2560, %v2497
      %2578 = vst.msk [vmem:[#allocation2 + $0x44] sm:$0xf] %vm2560, %v2499
      %2579 = vst.msk [vmem:[#allocation2 + $0x48] sm:$0xf] %vm2560, %v2501
      %2580 = vst.msk [vmem:[#allocation2 + $0x4c] sm:$0xf] %vm2560, %v2503
      %2581 = vst.msk [vmem:[#allocation2 + $0x50] sm:$0xf] %vm2560, %v2505
      %2582 = vst.msk [vmem:[#allocation2 + $0x54] sm:$0xf] %vm2560, %v2507
      %2583 = vst.msk [vmem:[#allocation2 + $0x58] sm:$0xf] %vm2560, %v2509
      %2584 = vst.msk [vmem:[#allocation2 + $0x5c] sm:$0xf] %vm2560, %v2511
      %2585 = vst.msk [vmem:[#allocation2 + $0x60] sm:$0xf] %vm2560, %v2513
      %2586 = vst.msk [vmem:[#allocation2 + $0x64] sm:$0xf] %vm2560, %v2515
      %2587 = vst.msk [vmem:[#allocation2 + $0x68] sm:$0xf] %vm2560, %v2517
      %2588 = vst.msk [vmem:[#allocation2 + $0x6c] sm:$0xf] %vm2560, %v2519
      %2589 = vst.msk [vmem:[#allocation2 + $0x70] sm:$0xf] %vm2560, %v2521
      %2590 = vst.msk [vmem:[#allocation2 + $0x74] sm:$0xf] %vm2560, %v2523
      %2591 = vst.msk [vmem:[#allocation2 + $0x78] sm:$0xf] %vm2560, %v2525
      %2592 = vst.msk [vmem:[#allocation2 + $0x7c] sm:$0xf] %vm2560, %v2527
      %v2641 = vrot.slane %v2320, 1
      %v2642 = vrot.slane %v2321, 1
      %v2643 = vsel %vm545, %v2641, %v2642
      %v2644 = vrot.slane %v2322, 1
      %v2645 = vsel %vm545, %v2642, %v2644
      %v2646 = vrot.slane %v2323, 1
      %v2647 = vrot.slane %v2324, 1
      %v2648 = vsel %vm545, %v2646, %v2647
      %v2649 = vrot.slane %v2325, 1
      %v2650 = vsel %vm545, %v2647, %v2649
      %v2651 = vrot.slane %v2326, 1
      %v2652 = vrot.slane %v2327, 1
      %v2653 = vsel %vm545, %v2651, %v2652
      %v2654 = vrot.slane %v2328, 1
      %v2655 = vsel %vm545, %v2652, %v2654
      %v2656 = vrot.slane %v2329, 1
      %v2657 = vrot.slane %v2330, 1
      %v2658 = vsel %vm545, %v2656, %v2657
      %v2659 = vrot.slane %v2331, 1
      %v2660 = vsel %vm545, %v2657, %v2659
      %v2661 = vrot.slane %v2332, 1
      %v2662 = vrot.slane %v2333, 1
      %v2663 = vsel %vm545, %v2661, %v2662
      %v2664 = vrot.slane %v2334, 1
      %v2665 = vsel %vm545, %v2662, %v2664
      %v2666 = vrot.slane %v2335, 1
      %v2667 = vrot.slane %v2336, 1
      %v2668 = vsel %vm545, %v2666, %v2667
      %v2669 = vrot.slane %v2337, 1
      %v2670 = vsel %vm545, %v2667, %v2669
      %v2671 = vrot.slane %v2338, 1
      %v2672 = vrot.slane %v2339, 1
      %v2673 = vsel %vm545, %v2671, %v2672
      %v2674 = vrot.slane %v2340, 1
      %v2675 = vsel %vm545, %v2672, %v2674
      %v2676 = vrot.slane %v2341, 1
      %v2677 = vrot.slane %v2342, 1
      %v2678 = vsel %vm545, %v2676, %v2677
      %v2679 = vrot.slane %v2343, 1
      %v2680 = vsel %vm545, %v2677, %v2679
      %v2681 = vrot.slane %v2344, 1
      %v2682 = vrot.slane %v2345, 1
      %v2683 = vsel %vm545, %v2681, %v2682
      %v2684 = vrot.slane %v2346, 1
      %v2685 = vsel %vm545, %v2682, %v2684
      %v2686 = vrot.slane %v2347, 1
      %v2687 = vrot.slane %v2348, 1
      %v2688 = vsel %vm545, %v2686, %v2687
      %v2689 = vrot.slane %v2349, 1
      %v2690 = vsel %vm545, %v2687, %v2689
      %v2691 = vrot.slane %v2350, 1
      %v2692 = vrot.slane %v2351, 1
      %v2693 = vsel %vm545, %v2691, %v2692
      %v2694 = vrot.slane %v2352, 1
      %v2695 = vsel %vm545, %v2692, %v2694
      %v2696 = vrot.slane %v2353, 1
      %v2697 = vrot.slane %v2354, 1
      %v2698 = vsel %vm545, %v2696, %v2697
      %v2699 = vrot.slane %v2355, 1
      %v2700 = vsel %vm545, %v2697, %v2699
      %v2701 = vrot.slane %v2356, 1
      %v2702 = vrot.slane %v2357, 1
      %v2703 = vsel %vm545, %v2701, %v2702
      %v2704 = vrot.slane %v2358, 1
      %v2705 = vsel %vm545, %v2702, %v2704
      %v2706 = vrot.slane %v2359, 1
      %v2707 = vrot.slane %v2360, 1
      %v2708 = vsel %vm545, %v2706, %v2707
      %v2709 = vrot.slane %v2361, 1
      %v2710 = vsel %vm545, %v2707, %v2709
      %v2711 = vrot.slane %v2362, 1
      %v2712 = vrot.slane %v2363, 1
      %v2713 = vsel %vm545, %v2711, %v2712
      %v2714 = vrot.slane %v2364, 1
      %v2715 = vsel %vm545, %v2712, %v2714
      %v2716 = vrot.slane %v2365, 1
      %v2717 = vrot.slane %v2366, 1
      %v2718 = vsel %vm545, %v2716, %v2717
      %v2719 = vrot.slane %v2367, 1
      %v2720 = vsel %vm545, %v2717, %v2719
      %v2753 = vpack.c.bf16 %v2645, %v2643
      %v2754 = vpack.c.bf16 %v2650, %v2648
      %v2755 = vpack.c.bf16 %v2655, %v2653
      %v2756 = vpack.c.bf16 %v2660, %v2658
      %v2757 = vpack.c.bf16 %v2665, %v2663
      %v2758 = vpack.c.bf16 %v2670, %v2668
      %v2759 = vpack.c.bf16 %v2675, %v2673
      %v2760 = vpack.c.bf16 %v2680, %v2678
      %v2761 = vpack.c.bf16 %v2685, %v2683
      %v2762 = vpack.c.bf16 %v2690, %v2688
      %v2763 = vpack.c.bf16 %v2695, %v2693
      %v2764 = vpack.c.bf16 %v2700, %v2698
      %v2765 = vpack.c.bf16 %v2705, %v2703
      %v2766 = vpack.c.bf16 %v2710, %v2708
      %v2767 = vpack.c.bf16 %v2715, %v2713
      %v2768 = vpack.c.bf16 %v2720, %v2718
      %v2785 = vunpack.c.l.b16 %v2753
      %v2786 = vunpack.c.h.b16 %v2753
      %v2787 = vunpack.c.l.b16 %v2754
      %v2788 = vunpack.c.h.b16 %v2754
      %v2789 = vunpack.c.l.b16 %v2755
      %v2790 = vunpack.c.h.b16 %v2755
      %v2791 = vunpack.c.l.b16 %v2756
      %v2792 = vunpack.c.h.b16 %v2756
      %v2793 = vunpack.c.l.b16 %v2757
      %v2794 = vunpack.c.h.b16 %v2757
      %v2795 = vunpack.c.l.b16 %v2758
      %v2796 = vunpack.c.h.b16 %v2758
      %v2797 = vunpack.c.l.b16 %v2759
      %v2798 = vunpack.c.h.b16 %v2759
      %v2799 = vunpack.c.l.b16 %v2760
      %v2800 = vunpack.c.h.b16 %v2760
      %v2801 = vunpack.c.l.b16 %v2761
      %v2802 = vunpack.c.h.b16 %v2761
      %v2803 = vunpack.c.l.b16 %v2762
      %v2804 = vunpack.c.h.b16 %v2762
      %v2805 = vunpack.c.l.b16 %v2763
      %v2806 = vunpack.c.h.b16 %v2763
      %v2807 = vunpack.c.l.b16 %v2764
      %v2808 = vunpack.c.h.b16 %v2764
      %v2809 = vunpack.c.l.b16 %v2765
      %v2810 = vunpack.c.h.b16 %v2765
      %v2811 = vunpack.c.l.b16 %v2766
      %v2812 = vunpack.c.h.b16 %v2766
      %v2813 = vunpack.c.l.b16 %v2767
      %v2814 = vunpack.c.h.b16 %v2767
      %v2815 = vunpack.c.l.b16 %v2768
      %v2816 = vunpack.c.h.b16 %v2768
      %v2817 = vpack.c.b16 %v2785, %v2785
      %v2818 = vpack.c.b16 %v2786, %v2786
      %v2819 = vpack.c.b16 %v2787, %v2787
      %v2820 = vpack.c.b16 %v2788, %v2788
      %v2821 = vpack.c.b16 %v2789, %v2789
      %v2822 = vpack.c.b16 %v2790, %v2790
      %v2823 = vpack.c.b16 %v2791, %v2791
      %v2824 = vpack.c.b16 %v2792, %v2792
      %v2825 = vpack.c.b16 %v2793, %v2793
      %v2826 = vpack.c.b16 %v2794, %v2794
      %v2827 = vpack.c.b16 %v2795, %v2795
      %v2828 = vpack.c.b16 %v2796, %v2796
      %v2829 = vpack.c.b16 %v2797, %v2797
      %v2830 = vpack.c.b16 %v2798, %v2798
      %v2831 = vpack.c.b16 %v2799, %v2799
      %v2832 = vpack.c.b16 %v2800, %v2800
      %v2833 = vpack.c.b16 %v2801, %v2801
      %v2834 = vpack.c.b16 %v2802, %v2802
      %v2835 = vpack.c.b16 %v2803, %v2803
      %v2836 = vpack.c.b16 %v2804, %v2804
      %v2837 = vpack.c.b16 %v2805, %v2805
      %v2838 = vpack.c.b16 %v2806, %v2806
      %v2839 = vpack.c.b16 %v2807, %v2807
      %v2840 = vpack.c.b16 %v2808, %v2808
      %v2841 = vpack.c.b16 %v2809, %v2809
      %v2842 = vpack.c.b16 %v2810, %v2810
      %v2843 = vpack.c.b16 %v2811, %v2811
      %v2844 = vpack.c.b16 %v2812, %v2812
      %v2845 = vpack.c.b16 %v2813, %v2813
      %v2846 = vpack.c.b16 %v2814, %v2814
      %v2847 = vpack.c.b16 %v2815, %v2815
      %v2848 = vpack.c.b16 %v2816, %v2816
      %2849 = vrot.lane.b32.xlu0 %v2817, 28
      %v2850 = vpop.permute.xlu0 %2849
      %2851 = vrot.lane.b32.xlu0 %v2818, 28
      %v2852 = vpop.permute.xlu0 %2851
      %2853 = vrot.lane.b32.xlu0 %v2819, 28
      %v2854 = vpop.permute.xlu0 %2853
      %2855 = vrot.lane.b32.xlu0 %v2820, 28
      %v2856 = vpop.permute.xlu0 %2855
      %2857 = vrot.lane.b32.xlu0 %v2821, 28
      %v2858 = vpop.permute.xlu0 %2857
      %2859 = vrot.lane.b32.xlu0 %v2822, 28
      %v2860 = vpop.permute.xlu0 %2859
      %2861 = vrot.lane.b32.xlu0 %v2823, 28
      %v2862 = vpop.permute.xlu0 %2861
      %2863 = vrot.lane.b32.xlu0 %v2824, 28
      %v2864 = vpop.permute.xlu0 %2863
      %2865 = vrot.lane.b32.xlu0 %v2825, 28
      %v2866 = vpop.permute.xlu0 %2865
      %2867 = vrot.lane.b32.xlu0 %v2826, 28
      %v2868 = vpop.permute.xlu0 %2867
      %2869 = vrot.lane.b32.xlu0 %v2827, 28
      %v2870 = vpop.permute.xlu0 %2869
      %2871 = vrot.lane.b32.xlu0 %v2828, 28
      %v2872 = vpop.permute.xlu0 %2871
      %2873 = vrot.lane.b32.xlu0 %v2829, 28
      %v2874 = vpop.permute.xlu0 %2873
      %2875 = vrot.lane.b32.xlu0 %v2830, 28
      %v2876 = vpop.permute.xlu0 %2875
      %2877 = vrot.lane.b32.xlu0 %v2831, 28
      %v2878 = vpop.permute.xlu0 %2877
      %2879 = vrot.lane.b32.xlu0 %v2832, 28
      %v2880 = vpop.permute.xlu0 %2879
      %2881 = vrot.lane.b32.xlu0 %v2833, 28
      %v2882 = vpop.permute.xlu0 %2881
      %2883 = vrot.lane.b32.xlu0 %v2834, 28
      %v2884 = vpop.permute.xlu0 %2883
      %2885 = vrot.lane.b32.xlu0 %v2835, 28
      %v2886 = vpop.permute.xlu0 %2885
      %2887 = vrot.lane.b32.xlu0 %v2836, 28
      %v2888 = vpop.permute.xlu0 %2887
      %2889 = vrot.lane.b32.xlu0 %v2837, 28
      %v2890 = vpop.permute.xlu0 %2889
      %2891 = vrot.lane.b32.xlu0 %v2838, 28
      %v2892 = vpop.permute.xlu0 %2891
      %2893 = vrot.lane.b32.xlu0 %v2839, 28
      %v2894 = vpop.permute.xlu0 %2893
      %2895 = vrot.lane.b32.xlu0 %v2840, 28
      %v2896 = vpop.permute.xlu0 %2895
      %2897 = vrot.lane.b32.xlu0 %v2841, 28
      %v2898 = vpop.permute.xlu0 %2897
      %2899 = vrot.lane.b32.xlu0 %v2842, 28
      %v2900 = vpop.permute.xlu0 %2899
      %2901 = vrot.lane.b32.xlu0 %v2843, 28
      %v2902 = vpop.permute.xlu0 %2901
      %2903 = vrot.lane.b32.xlu0 %v2844, 28
      %v2904 = vpop.permute.xlu0 %2903
      %2905 = vrot.lane.b32.xlu0 %v2845, 28
      %v2906 = vpop.permute.xlu0 %2905
      %2907 = vrot.lane.b32.xlu0 %v2846, 28
      %v2908 = vpop.permute.xlu0 %2907
      %2909 = vrot.lane.b32.xlu0 %v2847, 28
      %v2910 = vpop.permute.xlu0 %2909
      %2911 = vrot.lane.b32.xlu0 %v2848, 28
      %v2912 = vpop.permute.xlu0 %2911
      %vm2945 = vcmask 257248
      %2946 = vst.msk [vmem:[#allocation2] sm:$0xf] %vm2945, %v2850
      %2947 = vst.msk [vmem:[#allocation2 + $0x4] sm:$0xf] %vm2945, %v2852
      %2948 = vst.msk [vmem:[#allocation2 + $0x8] sm:$0xf] %vm2945, %v2854
      %2949 = vst.msk [vmem:[#allocation2 + $0xc] sm:$0xf] %vm2945, %v2856
      %2950 = vst.msk [vmem:[#allocation2 + $0x10] sm:$0xf] %vm2945, %v2858
      %2951 = vst.msk [vmem:[#allocation2 + $0x14] sm:$0xf] %vm2945, %v2860
      %2952 = vst.msk [vmem:[#allocation2 + $0x18] sm:$0xf] %vm2945, %v2862
      %2953 = vst.msk [vmem:[#allocation2 + $0x1c] sm:$0xf] %vm2945, %v2864
      %2954 = vst.msk [vmem:[#allocation2 + $0x20] sm:$0xf] %vm2945, %v2866
      %2955 = vst.msk [vmem:[#allocation2 + $0x24] sm:$0xf] %vm2945, %v2868
      %2956 = vst.msk [vmem:[#allocation2 + $0x28] sm:$0xf] %vm2945, %v2870
      %2957 = vst.msk [vmem:[#allocation2 + $0x2c] sm:$0xf] %vm2945, %v2872
      %2958 = vst.msk [vmem:[#allocation2 + $0x30] sm:$0xf] %vm2945, %v2874
      %2959 = vst.msk [vmem:[#allocation2 + $0x34] sm:$0xf] %vm2945, %v2876
      %2960 = vst.msk [vmem:[#allocation2 + $0x38] sm:$0xf] %vm2945, %v2878
      %2961 = vst.msk [vmem:[#allocation2 + $0x3c] sm:$0xf] %vm2945, %v2880
      %2962 = vst.msk [vmem:[#allocation2 + $0x40] sm:$0xf] %vm2945, %v2882
      %2963 = vst.msk [vmem:[#allocation2 + $0x44] sm:$0xf] %vm2945, %v2884
      %2964 = vst.msk [vmem:[#allocation2 + $0x48] sm:$0xf] %vm2945, %v2886
      %2965 = vst.msk [vmem:[#allocation2 + $0x4c] sm:$0xf] %vm2945, %v2888
      %2966 = vst.msk [vmem:[#allocation2 + $0x50] sm:$0xf] %vm2945, %v2890
      %2967 = vst.msk [vmem:[#allocation2 + $0x54] sm:$0xf] %vm2945, %v2892
      %2968 = vst.msk [vmem:[#allocation2 + $0x58] sm:$0xf] %vm2945, %v2894
      %2969 = vst.msk [vmem:[#allocation2 + $0x5c] sm:$0xf] %vm2945, %v2896
      %2970 = vst.msk [vmem:[#allocation2 + $0x60] sm:$0xf] %vm2945, %v2898
      %2971 = vst.msk [vmem:[#allocation2 + $0x64] sm:$0xf] %vm2945, %v2900
      %2972 = vst.msk [vmem:[#allocation2 + $0x68] sm:$0xf] %vm2945, %v2902
      %2973 = vst.msk [vmem:[#allocation2 + $0x6c] sm:$0xf] %vm2945, %v2904
      %2974 = vst.msk [vmem:[#allocation2 + $0x70] sm:$0xf] %vm2945, %v2906
      %2975 = vst.msk [vmem:[#allocation2 + $0x74] sm:$0xf] %vm2945, %v2908
      %2976 = vst.msk [vmem:[#allocation2 + $0x78] sm:$0xf] %vm2945, %v2910
      %2977 = vst.msk [vmem:[#allocation2 + $0x7c] sm:$0xf] %vm2945, %v2912
      %v2978 = vrot.slane %v2320, 2
      %v2979 = vrot.slane %v2321, 2
      %v2980 = vsel %vm883, %v2978, %v2979
      %v2981 = vrot.slane %v2322, 2
      %v2982 = vsel %vm883, %v2979, %v2981
      %v2983 = vrot.slane %v2323, 2
      %v2984 = vrot.slane %v2324, 2
      %v2985 = vsel %vm883, %v2983, %v2984
      %v2986 = vrot.slane %v2325, 2
      %v2987 = vsel %vm883, %v2984, %v2986
      %v2988 = vrot.slane %v2326, 2
      %v2989 = vrot.slane %v2327, 2
      %v2990 = vsel %vm883, %v2988, %v2989
      %v2991 = vrot.slane %v2328, 2
      %v2992 = vsel %vm883, %v2989, %v2991
      %v2993 = vrot.slane %v2329, 2
      %v2994 = vrot.slane %v2330, 2
      %v2995 = vsel %vm883, %v2993, %v2994
      %v2996 = vrot.slane %v2331, 2
      %v2997 = vsel %vm883, %v2994, %v2996
      %v2998 = vrot.slane %v2332, 2
      %v2999 = vrot.slane %v2333, 2
      %v3000 = vsel %vm883, %v2998, %v2999
      %v3001 = vrot.slane %v2334, 2
      %v3002 = vsel %vm883, %v2999, %v3001
      %v3003 = vrot.slane %v2335, 2
      %v3004 = vrot.slane %v2336, 2
      %v3005 = vsel %vm883, %v3003, %v3004
      %v3006 = vrot.slane %v2337, 2
      %v3007 = vsel %vm883, %v3004, %v3006
      %v3008 = vrot.slane %v2338, 2
      %v3009 = vrot.slane %v2339, 2
      %v3010 = vsel %vm883, %v3008, %v3009
      %v3011 = vrot.slane %v2340, 2
      %v3012 = vsel %vm883, %v3009, %v3011
      %v3013 = vrot.slane %v2341, 2
      %v3014 = vrot.slane %v2342, 2
      %v3015 = vsel %vm883, %v3013, %v3014
      %v3016 = vrot.slane %v2343, 2
      %v3017 = vsel %vm883, %v3014, %v3016
      %v3018 = vrot.slane %v2344, 2
      %v3019 = vrot.slane %v2345, 2
      %v3020 = vsel %vm883, %v3018, %v3019
      %v3021 = vrot.slane %v2346, 2
      %v3022 = vsel %vm883, %v3019, %v3021
      %v3023 = vrot.slane %v2347, 2
      %v3024 = vrot.slane %v2348, 2
      %v3025 = vsel %vm883, %v3023, %v3024
      %v3026 = vrot.slane %v2349, 2
      %v3027 = vsel %vm883, %v3024, %v3026
      %v3028 = vrot.slane %v2350, 2
      %v3029 = vrot.slane %v2351, 2
      %v3030 = vsel %vm883, %v3028, %v3029
      %v3031 = vrot.slane %v2352, 2
      %v3032 = vsel %vm883, %v3029, %v3031
      %v3033 = vrot.slane %v2353, 2
      %v3034 = vrot.slane %v2354, 2
      %v3035 = vsel %vm883, %v3033, %v3034
      %v3036 = vrot.slane %v2355, 2
      %v3037 = vsel %vm883, %v3034, %v3036
      %v3038 = vrot.slane %v2356, 2
      %v3039 = vrot.slane %v2357, 2
      %v3040 = vsel %vm883, %v3038, %v3039
      %v3041 = vrot.slane %v2358, 2
      %v3042 = vsel %vm883, %v3039, %v3041
      %v3043 = vrot.slane %v2359, 2
      %v3044 = vrot.slane %v2360, 2
      %v3045 = vsel %vm883, %v3043, %v3044
      %v3046 = vrot.slane %v2361, 2
      %v3047 = vsel %vm883, %v3044, %v3046
      %v3048 = vrot.slane %v2362, 2
      %v3049 = vrot.slane %v2363, 2
      %v3050 = vsel %vm883, %v3048, %v3049
      %v3051 = vrot.slane %v2364, 2
      %v3052 = vsel %vm883, %v3049, %v3051
      %v3053 = vrot.slane %v2365, 2
      %v3054 = vrot.slane %v2366, 2
      %v3055 = vsel %vm883, %v3053, %v3054
      %v3056 = vrot.slane %v2367, 2
      %v3057 = vsel %vm883, %v3054, %v3056
      %v3090 = vpack.c.bf16 %v2982, %v2980
      %v3091 = vpack.c.bf16 %v2987, %v2985
      %v3092 = vpack.c.bf16 %v2992, %v2990
      %v3093 = vpack.c.bf16 %v2997, %v2995
      %v3094 = vpack.c.bf16 %v3002, %v3000
      %v3095 = vpack.c.bf16 %v3007, %v3005
      %v3096 = vpack.c.bf16 %v3012, %v3010
      %v3097 = vpack.c.bf16 %v3017, %v3015
      %v3098 = vpack.c.bf16 %v3022, %v3020
      %v3099 = vpack.c.bf16 %v3027, %v3025
      %v3100 = vpack.c.bf16 %v3032, %v3030
      %v3101 = vpack.c.bf16 %v3037, %v3035
      %v3102 = vpack.c.bf16 %v3042, %v3040
      %v3103 = vpack.c.bf16 %v3047, %v3045
      %v3104 = vpack.c.bf16 %v3052, %v3050
      %v3105 = vpack.c.bf16 %v3057, %v3055
      %v3122 = vunpack.c.l.b16 %v3090
      %v3123 = vunpack.c.h.b16 %v3090
      %v3124 = vunpack.c.l.b16 %v3091
      %v3125 = vunpack.c.h.b16 %v3091
      %v3126 = vunpack.c.l.b16 %v3092
      %v3127 = vunpack.c.h.b16 %v3092
      %v3128 = vunpack.c.l.b16 %v3093
      %v3129 = vunpack.c.h.b16 %v3093
      %v3130 = vunpack.c.l.b16 %v3094
      %v3131 = vunpack.c.h.b16 %v3094
      %v3132 = vunpack.c.l.b16 %v3095
      %v3133 = vunpack.c.h.b16 %v3095
      %v3134 = vunpack.c.l.b16 %v3096
      %v3135 = vunpack.c.h.b16 %v3096
      %v3136 = vunpack.c.l.b16 %v3097
      %v3137 = vunpack.c.h.b16 %v3097
      %v3138 = vunpack.c.l.b16 %v3098
      %v3139 = vunpack.c.h.b16 %v3098
      %v3140 = vunpack.c.l.b16 %v3099
      %v3141 = vunpack.c.h.b16 %v3099
      %v3142 = vunpack.c.l.b16 %v3100
      %v3143 = vunpack.c.h.b16 %v3100
      %v3144 = vunpack.c.l.b16 %v3101
      %v3145 = vunpack.c.h.b16 %v3101
      %v3146 = vunpack.c.l.b16 %v3102
      %v3147 = vunpack.c.h.b16 %v3102
      %v3148 = vunpack.c.l.b16 %v3103
      %v3149 = vunpack.c.h.b16 %v3103
      %v3150 = vunpack.c.l.b16 %v3104
      %v3151 = vunpack.c.h.b16 %v3104
      %v3152 = vunpack.c.l.b16 %v3105
      %v3153 = vunpack.c.h.b16 %v3105
      %v3154 = vpack.c.b16 %v3122, %v3122
      %v3155 = vpack.c.b16 %v3123, %v3123
      %v3156 = vpack.c.b16 %v3124, %v3124
      %v3157 = vpack.c.b16 %v3125, %v3125
      %v3158 = vpack.c.b16 %v3126, %v3126
      %v3159 = vpack.c.b16 %v3127, %v3127
      %v3160 = vpack.c.b16 %v3128, %v3128
      %v3161 = vpack.c.b16 %v3129, %v3129
      %v3162 = vpack.c.b16 %v3130, %v3130
      %v3163 = vpack.c.b16 %v3131, %v3131
      %v3164 = vpack.c.b16 %v3132, %v3132
      %v3165 = vpack.c.b16 %v3133, %v3133
      %v3166 = vpack.c.b16 %v3134, %v3134
      %v3167 = vpack.c.b16 %v3135, %v3135
      %v3168 = vpack.c.b16 %v3136, %v3136
      %v3169 = vpack.c.b16 %v3137, %v3137
      %v3170 = vpack.c.b16 %v3138, %v3138
      %v3171 = vpack.c.b16 %v3139, %v3139
      %v3172 = vpack.c.b16 %v3140, %v3140
      %v3173 = vpack.c.b16 %v3141, %v3141
      %v3174 = vpack.c.b16 %v3142, %v3142
      %v3175 = vpack.c.b16 %v3143, %v3143
      %v3176 = vpack.c.b16 %v3144, %v3144
      %v3177 = vpack.c.b16 %v3145, %v3145
      %v3178 = vpack.c.b16 %v3146, %v3146
      %v3179 = vpack.c.b16 %v3147, %v3147
      %v3180 = vpack.c.b16 %v3148, %v3148
      %v3181 = vpack.c.b16 %v3149, %v3149
      %v3182 = vpack.c.b16 %v3150, %v3150
      %v3183 = vpack.c.b16 %v3151, %v3151
      %v3184 = vpack.c.b16 %v3152, %v3152
      %v3185 = vpack.c.b16 %v3153, %v3153
      %3186 = vrot.lane.b32.xlu0 %v3154, 32
      %v3187 = vpop.permute.xlu0 %3186
      %3188 = vrot.lane.b32.xlu0 %v3155, 32
      %v3189 = vpop.permute.xlu0 %3188
      %3190 = vrot.lane.b32.xlu0 %v3156, 32
      %v3191 = vpop.permute.xlu0 %3190
      %3192 = vrot.lane.b32.xlu0 %v3157, 32
      %v3193 = vpop.permute.xlu0 %3192
      %3194 = vrot.lane.b32.xlu0 %v3158, 32
      %v3195 = vpop.permute.xlu0 %3194
      %3196 = vrot.lane.b32.xlu0 %v3159, 32
      %v3197 = vpop.permute.xlu0 %3196
      %3198 = vrot.lane.b32.xlu0 %v3160, 32
      %v3199 = vpop.permute.xlu0 %3198
      %3200 = vrot.lane.b32.xlu0 %v3161, 32
      %v3201 = vpop.permute.xlu0 %3200
      %3202 = vrot.lane.b32.xlu0 %v3162, 32
      %v3203 = vpop.permute.xlu0 %3202
      %3204 = vrot.lane.b32.xlu0 %v3163, 32
      %v3205 = vpop.permute.xlu0 %3204
      %3206 = vrot.lane.b32.xlu0 %v3164, 32
      %v3207 = vpop.permute.xlu0 %3206
      %3208 = vrot.lane.b32.xlu0 %v3165, 32
      %v3209 = vpop.permute.xlu0 %3208
      %3210 = vrot.lane.b32.xlu0 %v3166, 32
      %v3211 = vpop.permute.xlu0 %3210
      %3212 = vrot.lane.b32.xlu0 %v3167, 32
      %v3213 = vpop.permute.xlu0 %3212
      %3214 = vrot.lane.b32.xlu0 %v3168, 32
      %v3215 = vpop.permute.xlu0 %3214
      %3216 = vrot.lane.b32.xlu0 %v3169, 32
      %v3217 = vpop.permute.xlu0 %3216
      %3218 = vrot.lane.b32.xlu0 %v3170, 32
      %v3219 = vpop.permute.xlu0 %3218
      %3220 = vrot.lane.b32.xlu0 %v3171, 32
      %v3221 = vpop.permute.xlu0 %3220
      %3222 = vrot.lane.b32.xlu0 %v3172, 32
      %v3223 = vpop.permute.xlu0 %3222
      %3224 = vrot.lane.b32.xlu0 %v3173, 32
      %v3225 = vpop.permute.xlu0 %3224
      %3226 = vrot.lane.b32.xlu0 %v3174, 32
      %v3227 = vpop.permute.xlu0 %3226
      %3228 = vrot.lane.b32.xlu0 %v3175, 32
      %v3229 = vpop.permute.xlu0 %3228
      %3230 = vrot.lane.b32.xlu0 %v3176, 32
      %v3231 = vpop.permute.xlu0 %3230
      %3232 = vrot.lane.b32.xlu0 %v3177, 32
      %v3233 = vpop.permute.xlu0 %3232
      %3234 = vrot.lane.b32.xlu0 %v3178, 32
      %v3235 = vpop.permute.xlu0 %3234
      %3236 = vrot.lane.b32.xlu0 %v3179, 32
      %v3237 = vpop.permute.xlu0 %3236
      %3238 = vrot.lane.b32.xlu0 %v3180, 32
      %v3239 = vpop.permute.xlu0 %3238
      %3240 = vrot.lane.b32.xlu0 %v3181, 32
      %v3241 = vpop.permute.xlu0 %3240
      %3242 = vrot.lane.b32.xlu0 %v3182, 32
      %v3243 = vpop.permute.xlu0 %3242
      %3244 = vrot.lane.b32.xlu0 %v3183, 32
      %v3245 = vpop.permute.xlu0 %3244
      %3246 = vrot.lane.b32.xlu0 %v3184, 32
      %v3247 = vpop.permute.xlu0 %3246
      %3248 = vrot.lane.b32.xlu0 %v3185, 32
      %v3249 = vpop.permute.xlu0 %3248
      %vm3282 = vcmask 290048
      %3283 = vst.msk [vmem:[#allocation2] sm:$0xf] %vm3282, %v3187
      %3284 = vst.msk [vmem:[#allocation2 + $0x4] sm:$0xf] %vm3282, %v3189
      %3285 = vst.msk [vmem:[#allocation2 + $0x8] sm:$0xf] %vm3282, %v3191
      %3286 = vst.msk [vmem:[#allocation2 + $0xc] sm:$0xf] %vm3282, %v3193
      %3287 = vst.msk [vmem:[#allocation2 + $0x10] sm:$0xf] %vm3282, %v3195
      %3288 = vst.msk [vmem:[#allocation2 + $0x14] sm:$0xf] %vm3282, %v3197
      %3289 = vst.msk [vmem:[#allocation2 + $0x18] sm:$0xf] %vm3282, %v3199
      %3290 = vst.msk [vmem:[#allocation2 + $0x1c] sm:$0xf] %vm3282, %v3201
      %3291 = vst.msk [vmem:[#allocation2 + $0x20] sm:$0xf] %vm3282, %v3203
      %3292 = vst.msk [vmem:[#allocation2 + $0x24] sm:$0xf] %vm3282, %v3205
      %3293 = vst.msk [vmem:[#allocation2 + $0x28] sm:$0xf] %vm3282, %v3207
      %3294 = vst.msk [vmem:[#allocation2 + $0x2c] sm:$0xf] %vm3282, %v3209
      %3295 = vst.msk [vmem:[#allocation2 + $0x30] sm:$0xf] %vm3282, %v3211
      %3296 = vst.msk [vmem:[#allocation2 + $0x34] sm:$0xf] %vm3282, %v3213
      %3297 = vst.msk [vmem:[#allocation2 + $0x38] sm:$0xf] %vm3282, %v3215
      %3298 = vst.msk [vmem:[#allocation2 + $0x3c] sm:$0xf] %vm3282, %v3217
      %3299 = vst.msk [vmem:[#allocation2 + $0x40] sm:$0xf] %vm3282, %v3219
      %3300 = vst.msk [vmem:[#allocation2 + $0x44] sm:$0xf] %vm3282, %v3221
      %3301 = vst.msk [vmem:[#allocation2 + $0x48] sm:$0xf] %vm3282, %v3223
      %3302 = vst.msk [vmem:[#allocation2 + $0x4c] sm:$0xf] %vm3282, %v3225
      %3303 = vst.msk [vmem:[#allocation2 + $0x50] sm:$0xf] %vm3282, %v3227
      %3304 = vst.msk [vmem:[#allocation2 + $0x54] sm:$0xf] %vm3282, %v3229
      %3305 = vst.msk [vmem:[#allocation2 + $0x58] sm:$0xf] %vm3282, %v3231
      %3306 = vst.msk [vmem:[#allocation2 + $0x5c] sm:$0xf] %vm3282, %v3233
      %3307 = vst.msk [vmem:[#allocation2 + $0x60] sm:$0xf] %vm3282, %v3235
      %3308 = vst.msk [vmem:[#allocation2 + $0x64] sm:$0xf] %vm3282, %v3237
      %3309 = vst.msk [vmem:[#allocation2 + $0x68] sm:$0xf] %vm3282, %v3239
      %3310 = vst.msk [vmem:[#allocation2 + $0x6c] sm:$0xf] %vm3282, %v3241
      %3311 = vst.msk [vmem:[#allocation2 + $0x70] sm:$0xf] %vm3282, %v3243
      %3312 = vst.msk [vmem:[#allocation2 + $0x74] sm:$0xf] %vm3282, %v3245
      %3313 = vst.msk [vmem:[#allocation2 + $0x78] sm:$0xf] %vm3282, %v3247
      %3314 = vst.msk [vmem:[#allocation2 + $0x7c] sm:$0xf] %vm3282, %v3249
      %v3315 = vld [vmem:[#allocation2] sm:$0xf]
      %v3316 = vld [vmem:[#allocation2 + $0x4] sm:$0xf]
      %v3317 = vld [vmem:[#allocation2 + $0x8] sm:$0xf]
      %v3318 = vld [vmem:[#allocation2 + $0xc] sm:$0xf]
      %v3319 = vld [vmem:[#allocation2 + $0x10] sm:$0xf]
      %v3320 = vld [vmem:[#allocation2 + $0x14] sm:$0xf]
      %v3321 = vld [vmem:[#allocation2 + $0x18] sm:$0xf]
      %v3322 = vld [vmem:[#allocation2 + $0x1c] sm:$0xf]
      %v3323 = vld [vmem:[#allocation2 + $0x20] sm:$0xf]
      %v3324 = vld [vmem:[#allocation2 + $0x24] sm:$0xf]
      %v3325 = vld [vmem:[#allocation2 + $0x28] sm:$0xf]
      %v3326 = vld [vmem:[#allocation2 + $0x2c] sm:$0xf]
      %v3327 = vld [vmem:[#allocation2 + $0x30] sm:$0xf]
      %v3328 = vld [vmem:[#allocation2 + $0x34] sm:$0xf]
      %v3329 = vld [vmem:[#allocation2 + $0x38] sm:$0xf]
      %v3330 = vld [vmem:[#allocation2 + $0x3c] sm:$0xf]
      %v3331 = vld [vmem:[#allocation2 + $0x40] sm:$0xf]
      %v3332 = vld [vmem:[#allocation2 + $0x44] sm:$0xf]
      %v3333 = vld [vmem:[#allocation2 + $0x48] sm:$0xf]
      %v3334 = vld [vmem:[#allocation2 + $0x4c] sm:$0xf]
      %v3335 = vld [vmem:[#allocation2 + $0x50] sm:$0xf]
      %v3336 = vld [vmem:[#allocation2 + $0x54] sm:$0xf]
      %v3337 = vld [vmem:[#allocation2 + $0x58] sm:$0xf]
      %v3338 = vld [vmem:[#allocation2 + $0x5c] sm:$0xf]
      %v3339 = vld [vmem:[#allocation2 + $0x60] sm:$0xf]
      %v3340 = vld [vmem:[#allocation2 + $0x64] sm:$0xf]
      %v3341 = vld [vmem:[#allocation2 + $0x68] sm:$0xf]
      %v3342 = vld [vmem:[#allocation2 + $0x6c] sm:$0xf]
      %v3343 = vld [vmem:[#allocation2 + $0x70] sm:$0xf]
      %v3344 = vld [vmem:[#allocation2 + $0x74] sm:$0xf]
      %v3345 = vld [vmem:[#allocation2 + $0x78] sm:$0xf]
      %v3346 = vld [vmem:[#allocation2 + $0x7c] sm:$0xf]
      %v3347 = vld [vmem:[%s1] sm:$0xf]
      %v3348 = vld [vmem:[%s1 + $0x4] sm:$0xf]
      %v3349 = vld [vmem:[%s1 + $0x8] sm:$0xf]
      %v3350 = vld [vmem:[%s1 + $0xc] sm:$0xf]
      %v3351 = vld [vmem:[%s1 + $0x10] sm:$0x3]
      %v3384 = vunpack.c.l.b16 %v3315
      %v3385 = vunpack.c.l.b16 %v3316
      %v3386 = vunpack.c.l.b16 %v3317
      %v3387 = vunpack.c.l.b16 %v3318
      %v3388 = vunpack.c.l.b16 %v3319
      %v3389 = vunpack.c.l.b16 %v3320
      %v3390 = vunpack.c.l.b16 %v3321
      %v3391 = vunpack.c.l.b16 %v3322
      %v3392 = vunpack.c.l.b16 %v3323
      %v3393 = vunpack.c.l.b16 %v3324
      %v3394 = vunpack.c.l.b16 %v3325
      %v3395 = vunpack.c.l.b16 %v3326
      %v3396 = vunpack.c.l.b16 %v3327
      %v3397 = vunpack.c.l.b16 %v3328
      %v3398 = vunpack.c.l.b16 %v3329
      %v3399 = vunpack.c.l.b16 %v3330
      %v3400 = vunpack.c.l.b16 %v3331
      %v3401 = vunpack.c.l.b16 %v3332
      %v3402 = vunpack.c.l.b16 %v3333
      %v3403 = vunpack.c.l.b16 %v3334
      %v3404 = vunpack.c.l.b16 %v3335
      %v3405 = vunpack.c.l.b16 %v3336
      %v3406 = vunpack.c.l.b16 %v3337
      %v3407 = vunpack.c.l.b16 %v3338
      %v3408 = vunpack.c.l.b16 %v3339
      %v3409 = vunpack.c.l.b16 %v3340
      %v3410 = vunpack.c.l.b16 %v3341
      %v3411 = vunpack.c.l.b16 %v3342
      %v3412 = vunpack.c.l.b16 %v3343
      %v3413 = vunpack.c.l.b16 %v3344
      %v3414 = vunpack.c.l.b16 %v3345
      %v3415 = vunpack.c.l.b16 %v3346
      %v3416 = vpack.c.b16 %v3385, %v3384
      %v3417 = vpack.c.b16 %v3387, %v3386
      %v3418 = vpack.c.b16 %v3389, %v3388
      %v3419 = vpack.c.b16 %v3391, %v3390
      %v3420 = vpack.c.b16 %v3393, %v3392
      %v3421 = vpack.c.b16 %v3395, %v3394
      %v3422 = vpack.c.b16 %v3397, %v3396
      %v3423 = vpack.c.b16 %v3399, %v3398
      %v3424 = vpack.c.b16 %v3401, %v3400
      %v3425 = vpack.c.b16 %v3403, %v3402
      %v3426 = vpack.c.b16 %v3405, %v3404
      %v3427 = vpack.c.b16 %v3407, %v3406
      %v3428 = vpack.c.b16 %v3409, %v3408
      %v3429 = vpack.c.b16 %v3411, %v3410
      %v3430 = vpack.c.b16 %v3413, %v3412
      %v3431 = vpack.c.b16 %v3415, %v3414
      %v3437 = vunpack.c.l.b16 %v3347
      %v3438 = vunpack.c.l.b16 %v3348
      %v3439 = vunpack.c.l.b16 %v3349
      %v3440 = vunpack.c.l.b16 %v3350
      %v3441 = vunpack.c.l.b16 %v3351
      %v3442 = vpack.c.b16 %v3438, %v3437
      %v3443 = vpack.c.b16 %v3440, %v3439
      %v3444 = vpack.c.b16 %v3441, %v3441
      %vm3447 = vcmask 293888
      %v3449 = vsel %vm3447, %v3416, 0
      %v3452 = vsel %vm3447, %v3417, 0
      %v3455 = vsel %vm3447, %v3418, 0
      %v3458 = vsel %vm3447, %v3419, 0
      %v3461 = vsel %vm3447, %v3420, 0
      %v3464 = vsel %vm3447, %v3421, 0
      %v3467 = vsel %vm3447, %v3422, 0
      %v3470 = vsel %vm3447, %v3423, 0
      %v3473 = vsel %vm3447, %v3424, 0
      %v3476 = vsel %vm3447, %v3425, 0
      %v3479 = vsel %vm3447, %v3426, 0
      %v3482 = vsel %vm3447, %v3427, 0
      %v3485 = vsel %vm3447, %v3428, 0
      %v3488 = vsel %vm3447, %v3429, 0
      %v3491 = vsel %vm3447, %v3430, 0
      %v3494 = vsel %vm3447, %v3431, 0
      %vm3496 = vcmask 1041408
      %v3498 = vsel %vm3496, %v3444, 0
      %3500 = vmatprep.subr.bf16.mxu0 0
      %3501 = vmatpush1.bf16.msra.mxu0 0
      %3502 = vmatprep.subr.bf16.mxu0 0
      %3503 = vmatpush1.bf16.msra.mxu0 0
      %3504 = vmatprep.subr.bf16.mxu0 0
      %3505 = vmatpush1.bf16.msra.mxu0 0
      %3506 = vmatprep.subr.bf16.mxu0 0
      %3507 = vmatpush1.bf16.msra.mxu0 0
      %3508 = vmatprep.subr.bf16.mxu0 0
      %3509 = vmatpush1.bf16.msra.mxu0 0
      %3510 = vmatprep.subr.bf16.mxu0 0
      %3511 = vmatpush1.bf16.msra.mxu0 %v3498
      %3512 = vmatprep.subr.bf16.mxu0 0
      %3513 = vmatpush1.bf16.msra.mxu0 %v3443
      %3514 = vmatprep.subr.bf16.mxu0 0
      %3515 = vmatpush1.bf16.msra.mxu0 %v3442
      %3516 = vmatprep.subr.bf16.mxu0 0
      %3517 = vmatpush2.bf16.msra.mxu0 0
      %3518 = vmatprep.subr.bf16.mxu0 0
      %3519 = vmatpush2.bf16.msra.mxu0 0
      %3520 = vmatprep.subr.bf16.mxu0 0
      %3521 = vmatpush2.bf16.msra.mxu0 0
      %3522 = vmatprep.subr.bf16.mxu0 0
      %3523 = vmatpush2.bf16.msra.mxu0 0
      %3524 = vmatprep.subr.bf16.mxu0 0
      %3525 = vmatpush2.bf16.msra.mxu0 0
      %3526 = vmatprep.subr.bf16.mxu0 0
      %3527 = vmatpush2.bf16.msra.mxu0 0
      %3528 = vmatprep.subr.bf16.mxu0 0
      %3529 = vmatpush2.bf16.msra.mxu0 0
      %3530 = vmatprep.subr.bf16.mxu0 0
      %3531 = vmatpush2.bf16.msra.mxu0 0
      %3532 = vmatprep.mubr.bf16.mxu0 0
      %3533 = vmatmul.mubr.bf16.gmra.mxu0 %v3449
      %v3534 = vpop.f32.mrf.mxu0
      %v3535 = vadd.f32 0.0, %v3534
      %v3536 = vpop.f32.mrf.mxu0
      %v3537 = vpop.f32.mrf.mxu0
      %v3538 = vadd.f32 0.0, %v3537
      %v3539 = vpop.f32.mrf.mxu0
      %3540 = vmatprep.mubr.bf16.mxu0 0
      %3541 = vmatmul.mubr.bf16.gmra.mxu0 %v3452
      %v3542 = vpop.f32.mrf.mxu0
      %v3543 = vadd.f32 0.0, %v3542
      %v3544 = vpop.f32.mrf.mxu0
      %v3545 = vpop.f32.mrf.mxu0
      %v3546 = vadd.f32 0.0, %v3545
      %v3547 = vpop.f32.mrf.mxu0
      %3548 = vmatprep.mubr.bf16.mxu0 0
      %3549 = vmatmul.mubr.bf16.gmra.mxu0 %v3455
      %v3550 = vpop.f32.mrf.mxu0
      %v3551 = vadd.f32 0.0, %v3550
      %v3552 = vpop.f32.mrf.mxu0
      %v3553 = vpop.f32.mrf.mxu0
      %v3554 = vadd.f32 0.0, %v3553
      %v3555 = vpop.f32.mrf.mxu0
      %3556 = vmatprep.mubr.bf16.mxu0 0
      %3557 = vmatmul.mubr.bf16.gmra.mxu0 %v3458
      %v3558 = vpop.f32.mrf.mxu0
      %v3559 = vadd.f32 0.0, %v3558
      %v3560 = vpop.f32.mrf.mxu0
      %v3561 = vpop.f32.mrf.mxu0
      %v3562 = vadd.f32 0.0, %v3561
      %v3563 = vpop.f32.mrf.mxu0
      %3564 = vmatprep.mubr.bf16.mxu0 0
      %3565 = vmatmul.mubr.bf16.gmra.mxu0 %v3461
      %v3566 = vpop.f32.mrf.mxu0
      %v3567 = vadd.f32 0.0, %v3566
      %v3568 = vpop.f32.mrf.mxu0
      %v3569 = vpop.f32.mrf.mxu0
      %v3570 = vadd.f32 0.0, %v3569
      %v3571 = vpop.f32.mrf.mxu0
      %3572 = vmatprep.mubr.bf16.mxu0 0
      %3573 = vmatmul.mubr.bf16.gmra.mxu0 %v3464
      %v3574 = vpop.f32.mrf.mxu0
      %v3575 = vadd.f32 0.0, %v3574
      %v3576 = vpop.f32.mrf.mxu0
      %v3577 = vpop.f32.mrf.mxu0
      %v3578 = vadd.f32 0.0, %v3577
      %v3579 = vpop.f32.mrf.mxu0
      %3580 = vmatprep.mubr.bf16.mxu0 0
      %3581 = vmatmul.mubr.bf16.gmra.mxu0 %v3467
      %v3582 = vpop.f32.mrf.mxu0
      %v3583 = vadd.f32 0.0, %v3582
      %v3584 = vpop.f32.mrf.mxu0
      %v3585 = vpop.f32.mrf.mxu0
      %v3586 = vadd.f32 0.0, %v3585
      %v3587 = vpop.f32.mrf.mxu0
      %3588 = vmatprep.mubr.bf16.mxu0 0
      %3589 = vmatmul.mubr.bf16.gmra.mxu0 %v3470
      %v3590 = vpop.f32.mrf.mxu0
      %v3591 = vadd.f32 0.0, %v3590
      %v3592 = vpop.f32.mrf.mxu0
      %v3593 = vpop.f32.mrf.mxu0
      %v3594 = vadd.f32 0.0, %v3593
      %v3595 = vpop.f32.mrf.mxu0
      %3596 = vmatprep.mubr.bf16.mxu0 0
      %3597 = vmatmul.mubr.bf16.gmra.mxu0 %v3473
      %v3598 = vpop.f32.mrf.mxu0
      %v3599 = vadd.f32 0.0, %v3598
      %v3600 = vpop.f32.mrf.mxu0
      %v3601 = vpop.f32.mrf.mxu0
      %v3602 = vadd.f32 0.0, %v3601
      %v3603 = vpop.f32.mrf.mxu0
      %3604 = vmatprep.mubr.bf16.mxu0 0
      %3605 = vmatmul.mubr.bf16.gmra.mxu0 %v3476
      %v3606 = vpop.f32.mrf.mxu0
      %v3607 = vadd.f32 0.0, %v3606
      %v3608 = vpop.f32.mrf.mxu0
      %v3609 = vpop.f32.mrf.mxu0
      %v3610 = vadd.f32 0.0, %v3609
      %v3611 = vpop.f32.mrf.mxu0
      %3612 = vmatprep.mubr.bf16.mxu0 0
      %3613 = vmatmul.mubr.bf16.gmra.mxu0 %v3479
      %v3614 = vpop.f32.mrf.mxu0
      %v3615 = vadd.f32 0.0, %v3614
      %v3616 = vpop.f32.mrf.mxu0
      %v3617 = vpop.f32.mrf.mxu0
      %v3618 = vadd.f32 0.0, %v3617
      %v3619 = vpop.f32.mrf.mxu0
      %3620 = vmatprep.mubr.bf16.mxu0 0
      %3621 = vmatmul.mubr.bf16.gmra.mxu0 %v3482
      %v3622 = vpop.f32.mrf.mxu0
      %v3623 = vadd.f32 0.0, %v3622
      %v3624 = vpop.f32.mrf.mxu0
      %v3625 = vpop.f32.mrf.mxu0
      %v3626 = vadd.f32 0.0, %v3625
      %v3627 = vpop.f32.mrf.mxu0
      %3628 = vmatprep.mubr.bf16.mxu0 0
      %3629 = vmatmul.mubr.bf16.gmra.mxu0 %v3485
      %v3630 = vpop.f32.mrf.mxu0
      %v3631 = vadd.f32 0.0, %v3630
      %v3632 = vpop.f32.mrf.mxu0
      %v3633 = vpop.f32.mrf.mxu0
      %v3634 = vadd.f32 0.0, %v3633
      %v3635 = vpop.f32.mrf.mxu0
      %3636 = vmatprep.mubr.bf16.mxu0 0
      %3637 = vmatmul.mubr.bf16.gmra.mxu0 %v3488
      %v3638 = vpop.f32.mrf.mxu0
      %v3639 = vadd.f32 0.0, %v3638
      %v3640 = vpop.f32.mrf.mxu0
      %v3641 = vpop.f32.mrf.mxu0
      %v3642 = vadd.f32 0.0, %v3641
      %v3643 = vpop.f32.mrf.mxu0
      %3644 = vmatprep.mubr.bf16.mxu0 0
      %3645 = vmatmul.mubr.bf16.gmra.mxu0 %v3491
      %v3646 = vpop.f32.mrf.mxu0
      %v3647 = vadd.f32 0.0, %v3646
      %v3648 = vpop.f32.mrf.mxu0
      %v3649 = vpop.f32.mrf.mxu0
      %v3650 = vadd.f32 0.0, %v3649
      %v3651 = vpop.f32.mrf.mxu0
      %3652 = vmatprep.mubr.bf16.mxu0 0
      %3653 = vmatmul.mubr.bf16.gmra.mxu0 %v3494
      %v3654 = vpop.f32.mrf.mxu0
      %v3655 = vadd.f32 0.0, %v3654
      %v3656 = vpop.f32.mrf.mxu0
      %v3657 = vpop.f32.mrf.mxu0
      %v3658 = vadd.f32 0.0, %v3657
      %v3659 = vpop.f32.mrf.mxu0
      %3660 = vdwg.mxu0
      %v3661 = vld [vmem:[%s222] sm:$0xf]
      %v3662 = vld [vmem:[%s222 + $0x4] sm:$0xf]
      %v3663 = vld [vmem:[%s222 + $0x8] sm:$0xf]
      %v3664 = vld [vmem:[%s222 + $0xc] sm:$0xf]
      %v3665 = vld [vmem:[%s222 + $0x10] sm:$0xf]
      %v3666 = vld [vmem:[%s222 + $0x14] sm:$0xf]
      %v3667 = vld [vmem:[%s222 + $0x18] sm:$0xf]
      %v3668 = vld [vmem:[%s222 + $0x1c] sm:$0xf]
      %v3669 = vld [vmem:[%s222 + $0x20] sm:$0xf]
      %v3670 = vld [vmem:[%s222 + $0x24] sm:$0xf]
      %v3671 = vld [vmem:[%s222 + $0x28] sm:$0xf]
      %v3672 = vld [vmem:[%s222 + $0x2c] sm:$0xf]
      %v3673 = vld [vmem:[%s222 + $0x30] sm:$0xf]
      %v3674 = vld [vmem:[%s222 + $0x34] sm:$0xf]
      %v3675 = vld [vmem:[%s222 + $0x38] sm:$0xf]
      %v3676 = vld [vmem:[%s222 + $0x3c] sm:$0xf]
      %v3677 = vld [vmem:[%s222 + $0x40] sm:$0xf]
      %v3678 = vld [vmem:[%s222 + $0x44] sm:$0xf]
      %v3679 = vld [vmem:[%s222 + $0x48] sm:$0xf]
      %v3680 = vld [vmem:[%s222 + $0x4c] sm:$0xf]
      %v3681 = vld [vmem:[%s222 + $0x50] sm:$0xf]
      %v3682 = vld [vmem:[%s222 + $0x54] sm:$0xf]
      %v3683 = vld [vmem:[%s222 + $0x58] sm:$0xf]
      %v3684 = vld [vmem:[%s222 + $0x5c] sm:$0xf]
      %v3685 = vld [vmem:[%s222 + $0x60] sm:$0xf]
      %v3686 = vld [vmem:[%s222 + $0x64] sm:$0xf]
      %v3687 = vld [vmem:[%s222 + $0x68] sm:$0xf]
      %v3688 = vld [vmem:[%s222 + $0x6c] sm:$0xf]
      %v3689 = vld [vmem:[%s222 + $0x70] sm:$0xf]
      %v3690 = vld [vmem:[%s222 + $0x74] sm:$0xf]
      %v3691 = vld [vmem:[%s222 + $0x78] sm:$0xf]
      %v3692 = vld [vmem:[%s222 + $0x7c] sm:$0xf]
      %v3693 = vunpack.c.l.bf16 %v3661
      %v3694 = vunpack.c.l.bf16 %v3662
      %v3695 = vunpack.c.l.bf16 %v3663
      %v3696 = vunpack.c.l.bf16 %v3664
      %v3697 = vunpack.c.l.bf16 %v3665
      %v3698 = vunpack.c.l.bf16 %v3666
      %v3699 = vunpack.c.l.bf16 %v3667
      %v3700 = vunpack.c.l.bf16 %v3668
      %v3701 = vunpack.c.l.bf16 %v3669
      %v3702 = vunpack.c.l.bf16 %v3670
      %v3703 = vunpack.c.l.bf16 %v3671
      %v3704 = vunpack.c.l.bf16 %v3672
      %v3705 = vunpack.c.l.bf16 %v3673
      %v3706 = vunpack.c.l.bf16 %v3674
      %v3707 = vunpack.c.l.bf16 %v3675
      %v3708 = vunpack.c.l.bf16 %v3676
      %v3709 = vunpack.c.l.bf16 %v3677
      %v3710 = vunpack.c.l.bf16 %v3678
      %v3711 = vunpack.c.l.bf16 %v3679
      %v3712 = vunpack.c.l.bf16 %v3680
      %v3713 = vunpack.c.l.bf16 %v3681
      %v3714 = vunpack.c.l.bf16 %v3682
      %v3715 = vunpack.c.l.bf16 %v3683
      %v3716 = vunpack.c.l.bf16 %v3684
      %v3717 = vunpack.c.l.bf16 %v3685
      %v3718 = vunpack.c.l.bf16 %v3686
      %v3719 = vunpack.c.l.bf16 %v3687
      %v3720 = vunpack.c.l.bf16 %v3688
      %v3721 = vunpack.c.l.bf16 %v3689
      %v3722 = vunpack.c.l.bf16 %v3690
      %v3723 = vunpack.c.l.bf16 %v3691
      %v3724 = vunpack.c.l.bf16 %v3692
      %v3725 = vadd.f32 %v3535, %v3693
      %v3726 = vadd.f32 %v3538, %v3694
      %v3727 = vadd.f32 %v3543, %v3695
      %v3728 = vadd.f32 %v3546, %v3696
      %v3729 = vadd.f32 %v3551, %v3697
      %v3730 = vadd.f32 %v3554, %v3698
      %v3731 = vadd.f32 %v3559, %v3699
      %v3732 = vadd.f32 %v3562, %v3700
      %v3733 = vadd.f32 %v3567, %v3701
      %v3734 = vadd.f32 %v3570, %v3702
      %v3735 = vadd.f32 %v3575, %v3703
      %v3736 = vadd.f32 %v3578, %v3704
      %v3737 = vadd.f32 %v3583, %v3705
      %v3738 = vadd.f32 %v3586, %v3706
      %v3739 = vadd.f32 %v3591, %v3707
      %v3740 = vadd.f32 %v3594, %v3708
      %v3741 = vadd.f32 %v3599, %v3709
      %v3742 = vadd.f32 %v3602, %v3710
      %v3743 = vadd.f32 %v3607, %v3711
      %v3744 = vadd.f32 %v3610, %v3712
      %v3745 = vadd.f32 %v3615, %v3713
      %v3746 = vadd.f32 %v3618, %v3714
      %v3747 = vadd.f32 %v3623, %v3715
      %v3748 = vadd.f32 %v3626, %v3716
      %v3749 = vadd.f32 %v3631, %v3717
      %v3750 = vadd.f32 %v3634, %v3718
      %v3751 = vadd.f32 %v3639, %v3719
      %v3752 = vadd.f32 %v3642, %v3720
      %v3753 = vadd.f32 %v3647, %v3721
      %v3754 = vadd.f32 %v3650, %v3722
      %v3755 = vadd.f32 %v3655, %v3723
      %v3756 = vadd.f32 %v3658, %v3724
      %v3757 = vpack.c.bf16 %v3726, %v3725
      %v3758 = vpack.c.bf16 %v3728, %v3727
      %v3759 = vpack.c.bf16 %v3730, %v3729
      %v3760 = vpack.c.bf16 %v3732, %v3731
      %v3761 = vpack.c.bf16 %v3734, %v3733
      %v3762 = vpack.c.bf16 %v3736, %v3735
      %v3763 = vpack.c.bf16 %v3738, %v3737
      %v3764 = vpack.c.bf16 %v3740, %v3739
      %v3765 = vpack.c.bf16 %v3742, %v3741
      %v3766 = vpack.c.bf16 %v3744, %v3743
      %v3767 = vpack.c.bf16 %v3746, %v3745
      %v3768 = vpack.c.bf16 %v3748, %v3747
      %v3769 = vpack.c.bf16 %v3750, %v3749
      %v3770 = vpack.c.bf16 %v3752, %v3751
      %v3771 = vpack.c.bf16 %v3754, %v3753
      %v3772 = vpack.c.bf16 %v3756, %v3755
      %v3789 = vunpack.c.l.b16 %v3757
      %v3790 = vunpack.c.h.b16 %v3757
      %v3791 = vunpack.c.l.b16 %v3758
      %v3792 = vunpack.c.h.b16 %v3758
      %v3793 = vunpack.c.l.b16 %v3759
      %v3794 = vunpack.c.h.b16 %v3759
      %v3795 = vunpack.c.l.b16 %v3760
      %v3796 = vunpack.c.h.b16 %v3760
      %v3797 = vunpack.c.l.b16 %v3761
      %v3798 = vunpack.c.h.b16 %v3761
      %v3799 = vunpack.c.l.b16 %v3762
      %v3800 = vunpack.c.h.b16 %v3762
      %v3801 = vunpack.c.l.b16 %v3763
      %v3802 = vunpack.c.h.b16 %v3763
      %v3803 = vunpack.c.l.b16 %v3764
      %v3804 = vunpack.c.h.b16 %v3764
      %v3805 = vunpack.c.l.b16 %v3765
      %v3806 = vunpack.c.h.b16 %v3765
      %v3807 = vunpack.c.l.b16 %v3766
      %v3808 = vunpack.c.h.b16 %v3766
      %v3809 = vunpack.c.l.b16 %v3767
      %v3810 = vunpack.c.h.b16 %v3767
      %v3811 = vunpack.c.l.b16 %v3768
      %v3812 = vunpack.c.h.b16 %v3768
      %v3813 = vunpack.c.l.b16 %v3769
      %v3814 = vunpack.c.h.b16 %v3769
      %v3815 = vunpack.c.l.b16 %v3770
      %v3816 = vunpack.c.h.b16 %v3770
      %v3817 = vunpack.c.l.b16 %v3771
      %v3818 = vunpack.c.h.b16 %v3771
      %v3819 = vunpack.c.l.b16 %v3772
      %v3820 = vunpack.c.h.b16 %v3772
      %v3821 = vpack.c.b16 %v3789, %v3789
      %v3822 = vpack.c.b16 %v3790, %v3790
      %v3823 = vpack.c.b16 %v3791, %v3791
      %v3824 = vpack.c.b16 %v3792, %v3792
      %v3825 = vpack.c.b16 %v3793, %v3793
      %v3826 = vpack.c.b16 %v3794, %v3794
      %v3827 = vpack.c.b16 %v3795, %v3795
      %v3828 = vpack.c.b16 %v3796, %v3796
      %v3829 = vpack.c.b16 %v3797, %v3797
      %v3830 = vpack.c.b16 %v3798, %v3798
      %v3831 = vpack.c.b16 %v3799, %v3799
      %v3832 = vpack.c.b16 %v3800, %v3800
      %v3833 = vpack.c.b16 %v3801, %v3801
      %v3834 = vpack.c.b16 %v3802, %v3802
      %v3835 = vpack.c.b16 %v3803, %v3803
      %v3836 = vpack.c.b16 %v3804, %v3804
      %v3837 = vpack.c.b16 %v3805, %v3805
      %v3838 = vpack.c.b16 %v3806, %v3806
      %v3839 = vpack.c.b16 %v3807, %v3807
      %v3840 = vpack.c.b16 %v3808, %v3808
      %v3841 = vpack.c.b16 %v3809, %v3809
      %v3842 = vpack.c.b16 %v3810, %v3810
      %v3843 = vpack.c.b16 %v3811, %v3811
      %v3844 = vpack.c.b16 %v3812, %v3812
      %v3845 = vpack.c.b16 %v3813, %v3813
      %v3846 = vpack.c.b16 %v3814, %v3814
      %v3847 = vpack.c.b16 %v3815, %v3815
      %v3848 = vpack.c.b16 %v3816, %v3816
      %v3849 = vpack.c.b16 %v3817, %v3817
      %v3850 = vpack.c.b16 %v3818, %v3818
      %v3851 = vpack.c.b16 %v3819, %v3819
      %v3852 = vpack.c.b16 %v3820, %v3820
      %3885 = vst.msk [vmem:[%s233] sm:$0xf] %vm464, %v3821
      %3886 = vst.msk [vmem:[%s233 + $0x4] sm:$0xf] %vm464, %v3822
      %3887 = vst.msk [vmem:[%s233 + $0x8] sm:$0xf] %vm464, %v3823
      %3888 = vst.msk [vmem:[%s233 + $0xc] sm:$0xf] %vm464, %v3824
      %3889 = vst.msk [vmem:[%s233 + $0x10] sm:$0xf] %vm464, %v3825
      %3890 = vst.msk [vmem:[%s233 + $0x14] sm:$0xf] %vm464, %v3826
      %3891 = vst.msk [vmem:[%s233 + $0x18] sm:$0xf] %vm464, %v3827
      %3892 = vst.msk [vmem:[%s233 + $0x1c] sm:$0xf] %vm464, %v3828
      %3893 = vst.msk [vmem:[%s233 + $0x20] sm:$0xf] %vm464, %v3829
      %3894 = vst.msk [vmem:[%s233 + $0x24] sm:$0xf] %vm464, %v3830
      %3895 = vst.msk [vmem:[%s233 + $0x28] sm:$0xf] %vm464, %v3831
      %3896 = vst.msk [vmem:[%s233 + $0x2c] sm:$0xf] %vm464, %v3832
      %3897 = vst.msk [vmem:[%s233 + $0x30] sm:$0xf] %vm464, %v3833
      %3898 = vst.msk [vmem:[%s233 + $0x34] sm:$0xf] %vm464, %v3834
      %3899 = vst.msk [vmem:[%s233 + $0x38] sm:$0xf] %vm464, %v3835
      %3900 = vst.msk [vmem:[%s233 + $0x3c] sm:$0xf] %vm464, %v3836
      %3901 = vst.msk [vmem:[%s233 + $0x40] sm:$0xf] %vm464, %v3837
      %3902 = vst.msk [vmem:[%s233 + $0x44] sm:$0xf] %vm464, %v3838
      %3903 = vst.msk [vmem:[%s233 + $0x48] sm:$0xf] %vm464, %v3839
      %3904 = vst.msk [vmem:[%s233 + $0x4c] sm:$0xf] %vm464, %v3840
      %3905 = vst.msk [vmem:[%s233 + $0x50] sm:$0xf] %vm464, %v3841
      %3906 = vst.msk [vmem:[%s233 + $0x54] sm:$0xf] %vm464, %v3842
      %3907 = vst.msk [vmem:[%s233 + $0x58] sm:$0xf] %vm464, %v3843
      %3908 = vst.msk [vmem:[%s233 + $0x5c] sm:$0xf] %vm464, %v3844
      %3909 = vst.msk [vmem:[%s233 + $0x60] sm:$0xf] %vm464, %v3845
      %3910 = vst.msk [vmem:[%s233 + $0x64] sm:$0xf] %vm464, %v3846
      %3911 = vst.msk [vmem:[%s233 + $0x68] sm:$0xf] %vm464, %v3847
      %3912 = vst.msk [vmem:[%s233 + $0x6c] sm:$0xf] %vm464, %v3848
      %3913 = vst.msk [vmem:[%s233 + $0x70] sm:$0xf] %vm464, %v3849
      %3914 = vst.msk [vmem:[%s233 + $0x74] sm:$0xf] %vm464, %v3850
      %3915 = vst.msk [vmem:[%s233 + $0x78] sm:$0xf] %vm464, %v3851
      %3916 = vst.msk [vmem:[%s233 + $0x7c] sm:$0xf] %vm464, %v3852
      %s3917 = smul.u32 16, %s19
      %p3918 = scmp.lt.s32.totalorder %s18, 1
      %s3919 = scalar_select %p3918, %s18, 1
      %p3920 = scmp.lt.s32.totalorder %s3917, 15
      %s3921 = scalar_select %p3920, %s3917, 15
      %s3922 = smul.addr %s3921, 2
      %s3923 = smul.addr %s3919, 32
      %s3924 = sadd.s32 %s3922, %s3923
      %s3925 = smul.addr %s3924, 4
      %s3926 = scalar_lea.vmem %s3, %s3925
      // Predicated region
      $region33: #{octconv_forward.5} parent=31 // pred_check
        %p3927 = pneg %p121
      $region34: #{octconv_forward.5} parent=31 // pred_check_branch
        %3929 = sbr.rel (%p3927) target = $region36
      $region35: #{octconv_forward.5} parent=31 // pred_region
        %s3930 = smul.u32 16, %s19
      $region36: #{octconv_forward.5} parent=31 // pred_fallthru
        _
    $region32: #{octconv_forward.5} parent=5 // pred_fallthru
      _
    %p3931 = scmp.le.s32.totalorder 2, %s9
    // Predicated region
    $region37: #{octconv_forward.5} parent=5 // pred_check
      %p3932 = pneg %p3931
    $region38: #{octconv_forward.5} parent=5 // pred_check_branch
      %3934 = sbr.rel (%p3932) target = $region40
    $region39: #{octconv_forward.5} parent=5 // pred_region
      %s3935 = ssub.s32 %s9, 2
      // Predicated region
      $region41: #{octconv_forward.5} parent=39 // pred_check
        %p3936 = pneg %p127
      $region42: #{octconv_forward.5} parent=39 // pred_check_branch
        %3938 = sbr.rel (%p3936) target = $region44
      $region43: #{octconv_forward.5} parent=39 // pred_region
        %s3939 = smul.u32 16, %s21
        %p3940 = scmp.lt.s32.totalorder %s20, 1
        %s3941 = scalar_select %p3940, %s20, 1
        %p3942 = scmp.lt.s32.totalorder %s3939, 15
        %s3943 = scalar_select %p3942, %s3939, 15
        %s3944 = smul.addr %s3943, 2
        %s3945 = smul.addr %s3941, 32
        %s3946 = sadd.s32 %s3944, %s3945
        %s3947 = smul.addr %s3946, 4
        %s3948 = scalar_lea.vmem %s3, %s3947
      $region44: #{octconv_forward.5} parent=39 // pred_fallthru
        _
    $region40: #{octconv_forward.5} parent=5 // pred_fallthru
      _
  $region6: #{octconv_forward.5} parent=0 // loop_footer
    %s13 = sadd.s32 1, %s9
  $region7: #{octconv_forward.5} parent=0 // loop_footer_branch
    %8 = sbr.rel target = $region3
  $region8: #{octconv_forward.5} parent=0 // loop_exit
    _

</llo_original>
